<compile_context>
chip_gen: v7x
topology: tpu7x:2x2x1
jax: 0.10.0
libtpu: 0.0.40
codegen_flags: <defaults>
</compile_context>

<pallas_src>
import functools

import jax
import jax.numpy as jnp
from jax.experimental import pallas as pl
from jax.experimental.pallas import tpu as pltpu


# ----------------------------------------------------------------------------
# Kernel 1: DCDT cross attention (text queries -> image tokens), HW-tiled with
# online softmax.  grid = (B, HW_tiles); HW axis is the softmax reduction.
# ----------------------------------------------------------------------------
def _dcdt_attn_kernel(t_ref, q_ref, img_ref, wkv_ref, wo_ref, ot_ref,
                      m_ref, l_ref, acc_ref, *, num_heads):
    f32 = jnp.float32
    bf16 = jnp.bfloat16

    tile = pl.program_id(1)
    C = wkv_ref.shape[0]
    dh = C // num_heads
    scale = 1.0 / float(dh) ** 0.5

    @pl.when(tile == 0)
    def _():
        m_ref[...] = jnp.full_like(m_ref, -jnp.inf)
        l_ref[...] = jnp.zeros_like(l_ref)
        acc_ref[...] = jnp.zeros_like(acc_ref)

    x_bf = img_ref[0]                                                  # [C, HW_T] bf16
    # Fused k|v: one [C,2C]x[C,HW_T] MXU pass, result kept bf16 (largest intermediate).
    kv_bf = jax.lax.dot_general(wkv_ref[...], x_bf, (((0,), (0,)), ((), ())),
                                preferred_element_type=f32).astype(bf16)  # [2C, HW_T]

    for h in range(num_heads):                 # static loop; sublane-aligned head slices
        lo = h * dh
        kh = kv_bf[lo:lo + dh, :]                                      # [dh, HW_T]
        vh = kv_bf[C + lo:C + lo + dh, :]                              # [dh, HW_T]
        qh = q_ref[h]                                                  # [T, dh] bf16

        s = jax.lax.dot_general(qh, kh, (((1,), (0,)), ((), ())),
                                preferred_element_type=f32) * scale    # [T, HW_T] f32

        # Online softmax update (f32 math; no per-tile divide).
        m_prev = m_ref[h]                                              # [T, 1]
        m_new = jnp.maximum(m_prev, jnp.max(s, axis=-1, keepdims=True))
        alpha = jnp.exp(m_prev - m_new)
        p = jnp.exp(s - m_new)
        l_ref[h] = alpha * l_ref[h] + jnp.sum(p, axis=-1, keepdims=True)
        pv = jax.lax.dot_general(p.astype(bf16), vh, (((1,), (1,)), ((), ())),
                                 preferred_element_type=f32)           # [T, dh] lane-dense
        acc_ref[h] = alpha * acc_ref[h] + pv
        m_ref[h] = m_new

    @pl.when(tile == pl.num_programs(1) - 1)
    def _():
        # Finalize: per-head normalize, fold through the head slice of wo, residual.
        # TODO(synk): P2Tformer LayerNorm / FFN sub-layers omitted (attention + residual).
        out = None
        for h in range(num_heads):
            inv_l = pl.reciprocal(l_ref[h], approx=True)               # EUP slot
            oh = (acc_ref[h] * inv_l).astype(bf16)                     # [T, dh]
            contrib = jax.lax.dot_general(oh, wo_ref[h], (((1,), (0,)), ((), ())),
                                          preferred_element_type=f32)  # [T, C]
            out = contrib if out is None else out + contrib
        ot_ref[0] = (out + t_ref[...]).astype(ot_ref.dtype)


def _dcdt_attention(t_norm, q_heads, img_cm, wkv, wo_h, hw_tile, num_heads):
    B, C, HW = img_cm.shape
    T = t_norm.shape[0]
    nh = num_heads
    dh = C // nh
    n_tiles = HW // hw_tile

    kernel = functools.partial(_dcdt_attn_kernel, num_heads=nh)
    return pl.pallas_call(
        kernel,
        out_shape=jax.ShapeDtypeStruct((B, T, C), jnp.float32),
        grid_spec=pltpu.PrefetchScalarGridSpec(
            num_scalar_prefetch=0,
            grid=(B, n_tiles),
            in_specs=[
                pl.BlockSpec((T, C), lambda b, t: (0, 0)),             # t_norm (residual)
                pl.BlockSpec((nh, T, dh), lambda b, t: (0, 0, 0)),     # q, head-split
                pl.BlockSpec((1, C, hw_tile), lambda b, t: (b, 0, t)),  # image tile (bf16)
                pl.BlockSpec((C, 2 * C), lambda b, t: (0, 0)),         # wk|wv fused
                pl.BlockSpec((nh, dh, C), lambda b, t: (0, 0, 0)),     # wo, head-split
            ],
            out_specs=pl.BlockSpec((1, T, C), lambda b, t: (b, 0, 0)),  # out_text (resident)
            scratch_shapes=[
                pltpu.VMEM((nh, T, 1), jnp.float32),    # m
                pltpu.VMEM((nh, T, 1), jnp.float32),    # l
                pltpu.VMEM((nh, T, dh), jnp.float32),   # acc
            ],
        ),
        compiler_params=pltpu.CompilerParams(
            dimension_semantics=("parallel", "arbitrary"),
        ),
    )(t_norm, q_heads, img_cm, wkv, wo_h)


# ----------------------------------------------------------------------------
# Kernel 2: Projector alignment map + cosine cost volume, fully tile-parallel.
# grid = (B, HW_tiles); both axes independent -> both v7x TensorCores busy at B=1.
# ----------------------------------------------------------------------------
def _proj_cost_kernel(img_ref, weff_ref, bdyn_ref, tn_ref, align_ref, cost_ref):
    f32 = jnp.float32

    x_bf = img_ref[0]                                                  # [C, HW_T] bf16
    x32 = x_bf.astype(f32)
    inv_x = jax.lax.rsqrt(jnp.sum(x32 * x32, axis=0, keepdims=True) + 1e-12)  # [1, HW_T]

    # Projector: dynamic 1x1 conv folded with the vision proj into w_eff ([T, C]).
    align = jax.lax.dot_general(weff_ref[0], x_bf, (((1,), (0,)), ((), ())),
                                preferred_element_type=f32) + bdyn_ref[0]      # [T, HW_T]
    align_ref[0] = align.astype(align_ref.dtype)

    # Decoder hot path: cosine-similarity cost volume with fused image-token norms.
    # TODO(synk): full cost-aggregation Decoder not implemented; correlation only.
    cost = jax.lax.dot_general(tn_ref[0], x_bf, (((1,), (0,)), ((), ())),
                               preferred_element_type=f32) * inv_x             # [T, HW_T]
    cost_ref[0] = cost.astype(cost_ref.dtype)


def _proj_and_cost(img_cm, w_eff, b_dyn, tn, hw_tile):
    B, C, HW = img_cm.shape
    T = w_eff.shape[1]
    n_tiles = HW // hw_tile

    return pl.pallas_call(
        _proj_cost_kernel,
        out_shape=(jax.ShapeDtypeStruct((B, T, HW), jnp.float32),   # align_out
                   jax.ShapeDtypeStruct((B, T, HW), jnp.float32)),  # cost (decoder hot path)
        grid_spec=pltpu.PrefetchScalarGridSpec(
            num_scalar_prefetch=0,
            grid=(B, n_tiles),
            in_specs=[
                pl.BlockSpec((1, C, hw_tile), lambda b, t: (b, 0, t)),  # image tile (bf16)
                pl.BlockSpec((1, T, C), lambda b, t: (b, 0, 0)),        # effective align weight
                pl.BlockSpec((1, T, 1), lambda b, t: (b, 0, 0)),        # dynamic bias
                pl.BlockSpec((1, T, C), lambda b, t: (b, 0, 0)),        # normalized out_text
            ],
            out_specs=[
                pl.BlockSpec((1, T, hw_tile), lambda b, t: (b, 0, t)),
                pl.BlockSpec((1, T, hw_tile), lambda b, t: (b, 0, t)),
            ],
        ),
        compiler_params=pltpu.CompilerParams(
            dimension_semantics=("parallel", "parallel"),
        ),
    )(img_cm, w_eff, b_dyn, tn)


# ----------------------------------------------------------------------------
# FGA_seg_Predictor.forward (inference path)
# ----------------------------------------------------------------------------
def _pick_hw_tile(HW):
    for cand in (2048, 1024, 512, 256, 128):
        if HW % cand == 0:
            return cand
    return HW  # small / irregular spatial size: single full-width tile


def fga_seg_predictor_forward(imgs_feats, vis_guidance, class_embeds, params,
                              num_heads=8, hw_tile=None):
    """imgs_feats: [B, C, H, W] (NCHW); class_embeds: [T, C] (stand-in for
    clip_model.encode_text output). Returns (out, align_out), both [B, T, H, W]."""
    B, C, H, W = imgs_feats.shape
    HW = H * W
    T = class_embeds.shape[0]
    nh = num_heads
    dh = C // nh
    bf = jnp.bfloat16

    vis = [vis_guidance[k] for k in vis_guidance.keys()][::-1]  # noqa: F841
    # TODO(synk): Decoder guidance branch not implemented; vis is unused.

    if hw_tile is None:
        hw_tile = _pick_hw_tile(HW)
    assert HW % hw_tile == 0, (HW, hw_tile)

    # Channels-major bf16 tokens [B, C, HW]: the only large per-tile HBM stream, halved.
    img_cm = imgs_feats.reshape(B, C, HW).astype(bf)

    # ---- text-only work hoisted out of the kernels (runs once, plain XLA) ----------
    # TODO(synk): CLIP tokenization / encode_text not implemented; class_embeds synthetic.
    t_norm = class_embeds * jax.lax.rsqrt(
        jnp.sum(class_embeds * class_embeds, axis=-1, keepdims=True) + 1e-12)  # [T, C]
    q = t_norm @ params["wq"]                                                  # [T, C]
    q_heads = jnp.transpose(q.reshape(T, nh, dh), (1, 0, 2)).astype(bf)        # [nh, T, dh]

    wkv = jnp.concatenate([params["wk"], params["wv"]], axis=1).astype(bf)     # [C, 2C]
    wo_h = params["wo"].reshape(nh, dh, C).astype(bf)                          # [nh, dh, C]

    # ---- Kernel 1: DCDT (P2Tformer, N=1) attention over HW tiles --------------------
    out_text = _dcdt_attention(t_norm.astype(jnp.float32), q_heads, img_cm,
                               wkv, wo_h, hw_tile, nh)                         # [B, T, C]

    # ---- Tiny per-batch text-side products for kernel 2 (plain XLA) -----------------
    pwv = params["proj_wv"]                            # [C, Cv]  vision 1x1 proj
    proj_wt = params["proj_wt"]                        # [C, Cv+1] merged dyn-filter weight+bias
    Cv = pwv.shape[1]
    wb = jnp.einsum("btc,cv->btv", out_text, proj_wt)  # [B, T, Cv+1] single dot, then slice
    w_dyn = wb[..., :Cv]                               # [B, T, Cv]
    b_dyn = wb[..., Cv:]                               # [B, T, 1]
    # Fold dynamic 1x1 conv with the vision projection: align = (w_dyn @ pwv^T) @ x + b.
    w_eff = jnp.einsum("btv,cv->btc", w_dyn, pwv).astype(bf)                   # [B, T, C]
    tn = (out_text * jax.lax.rsqrt(
        jnp.sum(out_text * out_text, axis=-1, keepdims=True) + 1e-12)).astype(bf)  # [B, T, C]

    # ---- Kernel 2: Projector alignment map + cosine cost volume (tile-parallel) -----
    align_flat, cost = _proj_and_cost(img_cm, w_eff, b_dyn, tn, hw_tile)

    align_out = align_flat.reshape(B, -1, H, W)   # align_out = self.proj(imgs_feats, out_text)
    out = cost.reshape(B, -1, H, W)               # out = self.transformer(imgs_feats, text_feats, vis)
    return out, align_out


# ----------------------------------------------------------------------------
# main
# ----------------------------------------------------------------------------
if __name__ == "__main__":
    key = jax.random.PRNGKey(0)
    B, C, H, W = 2, 64, 16, 16     # d_model=64 stands in for CLIP's 512
    T = 8                          # number of classes
    num_heads = 8
    Cv = C // 2                    # Projector vision_dim = word_dim // 2

    ks = jax.random.split(key, 12)
    imgs_feats = jax.random.normal(ks[0], (B, C, H, W), jnp.float32)
    vis_guidance = {
        "res4": jax.random.normal(ks[1], (B, 32, H, W), jnp.float32),
        "res3": jax.random.normal(ks[2], (B, 16, 2 * H, 2 * W), jnp.float32),
    }
    class_embeds = jax.random.normal(ks[3], (T, C), jnp.float32)

    scale = 0.05
    params = {
        "wq": scale * jax.random.normal(ks[4], (C, C), jnp.float32),
        "wk": scale * jax.random.normal(ks[5], (C, C), jnp.float32),
        "wv": scale * jax.random.normal(ks[6], (C, C), jnp.float32),
        "wo": scale * jax.random.normal(ks[7], (C, C), jnp.float32),
        "proj_wv": scale * jax.random.normal(ks[8], (C, Cv), jnp.float32),
        "proj_wt": scale * jax.random.normal(ks[9], (C, Cv + 1), jnp.float32),
    }

    # hw_tile=128 -> 2 HW tiles at this demo size, exercising the online-softmax path.
    out, align_out = fga_seg_predictor_forward(
        imgs_feats, vis_guidance, class_embeds, params,
        num_heads=num_heads, hw_tile=128)
    jax.block_until_ready((out, align_out))

    assert out.shape == (B, T, H, W), out.shape
    assert align_out.shape == (B, T, H, W), align_out.shape
    print("KERNEL_OK")
</pallas_src>

<mosaic_0001>
module attributes {stable_mosaic.version = 11 : i64} {
  func.func @_dcdt_attn_kernel(%arg0: i32, %arg1: i32, %arg2: memref<8x64xf32, #tpu.memory_space<vmem>>, %arg3: memref<8x8x8xbf16, #tpu.memory_space<vmem>>, %arg4: memref<1x64x128xbf16, #tpu.memory_space<vmem>>, %arg5: memref<64x128xbf16, #tpu.memory_space<vmem>>, %arg6: memref<8x8x64xbf16, #tpu.memory_space<vmem>>, %arg7: memref<1x8x64xf32, #tpu.memory_space<vmem>>, %arg8: memref<8x8x1xf32, #tpu.memory_space<vmem>>, %arg9: memref<8x8x1xf32, #tpu.memory_space<vmem>>, %arg10: memref<8x8x8xf32, #tpu.memory_space<vmem>>) attributes {dimension_semantics = [#tpu.dimension_semantics<parallel>, #tpu.dimension_semantics<arbitrary>], iteration_bounds = array<i64: 2, 2>, scalar_prefetch = 0 : i64, scratch_operands = 3 : i64, tpu.core_type = #tpu.core_type<tc>, window_params = [{pipeline_mode = #tpu.pipeline_mode<synchronous>, transform_indices = @transform_0, window_bounds = array<i64: 8, 64>}, {pipeline_mode = #tpu.pipeline_mode<synchronous>, transform_indices = @transform_1, window_bounds = array<i64: 8, 8, 8>}, {transform_indices = @transform_2, window_bounds = array<i64: 1, 64, 128>}, {pipeline_mode = #tpu.pipeline_mode<synchronous>, transform_indices = @transform_3, window_bounds = array<i64: 64, 128>}, {pipeline_mode = #tpu.pipeline_mode<synchronous>, transform_indices = @transform_4, window_bounds = array<i64: 8, 8, 64>}, {transform_indices = @transform_5, window_bounds = array<i64: 1, 8, 64>}]} {
    %c0_i32 = arith.constant 0 : i32
    %0 = arith.cmpi eq, %arg1, %c0_i32 : i32
    %1 = arith.extui %0 : i1 to i32
    %c0_i32_0 = arith.constant 0 : i32
    %2 = arith.cmpi ne, %1, %c0_i32_0 : i32
    scf.if %2 {
      %cst_207 = arith.constant 0xFF800000 : f32
      %323 = vector.broadcast %cst_207 : f32 to vector<8x8x1xf32>
      %c0_208 = arith.constant 0 : index
      %c0_209 = arith.constant 0 : index
      %c0_210 = arith.constant 0 : index
      %324 = vector.load %arg8[%c0_208, %c0_209, %c0_210] : memref<8x8x1xf32, #tpu.memory_space<vmem>>, vector<8x8x1xf32>
      tpu.vector_store %arg8[%c0_208, %c0_209, %c0_210], %323 {strides = array<i32>} : memref<8x8x1xf32, #tpu.memory_space<vmem>>, vector<8x8x1xf32>,
      %cst_211 = arith.constant 0.000000e+00 : f32
      %325 = vector.broadcast %cst_211 : f32 to vector<8x8x1xf32>
      %c0_212 = arith.constant 0 : index
      %c0_213 = arith.constant 0 : index
      %c0_214 = arith.constant 0 : index
      %326 = vector.load %arg9[%c0_212, %c0_213, %c0_214] : memref<8x8x1xf32, #tpu.memory_space<vmem>>, vector<8x8x1xf32>
      tpu.vector_store %arg9[%c0_212, %c0_213, %c0_214], %325 {strides = array<i32>} : memref<8x8x1xf32, #tpu.memory_space<vmem>>, vector<8x8x1xf32>,
      %cst_215 = arith.constant 0.000000e+00 : f32
      %327 = vector.broadcast %cst_215 : f32 to vector<8x8x8xf32>
      %c0_216 = arith.constant 0 : index
      %c0_217 = arith.constant 0 : index
      %c0_218 = arith.constant 0 : index
      %328 = vector.load %arg10[%c0_216, %c0_217, %c0_218] : memref<8x8x8xf32, #tpu.memory_space<vmem>>, vector<8x8x8xf32>
      tpu.vector_store %arg10[%c0_216, %c0_217, %c0_218], %327 {strides = array<i32>} : memref<8x8x8xf32, #tpu.memory_space<vmem>>, vector<8x8x8xf32>,
    } else {
    }
    %c0 = arith.constant 0 : index
    %c0_1 = arith.constant 0 : index
    %c0_2 = arith.constant 0 : index
    %3 = vector.load %arg4[%c0, %c0_1, %c0_2] : memref<1x64x128xbf16, #tpu.memory_space<vmem>>, vector<1x64x128xbf16>
    %4 = vector.shape_cast %3 : vector<1x64x128xbf16> to vector<64x128xbf16>
    %c0_3 = arith.constant 0 : index
    %c0_4 = arith.constant 0 : index
    %5 = vector.load %arg5[%c0_3, %c0_4] : memref<64x128xbf16, #tpu.memory_space<vmem>>, vector<64x128xbf16>
    %cst = arith.constant dense<0.000000e+00> : vector<128x128xf32>
    %6 = tpu.matmul %5, %4, %cst {dimension_numbers = #tpu.dot_dimension_numbers<[0], [0], [1], [1], [0, 1, 1, 1], [], []>} : vector<64x128xbf16>, vector<64x128xbf16>, vector<128x128xf32> -> vector<128x128xf32>
    %7 = arith.truncf %6 : vector<128x128xf32> to vector<128x128xbf16>
    %8 = vector.extract_strided_slice %7 {offsets = [0, 0], sizes = [8, 128], strides = [1, 1]} : vector<128x128xbf16> to vector<8x128xbf16>
    %9 = vector.extract_strided_slice %7 {offsets = [64, 0], sizes = [8, 128], strides = [1, 1]} : vector<128x128xbf16> to vector<8x128xbf16>
    %c0_5 = arith.constant 0 : index
    %c0_6 = arith.constant 0 : index
    %c0_7 = arith.constant 0 : index
    %10 = vector.load %arg3[%c0_5, %c0_6, %c0_7] : memref<8x8x8xbf16, #tpu.memory_space<vmem>>, vector<1x8x8xbf16>
    %11 = vector.shape_cast %10 : vector<1x8x8xbf16> to vector<8x8xbf16>
    %cst_8 = arith.constant dense<0.000000e+00> : vector<8x128xf32>
    %12 = tpu.matmul %11, %8, %cst_8 {dimension_numbers = #tpu.dot_dimension_numbers<[1], [0], [0], [1], [0, 0, 1, 1], [], []>} : vector<8x8xbf16>, vector<8x128xbf16>, vector<8x128xf32> -> vector<8x128xf32>
    %cst_9 = arith.constant 0.353553385 : f32
    %13 = vector.broadcast %cst_9 : f32 to vector<8x128xf32>
    %14 = arith.mulf %12, %13 : vector<8x128xf32>
    %c0_10 = arith.constant 0 : index
    %c0_11 = arith.constant 0 : index
    %c0_12 = arith.constant 0 : index
    %15 = vector.load %arg8[%c0_10, %c0_11, %c0_12] : memref<8x8x1xf32, #tpu.memory_space<vmem>>, vector<1x8x1xf32>
    %16 = vector.shape_cast %15 : vector<1x8x1xf32> to vector<8x1xf32>
    %cst_13 = arith.constant dense<0xFF800000> : vector<8xf32>
    %17 = vector.multi_reduction <maximumf>, %14, %cst_13 [1] : vector<8x128xf32> to vector<8xf32>
    %18 = vector.shape_cast %17 : vector<8xf32> to vector<8x1xf32>
    %19 = arith.maximumf %16, %18 : vector<8x1xf32>
    %20 = arith.subf %16, %19 : vector<8x1xf32>
    %21 = math.exp %20 : vector<8x1xf32>
    %22 = vector.broadcast %19 : vector<8x1xf32> to vector<8x128xf32>
    %23 = arith.subf %14, %22 : vector<8x128xf32>
    %24 = math.exp %23 : vector<8x128xf32>
    %c0_14 = arith.constant 0 : index
    %c0_15 = arith.constant 0 : index
    %c0_16 = arith.constant 0 : index
    %25 = vector.load %arg9[%c0_14, %c0_15, %c0_16] : memref<8x8x1xf32, #tpu.memory_space<vmem>>, vector<1x8x1xf32>
    %26 = vector.shape_cast %25 : vector<1x8x1xf32> to vector<8x1xf32>
    %27 = arith.mulf %21, %26 : vector<8x1xf32>
    %cst_17 = arith.constant dense<0.000000e+00> : vector<8xf32>
    %28 = vector.multi_reduction <add>, %24, %cst_17 [1] : vector<8x128xf32> to vector<8xf32>
    %29 = vector.shape_cast %28 : vector<8xf32> to vector<8x1xf32>
    %30 = arith.addf %27, %29 : vector<8x1xf32>
    %c0_18 = arith.constant 0 : index
    %c0_19 = arith.constant 0 : index
    %c0_20 = arith.constant 0 : index
    %31 = vector.load %arg9[%c0_18, %c0_19, %c0_20] : memref<8x8x1xf32, #tpu.memory_space<vmem>>, vector<1x8x1xf32>
    %32 = vector.shape_cast %31 : vector<1x8x1xf32> to vector<8x1xf32>
    %33 = vector.shape_cast %30 : vector<8x1xf32> to vector<1x8x1xf32>
    tpu.vector_store %arg9[%c0_18, %c0_19, %c0_20], %33 {strides = array<i32>} : memref<8x8x1xf32, #tpu.memory_space<vmem>>, vector<1x8x1xf32>,
    %34 = arith.truncf %24 : vector<8x128xf32> to vector<8x128xbf16>
    %cst_21 = arith.constant dense<0.000000e+00> : vector<8x8xf32>
    %35 = tpu.matmul %34, %9, %cst_21 {dimension_numbers = #tpu.dot_dimension_numbers<[1], [1], [0], [0], [0, 0, 1, 0], [], []>} : vector<8x128xbf16>, vector<8x128xbf16>, vector<8x8xf32> -> vector<8x8xf32>
    %c0_22 = arith.constant 0 : index
    %c0_23 = arith.constant 0 : index
    %c0_24 = arith.constant 0 : index
    %36 = vector.load %arg10[%c0_22, %c0_23, %c0_24] : memref<8x8x8xf32, #tpu.memory_space<vmem>>, vector<1x8x8xf32>
    %37 = vector.shape_cast %36 : vector<1x8x8xf32> to vector<8x8xf32>
    %38 = vector.broadcast %21 : vector<8x1xf32> to vector<8x8xf32>
    %39 = arith.mulf %38, %37 : vector<8x8xf32>
    %40 = arith.addf %39, %35 : vector<8x8xf32>
    %c0_25 = arith.constant 0 : index
    %c0_26 = arith.constant 0 : index
    %c0_27 = arith.constant 0 : index
    %41 = vector.load %arg10[%c0_25, %c0_26, %c0_27] : memref<8x8x8xf32, #tpu.memory_space<vmem>>, vector<1x8x8xf32>
    %42 = vector.shape_cast %41 : vector<1x8x8xf32> to vector<8x8xf32>
    %43 = vector.shape_cast %40 : vector<8x8xf32> to vector<1x8x8xf32>
    tpu.vector_store %arg10[%c0_25, %c0_26, %c0_27], %43 {strides = array<i32>} : memref<8x8x8xf32, #tpu.memory_space<vmem>>, vector<1x8x8xf32>,
    %c0_28 = arith.constant 0 : index
    %c0_29 = arith.constant 0 : index
    %c0_30 = arith.constant 0 : index
    %44 = vector.load %arg8[%c0_28, %c0_29, %c0_30] : memref<8x8x1xf32, #tpu.memory_space<vmem>>, vector<1x8x1xf32>
    %45 = vector.shape_cast %44 : vector<1x8x1xf32> to vector<8x1xf32>
    %46 = vector.shape_cast %19 : vector<8x1xf32> to vector<1x8x1xf32>
    tpu.vector_store %arg8[%c0_28, %c0_29, %c0_30], %46 {strides = array<i32>} : memref<8x8x1xf32, #tpu.memory_space<vmem>>, vector<1x8x1xf32>,
    %47 = vector.extract_strided_slice %7 {offsets = [8, 0], sizes = [8, 128], strides = [1, 1]} : vector<128x128xbf16> to vector<8x128xbf16>
    %48 = vector.extract_strided_slice %7 {offsets = [72, 0], sizes = [8, 128], strides = [1, 1]} : vector<128x128xbf16> to vector<8x128xbf16>
    %c1 = arith.constant 1 : index
    %c0_31 = arith.constant 0 : index
    %c0_32 = arith.constant 0 : index
    %49 = vector.load %arg3[%c1, %c0_31, %c0_32] : memref<8x8x8xbf16, #tpu.memory_space<vmem>>, vector<1x8x8xbf16>
    %50 = vector.shape_cast %49 : vector<1x8x8xbf16> to vector<8x8xbf16>
    %cst_33 = arith.constant dense<0.000000e+00> : vector<8x128xf32>
    %51 = tpu.matmul %50, %47, %cst_33 {dimension_numbers = #tpu.dot_dimension_numbers<[1], [0], [0], [1], [0, 0, 1, 1], [], []>} : vector<8x8xbf16>, vector<8x128xbf16>, vector<8x128xf32> -> vector<8x128xf32>
    %cst_34 = arith.constant 0.353553385 : f32
    %52 = vector.broadcast %cst_34 : f32 to vector<8x128xf32>
    %53 = arith.mulf %51, %52 : vector<8x128xf32>
    %c1_35 = arith.constant 1 : index
    %c0_36 = arith.constant 0 : index
    %c0_37 = arith.constant 0 : index
    %54 = vector.load %arg8[%c1_35, %c0_36, %c0_37] : memref<8x8x1xf32, #tpu.memory_space<vmem>>, vector<1x8x1xf32>
    %55 = vector.shape_cast %54 : vector<1x8x1xf32> to vector<8x1xf32>
    %cst_38 = arith.constant dense<0xFF800000> : vector<8xf32>
    %56 = vector.multi_reduction <maximumf>, %53, %cst_38 [1] : vector<8x128xf32> to vector<8xf32>
    %57 = vector.shape_cast %56 : vector<8xf32> to vector<8x1xf32>
    %58 = arith.maximumf %55, %57 : vector<8x1xf32>
    %59 = arith.subf %55, %58 : vector<8x1xf32>
    %60 = math.exp %59 : vector<8x1xf32>
    %61 = vector.broadcast %58 : vector<8x1xf32> to vector<8x128xf32>
    %62 = arith.subf %53, %61 : vector<8x128xf32>
    %63 = math.exp %62 : vector<8x128xf32>
    %c1_39 = arith.constant 1 : index
    %c0_40 = arith.constant 0 : index
    %c0_41 = arith.constant 0 : index
    %64 = vector.load %arg9[%c1_39, %c0_40, %c0_41] : memref<8x8x1xf32, #tpu.memory_space<vmem>>, vector<1x8x1xf32>
    %65 = vector.shape_cast %64 : vector<1x8x1xf32> to vector<8x1xf32>
    %66 = arith.mulf %60, %65 : vector<8x1xf32>
    %cst_42 = arith.constant dense<0.000000e+00> : vector<8xf32>
    %67 = vector.multi_reduction <add>, %63, %cst_42 [1] : vector<8x128xf32> to vector<8xf32>
    %68 = vector.shape_cast %67 : vector<8xf32> to vector<8x1xf32>
    %69 = arith.addf %66, %68 : vector<8x1xf32>
    %c1_43 = arith.constant 1 : index
    %c0_44 = arith.constant 0 : index
    %c0_45 = arith.constant 0 : index
    %70 = vector.load %arg9[%c1_43, %c0_44, %c0_45] : memref<8x8x1xf32, #tpu.memory_space<vmem>>, vector<1x8x1xf32>
    %71 = vector.shape_cast %70 : vector<1x8x1xf32> to vector<8x1xf32>
    %72 = vector.shape_cast %69 : vector<8x1xf32> to vector<1x8x1xf32>
    tpu.vector_store %arg9[%c1_43, %c0_44, %c0_45], %72 {strides = array<i32>} : memref<8x8x1xf32, #tpu.memory_space<vmem>>, vector<1x8x1xf32>,
    %73 = arith.truncf %63 : vector<8x128xf32> to vector<8x128xbf16>
    %cst_46 = arith.constant dense<0.000000e+00> : vector<8x8xf32>
    %74 = tpu.matmul %73, %48, %cst_46 {dimension_numbers = #tpu.dot_dimension_numbers<[1], [1], [0], [0], [0, 0, 1, 0], [], []>} : vector<8x128xbf16>, vector<8x128xbf16>, vector<8x8xf32> -> vector<8x8xf32>
    %c1_47 = arith.constant 1 : index
    %c0_48 = arith.constant 0 : index
    %c0_49 = arith.constant 0 : index
    %75 = vector.load %arg10[%c1_47, %c0_48, %c0_49] : memref<8x8x8xf32, #tpu.memory_space<vmem>>, vector<1x8x8xf32>
    %76 = vector.shape_cast %75 : vector<1x8x8xf32> to vector<8x8xf32>
    %77 = vector.broadcast %60 : vector<8x1xf32> to vector<8x8xf32>
    %78 = arith.mulf %77, %76 : vector<8x8xf32>
    %79 = arith.addf %78, %74 : vector<8x8xf32>
    %c1_50 = arith.constant 1 : index
    %c0_51 = arith.constant 0 : index
    %c0_52 = arith.constant 0 : index
    %80 = vector.load %arg10[%c1_50, %c0_51, %c0_52] : memref<8x8x8xf32, #tpu.memory_space<vmem>>, vector<1x8x8xf32>
    %81 = vector.shape_cast %80 : vector<1x8x8xf32> to vector<8x8xf32>
    %82 = vector.shape_cast %79 : vector<8x8xf32> to vector<1x8x8xf32>
    tpu.vector_store %arg10[%c1_50, %c0_51, %c0_52], %82 {strides = array<i32>} : memref<8x8x8xf32, #tpu.memory_space<vmem>>, vector<1x8x8xf32>,
    %c1_53 = arith.constant 1 : index
    %c0_54 = arith.constant 0 : index
    %c0_55 = arith.constant 0 : index
    %83 = vector.load %arg8[%c1_53, %c0_54, %c0_55] : memref<8x8x1xf32, #tpu.memory_space<vmem>>, vector<1x8x1xf32>
    %84 = vector.shape_cast %83 : vector<1x8x1xf32> to vector<8x1xf32>
    %85 = vector.shape_cast %58 : vector<8x1xf32> to vector<1x8x1xf32>
    tpu.vector_store %arg8[%c1_53, %c0_54, %c0_55], %85 {strides = array<i32>} : memref<8x8x1xf32, #tpu.memory_space<vmem>>, vector<1x8x1xf32>,
    %86 = vector.extract_strided_slice %7 {offsets = [16, 0], sizes = [8, 128], strides = [1, 1]} : vector<128x128xbf16> to vector<8x128xbf16>
    %87 = vector.extract_strided_slice %7 {offsets = [80, 0], sizes = [8, 128], strides = [1, 1]} : vector<128x128xbf16> to vector<8x128xbf16>
    %c2 = arith.constant 2 : index
    %c0_56 = arith.constant 0 : index
    %c0_57 = arith.constant 0 : index
    %88 = vector.load %arg3[%c2, %c0_56, %c0_57] : memref<8x8x8xbf16, #tpu.memory_space<vmem>>, vector<1x8x8xbf16>
    %89 = vector.shape_cast %88 : vector<1x8x8xbf16> to vector<8x8xbf16>
    %cst_58 = arith.constant dense<0.000000e+00> : vector<8x128xf32>
    %90 = tpu.matmul %89, %86, %cst_58 {dimension_numbers = #tpu.dot_dimension_numbers<[1], [0], [0], [1], [0, 0, 1, 1], [], []>} : vector<8x8xbf16>, vector<8x128xbf16>, vector<8x128xf32> -> vector<8x128xf32>
    %cst_59 = arith.constant 0.353553385 : f32
    %91 = vector.broadcast %cst_59 : f32 to vector<8x128xf32>
    %92 = arith.mulf %90, %91 : vector<8x128xf32>
    %c2_60 = arith.constant 2 : index
    %c0_61 = arith.constant 0 : index
    %c0_62 = arith.constant 0 : index
    %93 = vector.load %arg8[%c2_60, %c0_61, %c0_62] : memref<8x8x1xf32, #tpu.memory_space<vmem>>, vector<1x8x1xf32>
    %94 = vector.shape_cast %93 : vector<1x8x1xf32> to vector<8x1xf32>
    %cst_63 = arith.constant dense<0xFF800000> : vector<8xf32>
    %95 = vector.multi_reduction <maximumf>, %92, %cst_63 [1] : vector<8x128xf32> to vector<8xf32>
    %96 = vector.shape_cast %95 : vector<8xf32> to vector<8x1xf32>
    %97 = arith.maximumf %94, %96 : vector<8x1xf32>
    %98 = arith.subf %94, %97 : vector<8x1xf32>
    %99 = math.exp %98 : vector<8x1xf32>
    %100 = vector.broadcast %97 : vector<8x1xf32> to vector<8x128xf32>
    %101 = arith.subf %92, %100 : vector<8x128xf32>
    %102 = math.exp %101 : vector<8x128xf32>
    %c2_64 = arith.constant 2 : index
    %c0_65 = arith.constant 0 : index
    %c0_66 = arith.constant 0 : index
    %103 = vector.load %arg9[%c2_64, %c0_65, %c0_66] : memref<8x8x1xf32, #tpu.memory_space<vmem>>, vector<1x8x1xf32>
    %104 = vector.shape_cast %103 : vector<1x8x1xf32> to vector<8x1xf32>
    %105 = arith.mulf %99, %104 : vector<8x1xf32>
    %cst_67 = arith.constant dense<0.000000e+00> : vector<8xf32>
    %106 = vector.multi_reduction <add>, %102, %cst_67 [1] : vector<8x128xf32> to vector<8xf32>
    %107 = vector.shape_cast %106 : vector<8xf32> to vector<8x1xf32>
    %108 = arith.addf %105, %107 : vector<8x1xf32>
    %c2_68 = arith.constant 2 : index
    %c0_69 = arith.constant 0 : index
    %c0_70 = arith.constant 0 : index
    %109 = vector.load %arg9[%c2_68, %c0_69, %c0_70] : memref<8x8x1xf32, #tpu.memory_space<vmem>>, vector<1x8x1xf32>
    %110 = vector.shape_cast %109 : vector<1x8x1xf32> to vector<8x1xf32>
    %111 = vector.shape_cast %108 : vector<8x1xf32> to vector<1x8x1xf32>
    tpu.vector_store %arg9[%c2_68, %c0_69, %c0_70], %111 {strides = array<i32>} : memref<8x8x1xf32, #tpu.memory_space<vmem>>, vector<1x8x1xf32>,
    %112 = arith.truncf %102 : vector<8x128xf32> to vector<8x128xbf16>
    %cst_71 = arith.constant dense<0.000000e+00> : vector<8x8xf32>
    %113 = tpu.matmul %112, %87, %cst_71 {dimension_numbers = #tpu.dot_dimension_numbers<[1], [1], [0], [0], [0, 0, 1, 0], [], []>} : vector<8x128xbf16>, vector<8x128xbf16>, vector<8x8xf32> -> vector<8x8xf32>
    %c2_72 = arith.constant 2 : index
    %c0_73 = arith.constant 0 : index
    %c0_74 = arith.constant 0 : index
    %114 = vector.load %arg10[%c2_72, %c0_73, %c0_74] : memref<8x8x8xf32, #tpu.memory_space<vmem>>, vector<1x8x8xf32>
    %115 = vector.shape_cast %114 : vector<1x8x8xf32> to vector<8x8xf32>
    %116 = vector.broadcast %99 : vector<8x1xf32> to vector<8x8xf32>
    %117 = arith.mulf %116, %115 : vector<8x8xf32>
    %118 = arith.addf %117, %113 : vector<8x8xf32>
    %c2_75 = arith.constant 2 : index
    %c0_76 = arith.constant 0 : index
    %c0_77 = arith.constant 0 : index
    %119 = vector.load %arg10[%c2_75, %c0_76, %c0_77] : memref<8x8x8xf32, #tpu.memory_space<vmem>>, vector<1x8x8xf32>
    %120 = vector.shape_cast %119 : vector<1x8x8xf32> to vector<8x8xf32>
    %121 = vector.shape_cast %118 : vector<8x8xf32> to vector<1x8x8xf32>
    tpu.vector_store %arg10[%c2_75, %c0_76, %c0_77], %121 {strides = array<i32>} : memref<8x8x8xf32, #tpu.memory_space<vmem>>, vector<1x8x8xf32>,
    %c2_78 = arith.constant 2 : index
    %c0_79 = arith.constant 0 : index
    %c0_80 = arith.constant 0 : index
    %122 = vector.load %arg8[%c2_78, %c0_79, %c0_80] : memref<8x8x1xf32, #tpu.memory_space<vmem>>, vector<1x8x1xf32>
    %123 = vector.shape_cast %122 : vector<1x8x1xf32> to vector<8x1xf32>
    %124 = vector.shape_cast %97 : vector<8x1xf32> to vector<1x8x1xf32>
    tpu.vector_store %arg8[%c2_78, %c0_79, %c0_80], %124 {strides = array<i32>} : memref<8x8x1xf32, #tpu.memory_space<vmem>>, vector<1x8x1xf32>,
    %125 = vector.extract_strided_slice %7 {offsets = [24, 0], sizes = [8, 128], strides = [1, 1]} : vector<128x128xbf16> to vector<8x128xbf16>
    %126 = vector.extract_strided_slice %7 {offsets = [88, 0], sizes = [8, 128], strides = [1, 1]} : vector<128x128xbf16> to vector<8x128xbf16>
    %c3 = arith.constant 3 : index
    %c0_81 = arith.constant 0 : index
    %c0_82 = arith.constant 0 : index
    %127 = vector.load %arg3[%c3, %c0_81, %c0_82] : memref<8x8x8xbf16, #tpu.memory_space<vmem>>, vector<1x8x8xbf16>
    %128 = vector.shape_cast %127 : vector<1x8x8xbf16> to vector<8x8xbf16>
    %cst_83 = arith.constant dense<0.000000e+00> : vector<8x128xf32>
    %129 = tpu.matmul %128, %125, %cst_83 {dimension_numbers = #tpu.dot_dimension_numbers<[1], [0], [0], [1], [0, 0, 1, 1], [], []>} : vector<8x8xbf16>, vector<8x128xbf16>, vector<8x128xf32> -> vector<8x128xf32>
    %cst_84 = arith.constant 0.353553385 : f32
    %130 = vector.broadcast %cst_84 : f32 to vector<8x128xf32>
    %131 = arith.mulf %129, %130 : vector<8x128xf32>
    %c3_85 = arith.constant 3 : index
    %c0_86 = arith.constant 0 : index
    %c0_87 = arith.constant 0 : index
    %132 = vector.load %arg8[%c3_85, %c0_86, %c0_87] : memref<8x8x1xf32, #tpu.memory_space<vmem>>, vector<1x8x1xf32>
    %133 = vector.shape_cast %132 : vector<1x8x1xf32> to vector<8x1xf32>
    %cst_88 = arith.constant dense<0xFF800000> : vector<8xf32>
    %134 = vector.multi_reduction <maximumf>, %131, %cst_88 [1] : vector<8x128xf32> to vector<8xf32>
    %135 = vector.shape_cast %134 : vector<8xf32> to vector<8x1xf32>
    %136 = arith.maximumf %133, %135 : vector<8x1xf32>
    %137 = arith.subf %133, %136 : vector<8x1xf32>
    %138 = math.exp %137 : vector<8x1xf32>
    %139 = vector.broadcast %136 : vector<8x1xf32> to vector<8x128xf32>
    %140 = arith.subf %131, %139 : vector<8x128xf32>
    %141 = math.exp %140 : vector<8x128xf32>
    %c3_89 = arith.constant 3 : index
    %c0_90 = arith.constant 0 : index
    %c0_91 = arith.constant 0 : index
    %142 = vector.load %arg9[%c3_89, %c0_90, %c0_91] : memref<8x8x1xf32, #tpu.memory_space<vmem>>, vector<1x8x1xf32>
    %143 = vector.shape_cast %142 : vector<1x8x1xf32> to vector<8x1xf32>
    %144 = arith.mulf %138, %143 : vector<8x1xf32>
    %cst_92 = arith.constant dense<0.000000e+00> : vector<8xf32>
    %145 = vector.multi_reduction <add>, %141, %cst_92 [1] : vector<8x128xf32> to vector<8xf32>
    %146 = vector.shape_cast %145 : vector<8xf32> to vector<8x1xf32>
    %147 = arith.addf %144, %146 : vector<8x1xf32>
    %c3_93 = arith.constant 3 : index
    %c0_94 = arith.constant 0 : index
    %c0_95 = arith.constant 0 : index
    %148 = vector.load %arg9[%c3_93, %c0_94, %c0_95] : memref<8x8x1xf32, #tpu.memory_space<vmem>>, vector<1x8x1xf32>
    %149 = vector.shape_cast %148 : vector<1x8x1xf32> to vector<8x1xf32>
    %150 = vector.shape_cast %147 : vector<8x1xf32> to vector<1x8x1xf32>
    tpu.vector_store %arg9[%c3_93, %c0_94, %c0_95], %150 {strides = array<i32>} : memref<8x8x1xf32, #tpu.memory_space<vmem>>, vector<1x8x1xf32>,
    %151 = arith.truncf %141 : vector<8x128xf32> to vector<8x128xbf16>
    %cst_96 = arith.constant dense<0.000000e+00> : vector<8x8xf32>
    %152 = tpu.matmul %151, %126, %cst_96 {dimension_numbers = #tpu.dot_dimension_numbers<[1], [1], [0], [0], [0, 0, 1, 0], [], []>} : vector<8x128xbf16>, vector<8x128xbf16>, vector<8x8xf32> -> vector<8x8xf32>
    %c3_97 = arith.constant 3 : index
    %c0_98 = arith.constant 0 : index
    %c0_99 = arith.constant 0 : index
    %153 = vector.load %arg10[%c3_97, %c0_98, %c0_99] : memref<8x8x8xf32, #tpu.memory_space<vmem>>, vector<1x8x8xf32>
    %154 = vector.shape_cast %153 : vector<1x8x8xf32> to vector<8x8xf32>
    %155 = vector.broadcast %138 : vector<8x1xf32> to vector<8x8xf32>
    %156 = arith.mulf %155, %154 : vector<8x8xf32>
    %157 = arith.addf %156, %152 : vector<8x8xf32>
    %c3_100 = arith.constant 3 : index
    %c0_101 = arith.constant 0 : index
    %c0_102 = arith.constant 0 : index
    %158 = vector.load %arg10[%c3_100, %c0_101, %c0_102] : memref<8x8x8xf32, #tpu.memory_space<vmem>>, vector<1x8x8xf32>
    %159 = vector.shape_cast %158 : vector<1x8x8xf32> to vector<8x8xf32>
    %160 = vector.shape_cast %157 : vector<8x8xf32> to vector<1x8x8xf32>
    tpu.vector_store %arg10[%c3_100, %c0_101, %c0_102], %160 {strides = array<i32>} : memref<8x8x8xf32, #tpu.memory_space<vmem>>, vector<1x8x8xf32>,
    %c3_103 = arith.constant 3 : index
    %c0_104 = arith.constant 0 : index
    %c0_105 = arith.constant 0 : index
    %161 = vector.load %arg8[%c3_103, %c0_104, %c0_105] : memref<8x8x1xf32, #tpu.memory_space<vmem>>, vector<1x8x1xf32>
    %162 = vector.shape_cast %161 : vector<1x8x1xf32> to vector<8x1xf32>
    %163 = vector.shape_cast %136 : vector<8x1xf32> to vector<1x8x1xf32>
    tpu.vector_store %arg8[%c3_103, %c0_104, %c0_105], %163 {strides = array<i32>} : memref<8x8x1xf32, #tpu.memory_space<vmem>>, vector<1x8x1xf32>,
    %164 = vector.extract_strided_slice %7 {offsets = [32, 0], sizes = [8, 128], strides = [1, 1]} : vector<128x128xbf16> to vector<8x128xbf16>
    %165 = vector.extract_strided_slice %7 {offsets = [96, 0], sizes = [8, 128], strides = [1, 1]} : vector<128x128xbf16> to vector<8x128xbf16>
    %c4 = arith.constant 4 : index
    %c0_106 = arith.constant 0 : index
    %c0_107 = arith.constant 0 : index
    %166 = vector.load %arg3[%c4, %c0_106, %c0_107] : memref<8x8x8xbf16, #tpu.memory_space<vmem>>, vector<1x8x8xbf16>
    %167 = vector.shape_cast %166 : vector<1x8x8xbf16> to vector<8x8xbf16>
    %cst_108 = arith.constant dense<0.000000e+00> : vector<8x128xf32>
    %168 = tpu.matmul %167, %164, %cst_108 {dimension_numbers = #tpu.dot_dimension_numbers<[1], [0], [0], [1], [0, 0, 1, 1], [], []>} : vector<8x8xbf16>, vector<8x128xbf16>, vector<8x128xf32> -> vector<8x128xf32>
    %cst_109 = arith.constant 0.353553385 : f32
    %169 = vector.broadcast %cst_109 : f32 to vector<8x128xf32>
    %170 = arith.mulf %168, %169 : vector<8x128xf32>
    %c4_110 = arith.constant 4 : index
    %c0_111 = arith.constant 0 : index
    %c0_112 = arith.constant 0 : index
    %171 = vector.load %arg8[%c4_110, %c0_111, %c0_112] : memref<8x8x1xf32, #tpu.memory_space<vmem>>, vector<1x8x1xf32>
    %172 = vector.shape_cast %171 : vector<1x8x1xf32> to vector<8x1xf32>
    %cst_113 = arith.constant dense<0xFF800000> : vector<8xf32>
    %173 = vector.multi_reduction <maximumf>, %170, %cst_113 [1] : vector<8x128xf32> to vector<8xf32>
    %174 = vector.shape_cast %173 : vector<8xf32> to vector<8x1xf32>
    %175 = arith.maximumf %172, %174 : vector<8x1xf32>
    %176 = arith.subf %172, %175 : vector<8x1xf32>
    %177 = math.exp %176 : vector<8x1xf32>
    %178 = vector.broadcast %175 : vector<8x1xf32> to vector<8x128xf32>
    %179 = arith.subf %170, %178 : vector<8x128xf32>
    %180 = math.exp %179 : vector<8x128xf32>
    %c4_114 = arith.constant 4 : index
    %c0_115 = arith.constant 0 : index
    %c0_116 = arith.constant 0 : index
    %181 = vector.load %arg9[%c4_114, %c0_115, %c0_116] : memref<8x8x1xf32, #tpu.memory_space<vmem>>, vector<1x8x1xf32>
    %182 = vector.shape_cast %181 : vector<1x8x1xf32> to vector<8x1xf32>
    %183 = arith.mulf %177, %182 : vector<8x1xf32>
    %cst_117 = arith.constant dense<0.000000e+00> : vector<8xf32>
    %184 = vector.multi_reduction <add>, %180, %cst_117 [1] : vector<8x128xf32> to vector<8xf32>
    %185 = vector.shape_cast %184 : vector<8xf32> to vector<8x1xf32>
    %186 = arith.addf %183, %185 : vector<8x1xf32>
    %c4_118 = arith.constant 4 : index
    %c0_119 = arith.constant 0 : index
    %c0_120 = arith.constant 0 : index
    %187 = vector.load %arg9[%c4_118, %c0_119, %c0_120] : memref<8x8x1xf32, #tpu.memory_space<vmem>>, vector<1x8x1xf32>
    %188 = vector.shape_cast %187 : vector<1x8x1xf32> to vector<8x1xf32>
    %189 = vector.shape_cast %186 : vector<8x1xf32> to vector<1x8x1xf32>
    tpu.vector_store %arg9[%c4_118, %c0_119, %c0_120], %189 {strides = array<i32>} : memref<8x8x1xf32, #tpu.memory_space<vmem>>, vector<1x8x1xf32>,
    %190 = arith.truncf %180 : vector<8x128xf32> to vector<8x128xbf16>
    %cst_121 = arith.constant dense<0.000000e+00> : vector<8x8xf32>
    %191 = tpu.matmul %190, %165, %cst_121 {dimension_numbers = #tpu.dot_dimension_numbers<[1], [1], [0], [0], [0, 0, 1, 0], [], []>} : vector<8x128xbf16>, vector<8x128xbf16>, vector<8x8xf32> -> vector<8x8xf32>
    %c4_122 = arith.constant 4 : index
    %c0_123 = arith.constant 0 : index
    %c0_124 = arith.constant 0 : index
    %192 = vector.load %arg10[%c4_122, %c0_123, %c0_124] : memref<8x8x8xf32, #tpu.memory_space<vmem>>, vector<1x8x8xf32>
    %193 = vector.shape_cast %192 : vector<1x8x8xf32> to vector<8x8xf32>
    %194 = vector.broadcast %177 : vector<8x1xf32> to vector<8x8xf32>
    %195 = arith.mulf %194, %193 : vector<8x8xf32>
    %196 = arith.addf %195, %191 : vector<8x8xf32>
    %c4_125 = arith.constant 4 : index
    %c0_126 = arith.constant 0 : index
    %c0_127 = arith.constant 0 : index
    %197 = vector.load %arg10[%c4_125, %c0_126, %c0_127] : memref<8x8x8xf32, #tpu.memory_space<vmem>>, vector<1x8x8xf32>
    %198 = vector.shape_cast %197 : vector<1x8x8xf32> to vector<8x8xf32>
    %199 = vector.shape_cast %196 : vector<8x8xf32> to vector<1x8x8xf32>
    tpu.vector_store %arg10[%c4_125, %c0_126, %c0_127], %199 {strides = array<i32>} : memref<8x8x8xf32, #tpu.memory_space<vmem>>, vector<1x8x8xf32>,
    %c4_128 = arith.constant 4 : index
    %c0_129 = arith.constant 0 : index
    %c0_130 = arith.constant 0 : index
    %200 = vector.load %arg8[%c4_128, %c0_129, %c0_130] : memref<8x8x1xf32, #tpu.memory_space<vmem>>, vector<1x8x1xf32>
    %201 = vector.shape_cast %200 : vector<1x8x1xf32> to vector<8x1xf32>
    %202 = vector.shape_cast %175 : vector<8x1xf32> to vector<1x8x1xf32>
    tpu.vector_store %arg8[%c4_128, %c0_129, %c0_130], %202 {strides = array<i32>} : memref<8x8x1xf32, #tpu.memory_space<vmem>>, vector<1x8x1xf32>,
    %203 = vector.extract_strided_slice %7 {offsets = [40, 0], sizes = [8, 128], strides = [1, 1]} : vector<128x128xbf16> to vector<8x128xbf16>
    %204 = vector.extract_strided_slice %7 {offsets = [104, 0], sizes = [8, 128], strides = [1, 1]} : vector<128x128xbf16> to vector<8x128xbf16>
    %c5 = arith.constant 5 : index
    %c0_131 = arith.constant 0 : index
    %c0_132 = arith.constant 0 : index
    %205 = vector.load %arg3[%c5, %c0_131, %c0_132] : memref<8x8x8xbf16, #tpu.memory_space<vmem>>, vector<1x8x8xbf16>
    %206 = vector.shape_cast %205 : vector<1x8x8xbf16> to vector<8x8xbf16>
    %cst_133 = arith.constant dense<0.000000e+00> : vector<8x128xf32>
    %207 = tpu.matmul %206, %203, %cst_133 {dimension_numbers = #tpu.dot_dimension_numbers<[1], [0], [0], [1], [0, 0, 1, 1], [], []>} : vector<8x8xbf16>, vector<8x128xbf16>, vector<8x128xf32> -> vector<8x128xf32>
    %cst_134 = arith.constant 0.353553385 : f32
    %208 = vector.broadcast %cst_134 : f32 to vector<8x128xf32>
    %209 = arith.mulf %207, %208 : vector<8x128xf32>
    %c5_135 = arith.constant 5 : index
    %c0_136 = arith.constant 0 : index
    %c0_137 = arith.constant 0 : index
    %210 = vector.load %arg8[%c5_135, %c0_136, %c0_137] : memref<8x8x1xf32, #tpu.memory_space<vmem>>, vector<1x8x1xf32>
    %211 = vector.shape_cast %210 : vector<1x8x1xf32> to vector<8x1xf32>
    %cst_138 = arith.constant dense<0xFF800000> : vector<8xf32>
    %212 = vector.multi_reduction <maximumf>, %209, %cst_138 [1] : vector<8x128xf32> to vector<8xf32>
    %213 = vector.shape_cast %212 : vector<8xf32> to vector<8x1xf32>
    %214 = arith.maximumf %211, %213 : vector<8x1xf32>
    %215 = arith.subf %211, %214 : vector<8x1xf32>
    %216 = math.exp %215 : vector<8x1xf32>
    %217 = vector.broadcast %214 : vector<8x1xf32> to vector<8x128xf32>
    %218 = arith.subf %209, %217 : vector<8x128xf32>
    %219 = math.exp %218 : vector<8x128xf32>
    %c5_139 = arith.constant 5 : index
    %c0_140 = arith.constant 0 : index
    %c0_141 = arith.constant 0 : index
    %220 = vector.load %arg9[%c5_139, %c0_140, %c0_141] : memref<8x8x1xf32, #tpu.memory_space<vmem>>, vector<1x8x1xf32>
    %221 = vector.shape_cast %220 : vector<1x8x1xf32> to vector<8x1xf32>
    %222 = arith.mulf %216, %221 : vector<8x1xf32>
    %cst_142 = arith.constant dense<0.000000e+00> : vector<8xf32>
    %223 = vector.multi_reduction <add>, %219, %cst_142 [1] : vector<8x128xf32> to vector<8xf32>
    %224 = vector.shape_cast %223 : vector<8xf32> to vector<8x1xf32>
    %225 = arith.addf %222, %224 : vector<8x1xf32>
    %c5_143 = arith.constant 5 : index
    %c0_144 = arith.constant 0 : index
    %c0_145 = arith.constant 0 : index
    %226 = vector.load %arg9[%c5_143, %c0_144, %c0_145] : memref<8x8x1xf32, #tpu.memory_space<vmem>>, vector<1x8x1xf32>
    %227 = vector.shape_cast %226 : vector<1x8x1xf32> to vector<8x1xf32>
    %228 = vector.shape_cast %225 : vector<8x1xf32> to vector<1x8x1xf32>
    tpu.vector_store %arg9[%c5_143, %c0_144, %c0_145], %228 {strides = array<i32>} : memref<8x8x1xf32, #tpu.memory_space<vmem>>, vector<1x8x1xf32>,
    %229 = arith.truncf %219 : vector<8x128xf32> to vector<8x128xbf16>
    %cst_146 = arith.constant dense<0.000000e+00> : vector<8x8xf32>
    %230 = tpu.matmul %229, %204, %cst_146 {dimension_numbers = #tpu.dot_dimension_numbers<[1], [1], [0], [0], [0, 0, 1, 0], [], []>} : vector<8x128xbf16>, vector<8x128xbf16>, vector<8x8xf32> -> vector<8x8xf32>
    %c5_147 = arith.constant 5 : index
    %c0_148 = arith.constant 0 : index
    %c0_149 = arith.constant 0 : index
    %231 = vector.load %arg10[%c5_147, %c0_148, %c0_149] : memref<8x8x8xf32, #tpu.memory_space<vmem>>, vector<1x8x8xf32>
    %232 = vector.shape_cast %231 : vector<1x8x8xf32> to vector<8x8xf32>
    %233 = vector.broadcast %216 : vector<8x1xf32> to vector<8x8xf32>
    %234 = arith.mulf %233, %232 : vector<8x8xf32>
    %235 = arith.addf %234, %230 : vector<8x8xf32>
    %c5_150 = arith.constant 5 : index
    %c0_151 = arith.constant 0 : index
    %c0_152 = arith.constant 0 : index
    %236 = vector.load %arg10[%c5_150, %c0_151, %c0_152] : memref<8x8x8xf32, #tpu.memory_space<vmem>>, vector<1x8x8xf32>
    %237 = vector.shape_cast %236 : vector<1x8x8xf32> to vector<8x8xf32>
    %238 = vector.shape_cast %235 : vector<8x8xf32> to vector<1x8x8xf32>
    tpu.vector_store %arg10[%c5_150, %c0_151, %c0_152], %238 {strides = array<i32>} : memref<8x8x8xf32, #tpu.memory_space<vmem>>, vector<1x8x8xf32>,
    %c5_153 = arith.constant 5 : index
    %c0_154 = arith.constant 0 : index
    %c0_155 = arith.constant 0 : index
    %239 = vector.load %arg8[%c5_153, %c0_154, %c0_155] : memref<8x8x1xf32, #tpu.memory_space<vmem>>, vector<1x8x1xf32>
    %240 = vector.shape_cast %239 : vector<1x8x1xf32> to vector<8x1xf32>
    %241 = vector.shape_cast %214 : vector<8x1xf32> to vector<1x8x1xf32>
    tpu.vector_store %arg8[%c5_153, %c0_154, %c0_155], %241 {strides = array<i32>} : memref<8x8x1xf32, #tpu.memory_space<vmem>>, vector<1x8x1xf32>,
    %242 = vector.extract_strided_slice %7 {offsets = [48, 0], sizes = [8, 128], strides = [1, 1]} : vector<128x128xbf16> to vector<8x128xbf16>
    %243 = vector.extract_strided_slice %7 {offsets = [112, 0], sizes = [8, 128], strides = [1, 1]} : vector<128x128xbf16> to vector<8x128xbf16>
    %c6 = arith.constant 6 : index
    %c0_156 = arith.constant 0 : index
    %c0_157 = arith.constant 0 : index
    %244 = vector.load %arg3[%c6, %c0_156, %c0_157] : memref<8x8x8xbf16, #tpu.memory_space<vmem>>, vector<1x8x8xbf16>
    %245 = vector.shape_cast %244 : vector<1x8x8xbf16> to vector<8x8xbf16>
    %cst_158 = arith.constant dense<0.000000e+00> : vector<8x128xf32>
    %246 = tpu.matmul %245, %242, %cst_158 {dimension_numbers = #tpu.dot_dimension_numbers<[1], [0], [0], [1], [0, 0, 1, 1], [], []>} : vector<8x8xbf16>, vector<8x128xbf16>, vector<8x128xf32> -> vector<8x128xf32>
    %cst_159 = arith.constant 0.353553385 : f32
    %247 = vector.broadcast %cst_159 : f32 to vector<8x128xf32>
    %248 = arith.mulf %246, %247 : vector<8x128xf32>
    %c6_160 = arith.constant 6 : index
    %c0_161 = arith.constant 0 : index
    %c0_162 = arith.constant 0 : index
    %249 = vector.load %arg8[%c6_160, %c0_161, %c0_162] : memref<8x8x1xf32, #tpu.memory_space<vmem>>, vector<1x8x1xf32>
    %250 = vector.shape_cast %249 : vector<1x8x1xf32> to vector<8x1xf32>
    %cst_163 = arith.constant dense<0xFF800000> : vector<8xf32>
    %251 = vector.multi_reduction <maximumf>, %248, %cst_163 [1] : vector<8x128xf32> to vector<8xf32>
    %252 = vector.shape_cast %251 : vector<8xf32> to vector<8x1xf32>
    %253 = arith.maximumf %250, %252 : vector<8x1xf32>
    %254 = arith.subf %250, %253 : vector<8x1xf32>
    %255 = math.exp %254 : vector<8x1xf32>
    %256 = vector.broadcast %253 : vector<8x1xf32> to vector<8x128xf32>
    %257 = arith.subf %248, %256 : vector<8x128xf32>
    %258 = math.exp %257 : vector<8x128xf32>
    %c6_164 = arith.constant 6 : index
    %c0_165 = arith.constant 0 : index
    %c0_166 = arith.constant 0 : index
    %259 = vector.load %arg9[%c6_164, %c0_165, %c0_166] : memref<8x8x1xf32, #tpu.memory_space<vmem>>, vector<1x8x1xf32>
    %260 = vector.shape_cast %259 : vector<1x8x1xf32> to vector<8x1xf32>
    %261 = arith.mulf %255, %260 : vector<8x1xf32>
    %cst_167 = arith.constant dense<0.000000e+00> : vector<8xf32>
    %262 = vector.multi_reduction <add>, %258, %cst_167 [1] : vector<8x128xf32> to vector<8xf32>
    %263 = vector.shape_cast %262 : vector<8xf32> to vector<8x1xf32>
    %264 = arith.addf %261, %263 : vector<8x1xf32>
    %c6_168 = arith.constant 6 : index
    %c0_169 = arith.constant 0 : index
    %c0_170 = arith.constant 0 : index
    %265 = vector.load %arg9[%c6_168, %c0_169, %c0_170] : memref<8x8x1xf32, #tpu.memory_space<vmem>>, vector<1x8x1xf32>
    %266 = vector.shape_cast %265 : vector<1x8x1xf32> to vector<8x1xf32>
    %267 = vector.shape_cast %264 : vector<8x1xf32> to vector<1x8x1xf32>
    tpu.vector_store %arg9[%c6_168, %c0_169, %c0_170], %267 {strides = array<i32>} : memref<8x8x1xf32, #tpu.memory_space<vmem>>, vector<1x8x1xf32>,
    %268 = arith.truncf %258 : vector<8x128xf32> to vector<8x128xbf16>
    %cst_171 = arith.constant dense<0.000000e+00> : vector<8x8xf32>
    %269 = tpu.matmul %268, %243, %cst_171 {dimension_numbers = #tpu.dot_dimension_numbers<[1], [1], [0], [0], [0, 0, 1, 0], [], []>} : vector<8x128xbf16>, vector<8x128xbf16>, vector<8x8xf32> -> vector<8x8xf32>
    %c6_172 = arith.constant 6 : index
    %c0_173 = arith.constant 0 : index
    %c0_174 = arith.constant 0 : index
    %270 = vector.load %arg10[%c6_172, %c0_173, %c0_174] : memref<8x8x8xf32, #tpu.memory_space<vmem>>, vector<1x8x8xf32>
    %271 = vector.shape_cast %270 : vector<1x8x8xf32> to vector<8x8xf32>
    %272 = vector.broadcast %255 : vector<8x1xf32> to vector<8x8xf32>
    %273 = arith.mulf %272, %271 : vector<8x8xf32>
    %274 = arith.addf %273, %269 : vector<8x8xf32>
    %c6_175 = arith.constant 6 : index
    %c0_176 = arith.constant 0 : index
    %c0_177 = arith.constant 0 : index
    %275 = vector.load %arg10[%c6_175, %c0_176, %c0_177] : memref<8x8x8xf32, #tpu.memory_space<vmem>>, vector<1x8x8xf32>
    %276 = vector.shape_cast %275 : vector<1x8x8xf32> to vector<8x8xf32>
    %277 = vector.shape_cast %274 : vector<8x8xf32> to vector<1x8x8xf32>
    tpu.vector_store %arg10[%c6_175, %c0_176, %c0_177], %277 {strides = array<i32>} : memref<8x8x8xf32, #tpu.memory_space<vmem>>, vector<1x8x8xf32>,
    %c6_178 = arith.constant 6 : index
    %c0_179 = arith.constant 0 : index
    %c0_180 = arith.constant 0 : index
    %278 = vector.load %arg8[%c6_178, %c0_179, %c0_180] : memref<8x8x1xf32, #tpu.memory_space<vmem>>, vector<1x8x1xf32>
    %279 = vector.shape_cast %278 : vector<1x8x1xf32> to vector<8x1xf32>
    %280 = vector.shape_cast %253 : vector<8x1xf32> to vector<1x8x1xf32>
    tpu.vector_store %arg8[%c6_178, %c0_179, %c0_180], %280 {strides = array<i32>} : memref<8x8x1xf32, #tpu.memory_space<vmem>>, vector<1x8x1xf32>,
    %281 = vector.extract_strided_slice %7 {offsets = [56, 0], sizes = [8, 128], strides = [1, 1]} : vector<128x128xbf16> to vector<8x128xbf16>
    %282 = vector.extract_strided_slice %7 {offsets = [120, 0], sizes = [8, 128], strides = [1, 1]} : vector<128x128xbf16> to vector<8x128xbf16>
    %c7 = arith.constant 7 : index
    %c0_181 = arith.constant 0 : index
    %c0_182 = arith.constant 0 : index
    %283 = vector.load %arg3[%c7, %c0_181, %c0_182] : memref<8x8x8xbf16, #tpu.memory_space<vmem>>, vector<1x8x8xbf16>
    %284 = vector.shape_cast %283 : vector<1x8x8xbf16> to vector<8x8xbf16>
    %cst_183 = arith.constant dense<0.000000e+00> : vector<8x128xf32>
    %285 = tpu.matmul %284, %281, %cst_183 {dimension_numbers = #tpu.dot_dimension_numbers<[1], [0], [0], [1], [0, 0, 1, 1], [], []>} : vector<8x8xbf16>, vector<8x128xbf16>, vector<8x128xf32> -> vector<8x128xf32>
    %cst_184 = arith.constant 0.353553385 : f32
    %286 = vector.broadcast %cst_184 : f32 to vector<8x128xf32>
    %287 = arith.mulf %285, %286 : vector<8x128xf32>
    %c7_185 = arith.constant 7 : index
    %c0_186 = arith.constant 0 : index
    %c0_187 = arith.constant 0 : index
    %288 = vector.load %arg8[%c7_185, %c0_186, %c0_187] : memref<8x8x1xf32, #tpu.memory_space<vmem>>, vector<1x8x1xf32>
    %289 = vector.shape_cast %288 : vector<1x8x1xf32> to vector<8x1xf32>
    %cst_188 = arith.constant dense<0xFF800000> : vector<8xf32>
    %290 = vector.multi_reduction <maximumf>, %287, %cst_188 [1] : vector<8x128xf32> to vector<8xf32>
    %291 = vector.shape_cast %290 : vector<8xf32> to vector<8x1xf32>
    %292 = arith.maximumf %289, %291 : vector<8x1xf32>
    %293 = arith.subf %289, %292 : vector<8x1xf32>
    %294 = math.exp %293 : vector<8x1xf32>
    %295 = vector.broadcast %292 : vector<8x1xf32> to vector<8x128xf32>
    %296 = arith.subf %287, %295 : vector<8x128xf32>
    %297 = math.exp %296 : vector<8x128xf32>
    %c7_189 = arith.constant 7 : index
    %c0_190 = arith.constant 0 : index
    %c0_191 = arith.constant 0 : index
    %298 = vector.load %arg9[%c7_189, %c0_190, %c0_191] : memref<8x8x1xf32, #tpu.memory_space<vmem>>, vector<1x8x1xf32>
    %299 = vector.shape_cast %298 : vector<1x8x1xf32> to vector<8x1xf32>
    %300 = arith.mulf %294, %299 : vector<8x1xf32>
    %cst_192 = arith.constant dense<0.000000e+00> : vector<8xf32>
    %301 = vector.multi_reduction <add>, %297, %cst_192 [1] : vector<8x128xf32> to vector<8xf32>
    %302 = vector.shape_cast %301 : vector<8xf32> to vector<8x1xf32>
    %303 = arith.addf %300, %302 : vector<8x1xf32>
    %c7_193 = arith.constant 7 : index
    %c0_194 = arith.constant 0 : index
    %c0_195 = arith.constant 0 : index
    %304 = vector.load %arg9[%c7_193, %c0_194, %c0_195] : memref<8x8x1xf32, #tpu.memory_space<vmem>>, vector<1x8x1xf32>
    %305 = vector.shape_cast %304 : vector<1x8x1xf32> to vector<8x1xf32>
    %306 = vector.shape_cast %303 : vector<8x1xf32> to vector<1x8x1xf32>
    tpu.vector_store %arg9[%c7_193, %c0_194, %c0_195], %306 {strides = array<i32>} : memref<8x8x1xf32, #tpu.memory_space<vmem>>, vector<1x8x1xf32>,
    %307 = arith.truncf %297 : vector<8x128xf32> to vector<8x128xbf16>
    %cst_196 = arith.constant dense<0.000000e+00> : vector<8x8xf32>
    %308 = tpu.matmul %307, %282, %cst_196 {dimension_numbers = #tpu.dot_dimension_numbers<[1], [1], [0], [0], [0, 0, 1, 0], [], []>} : vector<8x128xbf16>, vector<8x128xbf16>, vector<8x8xf32> -> vector<8x8xf32>
    %c7_197 = arith.constant 7 : index
    %c0_198 = arith.constant 0 : index
    %c0_199 = arith.constant 0 : index
    %309 = vector.load %arg10[%c7_197, %c0_198, %c0_199] : memref<8x8x8xf32, #tpu.memory_space<vmem>>, vector<1x8x8xf32>
    %310 = vector.shape_cast %309 : vector<1x8x8xf32> to vector<8x8xf32>
    %311 = vector.broadcast %294 : vector<8x1xf32> to vector<8x8xf32>
    %312 = arith.mulf %311, %310 : vector<8x8xf32>
    %313 = arith.addf %312, %308 : vector<8x8xf32>
    %c7_200 = arith.constant 7 : index
    %c0_201 = arith.constant 0 : index
    %c0_202 = arith.constant 0 : index
    %314 = vector.load %arg10[%c7_200, %c0_201, %c0_202] : memref<8x8x8xf32, #tpu.memory_space<vmem>>, vector<1x8x8xf32>
    %315 = vector.shape_cast %314 : vector<1x8x8xf32> to vector<8x8xf32>
    %316 = vector.shape_cast %313 : vector<8x8xf32> to vector<1x8x8xf32>
    tpu.vector_store %arg10[%c7_200, %c0_201, %c0_202], %316 {strides = array<i32>} : memref<8x8x8xf32, #tpu.memory_space<vmem>>, vector<1x8x8xf32>,
    %c7_203 = arith.constant 7 : index
    %c0_204 = arith.constant 0 : index
    %c0_205 = arith.constant 0 : index
    %317 = vector.load %arg8[%c7_203, %c0_204, %c0_205] : memref<8x8x1xf32, #tpu.memory_space<vmem>>, vector<1x8x1xf32>
    %318 = vector.shape_cast %317 : vector<1x8x1xf32> to vector<8x1xf32>
    %319 = vector.shape_cast %292 : vector<8x1xf32> to vector<1x8x1xf32>
    tpu.vector_store %arg8[%c7_203, %c0_204, %c0_205], %319 {strides = array<i32>} : memref<8x8x1xf32, #tpu.memory_space<vmem>>, vector<1x8x1xf32>,
    %c1_i32 = arith.constant 1 : i32
    %320 = arith.cmpi eq, %arg1, %c1_i32 : i32
    %321 = arith.extui %320 : i1 to i32
    %c0_i32_206 = arith.constant 0 : i32
    %322 = arith.cmpi ne, %321, %c0_i32_206 : i32
    scf.if %322 {
      %c0_207 = arith.constant 0 : index
      %c0_208 = arith.constant 0 : index
      %c0_209 = arith.constant 0 : index
      %323 = vector.load %arg9[%c0_207, %c0_208, %c0_209] : memref<8x8x1xf32, #tpu.memory_space<vmem>>, vector<1x8x1xf32>
      %324 = vector.shape_cast %323 : vector<1x8x1xf32> to vector<8x1xf32>
      %325 = tpu.reciprocal %324 {approx = true} : vector<8x1xf32> -> vector<8x1xf32>
      %c0_210 = arith.constant 0 : index
      %c0_211 = arith.constant 0 : index
      %c0_212 = arith.constant 0 : index
      %326 = vector.load %arg10[%c0_210, %c0_211, %c0_212] : memref<8x8x8xf32, #tpu.memory_space<vmem>>, vector<1x8x8xf32>
      %327 = vector.shape_cast %326 : vector<1x8x8xf32> to vector<8x8xf32>
      %328 = vector.broadcast %325 : vector<8x1xf32> to vector<8x8xf32>
      %329 = arith.mulf %327, %328 : vector<8x8xf32>
      %330 = arith.truncf %329 : vector<8x8xf32> to vector<8x8xbf16>
      %c0_213 = arith.constant 0 : index
      %c0_214 = arith.constant 0 : index
      %c0_215 = arith.constant 0 : index
      %331 = vector.load %arg6[%c0_213, %c0_214, %c0_215] : memref<8x8x64xbf16, #tpu.memory_space<vmem>>, vector<1x8x64xbf16>
      %332 = vector.shape_cast %331 : vector<1x8x64xbf16> to vector<8x64xbf16>
      %cst_216 = arith.constant dense<0.000000e+00> : vector<8x64xf32>
      %333 = tpu.matmul %330, %332, %cst_216 {dimension_numbers = #tpu.dot_dimension_numbers<[1], [0], [0], [1], [0, 0, 1, 1], [], []>} : vector<8x8xbf16>, vector<8x64xbf16>, vector<8x64xf32> -> vector<8x64xf32>
      %c1_217 = arith.constant 1 : index
      %c0_218 = arith.constant 0 : index
      %c0_219 = arith.constant 0 : index
      %334 = vector.load %arg9[%c1_217, %c0_218, %c0_219] : memref<8x8x1xf32, #tpu.memory_space<vmem>>, vector<1x8x1xf32>
      %335 = vector.shape_cast %334 : vector<1x8x1xf32> to vector<8x1xf32>
      %336 = tpu.reciprocal %335 {approx = true} : vector<8x1xf32> -> vector<8x1xf32>
      %c1_220 = arith.constant 1 : index
      %c0_221 = arith.constant 0 : index
      %c0_222 = arith.constant 0 : index
      %337 = vector.load %arg10[%c1_220, %c0_221, %c0_222] : memref<8x8x8xf32, #tpu.memory_space<vmem>>, vector<1x8x8xf32>
      %338 = vector.shape_cast %337 : vector<1x8x8xf32> to vector<8x8xf32>
      %339 = vector.broadcast %336 : vector<8x1xf32> to vector<8x8xf32>
      %340 = arith.mulf %338, %339 : vector<8x8xf32>
      %341 = arith.truncf %340 : vector<8x8xf32> to vector<8x8xbf16>
      %c1_223 = arith.constant 1 : index
      %c0_224 = arith.constant 0 : index
      %c0_225 = arith.constant 0 : index
      %342 = vector.load %arg6[%c1_223, %c0_224, %c0_225] : memref<8x8x64xbf16, #tpu.memory_space<vmem>>, vector<1x8x64xbf16>
      %343 = vector.shape_cast %342 : vector<1x8x64xbf16> to vector<8x64xbf16>
      %cst_226 = arith.constant dense<0.000000e+00> : vector<8x64xf32>
      %344 = tpu.matmul %341, %343, %cst_226 {dimension_numbers = #tpu.dot_dimension_numbers<[1], [0], [0], [1], [0, 0, 1, 1], [], []>} : vector<8x8xbf16>, vector<8x64xbf16>, vector<8x64xf32> -> vector<8x64xf32>
      %345 = arith.addf %333, %344 : vector<8x64xf32>
      %c2_227 = arith.constant 2 : index
      %c0_228 = arith.constant 0 : index
      %c0_229 = arith.constant 0 : index
      %346 = vector.load %arg9[%c2_227, %c0_228, %c0_229] : memref<8x8x1xf32, #tpu.memory_space<vmem>>, vector<1x8x1xf32>
      %347 = vector.shape_cast %346 : vector<1x8x1xf32> to vector<8x1xf32>
      %348 = tpu.reciprocal %347 {approx = true} : vector<8x1xf32> -> vector<8x1xf32>
      %c2_230 = arith.constant 2 : index
      %c0_231 = arith.constant 0 : index
      %c0_232 = arith.constant 0 : index
      %349 = vector.load %arg10[%c2_230, %c0_231, %c0_232] : memref<8x8x8xf32, #tpu.memory_space<vmem>>, vector<1x8x8xf32>
      %350 = vector.shape_cast %349 : vector<1x8x8xf32> to vector<8x8xf32>
      %351 = vector.broadcast %348 : vector<8x1xf32> to vector<8x8xf32>
      %352 = arith.mulf %350, %351 : vector<8x8xf32>
      %353 = arith.truncf %352 : vector<8x8xf32> to vector<8x8xbf16>
      %c2_233 = arith.constant 2 : index
      %c0_234 = arith.constant 0 : index
      %c0_235 = arith.constant 0 : index
      %354 = vector.load %arg6[%c2_233, %c0_234, %c0_235] : memref<8x8x64xbf16, #tpu.memory_space<vmem>>, vector<1x8x64xbf16>
      %355 = vector.shape_cast %354 : vector<1x8x64xbf16> to vector<8x64xbf16>
      %cst_236 = arith.constant dense<0.000000e+00> : vector<8x64xf32>
      %356 = tpu.matmul %353, %355, %cst_236 {dimension_numbers = #tpu.dot_dimension_numbers<[1], [0], [0], [1], [0, 0, 1, 1], [], []>} : vector<8x8xbf16>, vector<8x64xbf16>, vector<8x64xf32> -> vector<8x64xf32>
      %357 = arith.addf %345, %356 : vector<8x64xf32>
      %c3_237 = arith.constant 3 : index
      %c0_238 = arith.constant 0 : index
      %c0_239 = arith.constant 0 : index
      %358 = vector.load %arg9[%c3_237, %c0_238, %c0_239] : memref<8x8x1xf32, #tpu.memory_space<vmem>>, vector<1x8x1xf32>
      %359 = vector.shape_cast %358 : vector<1x8x1xf32> to vector<8x1xf32>
      %360 = tpu.reciprocal %359 {approx = true} : vector<8x1xf32> -> vector<8x1xf32>
      %c3_240 = arith.constant 3 : index
      %c0_241 = arith.constant 0 : index
      %c0_242 = arith.constant 0 : index
      %361 = vector.load %arg10[%c3_240, %c0_241, %c0_242] : memref<8x8x8xf32, #tpu.memory_space<vmem>>, vector<1x8x8xf32>
      %362 = vector.shape_cast %361 : vector<1x8x8xf32> to vector<8x8xf32>
      %363 = vector.broadcast %360 : vector<8x1xf32> to vector<8x8xf32>
      %364 = arith.mulf %362, %363 : vector<8x8xf32>
      %365 = arith.truncf %364 : vector<8x8xf32> to vector<8x8xbf16>
      %c3_243 = arith.constant 3 : index
      %c0_244 = arith.constant 0 : index
      %c0_245 = arith.constant 0 : index
      %366 = vector.load %arg6[%c3_243, %c0_244, %c0_245] : memref<8x8x64xbf16, #tpu.memory_space<vmem>>, vector<1x8x64xbf16>
      %367 = vector.shape_cast %366 : vector<1x8x64xbf16> to vector<8x64xbf16>
      %cst_246 = arith.constant dense<0.000000e+00> : vector<8x64xf32>
      %368 = tpu.matmul %365, %367, %cst_246 {dimension_numbers = #tpu.dot_dimension_numbers<[1], [0], [0], [1], [0, 0, 1, 1], [], []>} : vector<8x8xbf16>, vector<8x64xbf16>, vector<8x64xf32> -> vector<8x64xf32>
      %369 = arith.addf %357, %368 : vector<8x64xf32>
      %c4_247 = arith.constant 4 : index
      %c0_248 = arith.constant 0 : index
      %c0_249 = arith.constant 0 : index
      %370 = vector.load %arg9[%c4_247, %c0_248, %c0_249] : memref<8x8x1xf32, #tpu.memory_space<vmem>>, vector<1x8x1xf32>
      %371 = vector.shape_cast %370 : vector<1x8x1xf32> to vector<8x1xf32>
      %372 = tpu.reciprocal %371 {approx = true} : vector<8x1xf32> -> vector<8x1xf32>
      %c4_250 = arith.constant 4 : index
      %c0_251 = arith.constant 0 : index
      %c0_252 = arith.constant 0 : index
      %373 = vector.load %arg10[%c4_250, %c0_251, %c0_252] : memref<8x8x8xf32, #tpu.memory_space<vmem>>, vector<1x8x8xf32>
      %374 = vector.shape_cast %373 : vector<1x8x8xf32> to vector<8x8xf32>
      %375 = vector.broadcast %372 : vector<8x1xf32> to vector<8x8xf32>
      %376 = arith.mulf %374, %375 : vector<8x8xf32>
      %377 = arith.truncf %376 : vector<8x8xf32> to vector<8x8xbf16>
      %c4_253 = arith.constant 4 : index
      %c0_254 = arith.constant 0 : index
      %c0_255 = arith.constant 0 : index
      %378 = vector.load %arg6[%c4_253, %c0_254, %c0_255] : memref<8x8x64xbf16, #tpu.memory_space<vmem>>, vector<1x8x64xbf16>
      %379 = vector.shape_cast %378 : vector<1x8x64xbf16> to vector<8x64xbf16>
      %cst_256 = arith.constant dense<0.000000e+00> : vector<8x64xf32>
      %380 = tpu.matmul %377, %379, %cst_256 {dimension_numbers = #tpu.dot_dimension_numbers<[1], [0], [0], [1], [0, 0, 1, 1], [], []>} : vector<8x8xbf16>, vector<8x64xbf16>, vector<8x64xf32> -> vector<8x64xf32>
      %381 = arith.addf %369, %380 : vector<8x64xf32>
      %c5_257 = arith.constant 5 : index
      %c0_258 = arith.constant 0 : index
      %c0_259 = arith.constant 0 : index
      %382 = vector.load %arg9[%c5_257, %c0_258, %c0_259] : memref<8x8x1xf32, #tpu.memory_space<vmem>>, vector<1x8x1xf32>
      %383 = vector.shape_cast %382 : vector<1x8x1xf32> to vector<8x1xf32>
      %384 = tpu.reciprocal %383 {approx = true} : vector<8x1xf32> -> vector<8x1xf32>
      %c5_260 = arith.constant 5 : index
      %c0_261 = arith.constant 0 : index
      %c0_262 = arith.constant 0 : index
      %385 = vector.load %arg10[%c5_260, %c0_261, %c0_262] : memref<8x8x8xf32, #tpu.memory_space<vmem>>, vector<1x8x8xf32>
      %386 = vector.shape_cast %385 : vector<1x8x8xf32> to vector<8x8xf32>
      %387 = vector.broadcast %384 : vector<8x1xf32> to vector<8x8xf32>
      %388 = arith.mulf %386, %387 : vector<8x8xf32>
      %389 = arith.truncf %388 : vector<8x8xf32> to vector<8x8xbf16>
      %c5_263 = arith.constant 5 : index
      %c0_264 = arith.constant 0 : index
      %c0_265 = arith.constant 0 : index
      %390 = vector.load %arg6[%c5_263, %c0_264, %c0_265] : memref<8x8x64xbf16, #tpu.memory_space<vmem>>, vector<1x8x64xbf16>
      %391 = vector.shape_cast %390 : vector<1x8x64xbf16> to vector<8x64xbf16>
      %cst_266 = arith.constant dense<0.000000e+00> : vector<8x64xf32>
      %392 = tpu.matmul %389, %391, %cst_266 {dimension_numbers = #tpu.dot_dimension_numbers<[1], [0], [0], [1], [0, 0, 1, 1], [], []>} : vector<8x8xbf16>, vector<8x64xbf16>, vector<8x64xf32> -> vector<8x64xf32>
      %393 = arith.addf %381, %392 : vector<8x64xf32>
      %c6_267 = arith.constant 6 : index
      %c0_268 = arith.constant 0 : index
      %c0_269 = arith.constant 0 : index
      %394 = vector.load %arg9[%c6_267, %c0_268, %c0_269] : memref<8x8x1xf32, #tpu.memory_space<vmem>>, vector<1x8x1xf32>
      %395 = vector.shape_cast %394 : vector<1x8x1xf32> to vector<8x1xf32>
      %396 = tpu.reciprocal %395 {approx = true} : vector<8x1xf32> -> vector<8x1xf32>
      %c6_270 = arith.constant 6 : index
      %c0_271 = arith.constant 0 : index
      %c0_272 = arith.constant 0 : index
      %397 = vector.load %arg10[%c6_270, %c0_271, %c0_272] : memref<8x8x8xf32, #tpu.memory_space<vmem>>, vector<1x8x8xf32>
      %398 = vector.shape_cast %397 : vector<1x8x8xf32> to vector<8x8xf32>
      %399 = vector.broadcast %396 : vector<8x1xf32> to vector<8x8xf32>
      %400 = arith.mulf %398, %399 : vector<8x8xf32>
      %401 = arith.truncf %400 : vector<8x8xf32> to vector<8x8xbf16>
      %c6_273 = arith.constant 6 : index
      %c0_274 = arith.constant 0 : index
      %c0_275 = arith.constant 0 : index
      %402 = vector.load %arg6[%c6_273, %c0_274, %c0_275] : memref<8x8x64xbf16, #tpu.memory_space<vmem>>, vector<1x8x64xbf16>
      %403 = vector.shape_cast %402 : vector<1x8x64xbf16> to vector<8x64xbf16>
      %cst_276 = arith.constant dense<0.000000e+00> : vector<8x64xf32>
      %404 = tpu.matmul %401, %403, %cst_276 {dimension_numbers = #tpu.dot_dimension_numbers<[1], [0], [0], [1], [0, 0, 1, 1], [], []>} : vector<8x8xbf16>, vector<8x64xbf16>, vector<8x64xf32> -> vector<8x64xf32>
      %405 = arith.addf %393, %404 : vector<8x64xf32>
      %c7_277 = arith.constant 7 : index
      %c0_278 = arith.constant 0 : index
      %c0_279 = arith.constant 0 : index
      %406 = vector.load %arg9[%c7_277, %c0_278, %c0_279] : memref<8x8x1xf32, #tpu.memory_space<vmem>>, vector<1x8x1xf32>
      %407 = vector.shape_cast %406 : vector<1x8x1xf32> to vector<8x1xf32>
      %408 = tpu.reciprocal %407 {approx = true} : vector<8x1xf32> -> vector<8x1xf32>
      %c7_280 = arith.constant 7 : index
      %c0_281 = arith.constant 0 : index
      %c0_282 = arith.constant 0 : index
      %409 = vector.load %arg10[%c7_280, %c0_281, %c0_282] : memref<8x8x8xf32, #tpu.memory_space<vmem>>, vector<1x8x8xf32>
      %410 = vector.shape_cast %409 : vector<1x8x8xf32> to vector<8x8xf32>
      %411 = vector.broadcast %408 : vector<8x1xf32> to vector<8x8xf32>
      %412 = arith.mulf %410, %411 : vector<8x8xf32>
      %413 = arith.truncf %412 : vector<8x8xf32> to vector<8x8xbf16>
      %c7_283 = arith.constant 7 : index
      %c0_284 = arith.constant 0 : index
      %c0_285 = arith.constant 0 : index
      %414 = vector.load %arg6[%c7_283, %c0_284, %c0_285] : memref<8x8x64xbf16, #tpu.memory_space<vmem>>, vector<1x8x64xbf16>
      %415 = vector.shape_cast %414 : vector<1x8x64xbf16> to vector<8x64xbf16>
      %cst_286 = arith.constant dense<0.000000e+00> : vector<8x64xf32>
      %416 = tpu.matmul %413, %415, %cst_286 {dimension_numbers = #tpu.dot_dimension_numbers<[1], [0], [0], [1], [0, 0, 1, 1], [], []>} : vector<8x8xbf16>, vector<8x64xbf16>, vector<8x64xf32> -> vector<8x64xf32>
      %417 = arith.addf %405, %416 : vector<8x64xf32>
      %c0_287 = arith.constant 0 : index
      %c0_288 = arith.constant 0 : index
      %418 = vector.load %arg2[%c0_287, %c0_288] : memref<8x64xf32, #tpu.memory_space<vmem>>, vector<8x64xf32>
      %419 = arith.addf %417, %418 : vector<8x64xf32>
      %c0_289 = arith.constant 0 : index
      %c0_290 = arith.constant 0 : index
      %c0_291 = arith.constant 0 : index
      %420 = vector.load %arg7[%c0_289, %c0_290, %c0_291] : memref<1x8x64xf32, #tpu.memory_space<vmem>>, vector<1x8x64xf32>
      %421 = vector.shape_cast %420 : vector<1x8x64xf32> to vector<8x64xf32>
      %422 = vector.shape_cast %419 : vector<8x64xf32> to vector<1x8x64xf32>
      tpu.vector_store %arg7[%c0_289, %c0_290, %c0_291], %422 {strides = array<i32>} : memref<1x8x64xf32, #tpu.memory_space<vmem>>, vector<1x8x64xf32>,
    } else {
    }
    return
  }
  func.func @transform_0(%arg0: i32, %arg1: i32) -> (i32, i32) {
    %c0_i32 = arith.constant 0 : i32
    %c0_i32_0 = arith.constant 0 : i32
    %c0_i32_1 = arith.constant 0 : i32
    return %c0_i32, %c0_i32_0 : i32, i32
  }
  func.func @transform_1(%arg0: i32, %arg1: i32) -> (i32, i32, i32) {
    %c0_i32 = arith.constant 0 : i32
    %c0_i32_0 = arith.constant 0 : i32
    %c0_i32_1 = arith.constant 0 : i32
    %c0_i32_2 = arith.constant 0 : i32
    return %c0_i32, %c0_i32_0, %c0_i32_1 : i32, i32, i32
  }
  func.func @transform_2(%arg0: i32, %arg1: i32) -> (i32, i32, i32) {
    %c0_i32 = arith.constant 0 : i32
    %c0_i32_0 = arith.constant 0 : i32
    return %arg0, %c0_i32, %arg1 : i32, i32, i32
  }
  func.func @transform_3(%arg0: i32, %arg1: i32) -> (i32, i32) {
    %c0_i32 = arith.constant 0 : i32
    %c0_i32_0 = arith.constant 0 : i32
    %c0_i32_1 = arith.constant 0 : i32
    return %c0_i32, %c0_i32_0 : i32, i32
  }
  func.func @transform_4(%arg0: i32, %arg1: i32) -> (i32, i32, i32) {
    %c0_i32 = arith.constant 0 : i32
    %c0_i32_0 = arith.constant 0 : i32
    %c0_i32_1 = arith.constant 0 : i32
    %c0_i32_2 = arith.constant 0 : i32
    return %c0_i32, %c0_i32_0, %c0_i32_1 : i32, i32, i32
  }
  func.func @transform_5(%arg0: i32, %arg1: i32) -> (i32, i32, i32) {
    %c0_i32 = arith.constant 0 : i32
    %c0_i32_0 = arith.constant 0 : i32
    %c0_i32_1 = arith.constant 0 : i32
    return %arg0, %c0_i32, %c0_i32_0 : i32, i32, i32
  }
}

</mosaic_0001>

<llo_original>
// kernel: tpu_custom_call.1
$region0: #{tpu_custom_call.1}
  #allocation0 [shape = 'u32[]', space=smem, size = 0x4, offset = 0x4, fixed_abs, tag = 'smem constant byte address 0x4 - core index']
  #allocation1 [shape = 'u32[144,128]{1,0:T(1,128)}', space=vmem, size = 0x12000, scoped, tag = 'internal scratch']
  #allocation2 [shape = 'f32[8,8,1]{2,1,0:T(8,128)}', space=vmem, size = 0x8000, scoped, tag = 'scratch operand']
  #allocation3 [shape = 'f32[8,8,1]{2,1,0:T(8,128)}', space=vmem, size = 0x8000, scoped, tag = 'scratch operand']
  #allocation4 [shape = 'f32[8,8,8]{2,1,0:T(8,128)}', space=vmem, size = 0x8000, scoped, tag = 'scratch operand']
  %s0 = inlined_call_operand.hbm [shape: f32[8,64], index: 0, kind: input, shape index: {}]
  %s1 = inlined_call_operand.hbm [shape: bf16[8,8,8], index: 1, kind: input, shape index: {}]
  %s2 = inlined_call_operand.hbm [shape: bf16[2,64,256], index: 2, kind: input, shape index: {}]
  %s3 = inlined_call_operand.hbm [shape: bf16[64,128], index: 3, kind: input, shape index: {}]
  %s4 = inlined_call_operand.hbm [shape: bf16[8,8,64], index: 4, kind: input, shape index: {}]
  %s5 = inlined_call_operand.hbm [shape: f32[2,8,64], index: 5, kind: output, shape index: {}]
  %s6 = sld [smem:[#allocation0]]
  $region81: #{tpu_custom_call.1} parent=0
    _
  %s8 = ssub.s32 1, %s6
  %s9 = scalar_select 0, %s8, %s6
  $region1: #{tpu_custom_call.1} parent=0
    #allocation5 [shape = 'u8[4096]{0}', space=vmem, size = 0x1000, scoped, tag = 'input window, operand 0, single buffered']
    #allocation6 [shape = 's32[2]{0}', space=sflag, size = 0x8, scoped, tag = 'scoped memory for tpu_custom_call.1']
    #allocation7 [shape = 's32[2]{0}', space=sflag, size = 0x8, scoped, tag = 'scoped memory for tpu_custom_call.1']
    #allocation8 [shape = 'u8[16384]{0}', space=vmem, size = 0x4000, scoped, tag = 'input window, operand 1, single buffered']
    #allocation9 [shape = 's32[1]{0}', space=sflag, size = 0x4, scoped, tag = 'scoped memory for tpu_custom_call.1']
    #allocation10 [shape = 'u8[32768]{0}', space=vmem, size = 0x8000, scoped, tag = 'input window, operand 2']
    #allocation11 [shape = 'u8[16384]{0}', space=vmem, size = 0x4000, scoped, tag = 'input window, operand 3, single buffered']
    #allocation12 [shape = 'u8[16384]{0}', space=vmem, size = 0x4000, scoped, tag = 'input window, operand 4, single buffered']
    #allocation13 [shape = 's32[1]{0}', space=sflag, size = 0x4, scoped, tag = 'scoped memory for tpu_custom_call.1']
    #allocation14 [shape = 'u8[8192]{0}', space=vmem, size = 0x2000, scoped, tag = 'output window, operand 0']
    %10 = vsyncpa [#allocation6], 0
    %11 = vsyncpa [#allocation9], 0
    %12 = vsyncpa [#allocation13], 0
    %13 = vsyncpa [#allocation7], 0
    %s14 = scalar_lea.sflag [#allocation7], 1
    %15 = vsyncpa %s14, 0
    loop: start=0, step=1, limit=6
    $region2: #{tpu_custom_call.1} parent=1 // loop_pre_header
      _
    $region3: #{tpu_custom_call.1} parent=1 // loop_header
      %s17 = sphi 0, %s21
      %p18 = scmp.ge.s32.totalorder %s17, 6
      %s24 = sphi 0, %s36
      %s25 = sphi 0, %s32
      %s26 = sphi 0, %s24
      %s27 = sphi 0, %s25
      %s28 = sphi 0, %s26
      %s29 = sphi 0, %s27
      %s37 = sphi 0, %s37
      %s39 = sphi 0, %s37
      %s40 = sphi 0, %s39
      %s54 = sphi 0, %s40
      %s58 = sphi 0, %s58
      %s60 = sphi 0, %s58
      %s61 = sphi 0, %s60
      %s75 = sphi 0, %s61
      %s83 = sphi 0, %s85
      %s86 = sphi 0, %s83
      %s87 = sphi 0, %s86
      %s103 = sphi 0, %s87
      %s107 = sphi 0, %s107
      %s109 = sphi 0, %s107
      %s110 = sphi 0, %s109
      %s124 = sphi 0, %s110
      %s128 = sphi 0, %s128
      %s130 = sphi 0, %s128
      %s131 = sphi 0, %s130
      %s145 = sphi 0, %s131
      %s151 = sphi 0, %s153
      %s154 = sphi 0, %s151
      %s155 = sphi 0, %s154
      %s171 = sphi 0, %s155
    $region4: #{tpu_custom_call.1} parent=1 // loop_header_branch
      %20 = sbr.rel (%p18) target = $region8
    $region5: #{tpu_custom_call.1} parent=1 // loop_body
      %s22 = ssub.s32 %s17, 1
      %s23 = ssub.s32 %s17, 2
      %s30 = sadd.s32 1, %s25
      %p31 = scmp.ge.s32.totalorder %s30, 2
      %s32 = scalar_select %p31, 0, %s30
      %s33 = sadd.s32 1, %s24
      %s34 = scalar_select %p31, %s33, %s24
      %p35 = scmp.ge.s32.totalorder %s34, 2
      %s36 = scalar_select %p35, 0, %s34
      %s38 = sadd.s32 %s37, 1
      %p41 = scmp.eq.s32.totalorder %s17, 3
      %p42 = scmp.ne.s32.totalorder %s37, %s39
      %p43 = scmp.eq.s32.totalorder %s17, 0
      %p44 = por %p42, %p43
      %p45 = scmp.ne.s32.totalorder %s37, %s39
      %p46 = scmp.eq.s32.totalorder %s22, 3
      %p47 = por %p45, %p46
      %p48 = scmp.ne.s32.totalorder %s39, %s40
      %p49 = scmp.eq.s32.totalorder %s22, 0
      %p50 = por %p48, %p49
      %p51 = scmp.ne.s32.totalorder %s39, %s40
      %p52 = scmp.eq.s32.totalorder %s23, 3
      %p53 = por %p51, %p52
      %p55 = scmp.ne.s32.totalorder %s40, %s54
      %p56 = scmp.eq.s32.totalorder %s23, 0
      %p57 = por %p55, %p56
      %s59 = sadd.s32 %s58, 1
      %p62 = scmp.eq.s32.totalorder %s17, 3
      %p63 = scmp.ne.s32.totalorder %s58, %s60
      %p64 = scmp.eq.s32.totalorder %s17, 0
      %p65 = por %p63, %p64
      %p66 = scmp.ne.s32.totalorder %s58, %s60
      %p67 = scmp.eq.s32.totalorder %s22, 3
      %p68 = por %p66, %p67
      %p69 = scmp.ne.s32.totalorder %s60, %s61
      %p70 = scmp.eq.s32.totalorder %s22, 0
      %p71 = por %p69, %p70
      %p72 = scmp.ne.s32.totalorder %s60, %s61
      %p73 = scmp.eq.s32.totalorder %s23, 3
      %p74 = por %p72, %p73
      %p76 = scmp.ne.s32.totalorder %s61, %s75
      %p77 = scmp.eq.s32.totalorder %s23, 0
      %p78 = por %p76, %p77
      %s79 = ssub.s32 %s24, %s36
      %s80 = ssub.s32 %s25, %s32
      %s81 = sor.u32 %s79, %s80
      %p82 = scmp.eq.s32.totalorder %s81, 0
      %s84 = sadd.s32 %s83, 1
      %s85 = scalar_select %p82, %s83, %s84
      %p88 = pneg %p82
      %p89 = scmp.eq.s32.totalorder %s17, 3
      %p90 = por %p88, %p89
      %p91 = scmp.ne.s32.totalorder %s83, %s86
      %p92 = scmp.eq.s32.totalorder %s17, 0
      %p93 = por %p91, %p92
      %p94 = scmp.ne.s32.totalorder %s83, %s86
      %p95 = scmp.eq.s32.totalorder %s22, 3
      %p96 = por %p94, %p95
      %p97 = scmp.ne.s32.totalorder %s86, %s87
      %p98 = scmp.eq.s32.totalorder %s22, 0
      %p99 = por %p97, %p98
      %p100 = scmp.ne.s32.totalorder %s86, %s87
      %p101 = scmp.eq.s32.totalorder %s23, 3
      %p102 = por %p100, %p101
      %p104 = scmp.ne.s32.totalorder %s87, %s103
      %p105 = scmp.eq.s32.totalorder %s23, 0
      %p106 = por %p104, %p105
      %s108 = sadd.s32 %s107, 1
      %p111 = scmp.eq.s32.totalorder %s17, 3
      %p112 = scmp.ne.s32.totalorder %s107, %s109
      %p113 = scmp.eq.s32.totalorder %s17, 0
      %p114 = por %p112, %p113
      %p115 = scmp.ne.s32.totalorder %s107, %s109
      %p116 = scmp.eq.s32.totalorder %s22, 3
      %p117 = por %p115, %p116
      %p118 = scmp.ne.s32.totalorder %s109, %s110
      %p119 = scmp.eq.s32.totalorder %s22, 0
      %p120 = por %p118, %p119
      %p121 = scmp.ne.s32.totalorder %s109, %s110
      %p122 = scmp.eq.s32.totalorder %s23, 3
      %p123 = por %p121, %p122
      %p125 = scmp.ne.s32.totalorder %s110, %s124
      %p126 = scmp.eq.s32.totalorder %s23, 0
      %p127 = por %p125, %p126
      %s129 = sadd.s32 %s128, 1
      %p132 = scmp.eq.s32.totalorder %s17, 3
      %p133 = scmp.ne.s32.totalorder %s128, %s130
      %p134 = scmp.eq.s32.totalorder %s17, 0
      %p135 = por %p133, %p134
      %p136 = scmp.ne.s32.totalorder %s128, %s130
      %p137 = scmp.eq.s32.totalorder %s22, 3
      %p138 = por %p136, %p137
      %p139 = scmp.ne.s32.totalorder %s130, %s131
      %p140 = scmp.eq.s32.totalorder %s22, 0
      %p141 = por %p139, %p140
      %p142 = scmp.ne.s32.totalorder %s130, %s131
      %p143 = scmp.eq.s32.totalorder %s23, 3
      %p144 = por %p142, %p143
      %p146 = scmp.ne.s32.totalorder %s131, %s145
      %p147 = scmp.eq.s32.totalorder %s23, 0
      %p148 = por %p146, %p147
      %s149 = ssub.s32 %s24, %s36
      %p150 = scmp.eq.s32.totalorder %s149, 0
      %s152 = sadd.s32 %s151, 1
      %s153 = scalar_select %p150, %s151, %s152
      %p156 = pneg %p150
      %p157 = scmp.eq.s32.totalorder %s17, 3
      %p158 = por %p156, %p157
      %p159 = scmp.ne.s32.totalorder %s151, %s154
      %p160 = scmp.eq.s32.totalorder %s17, 0
      %p161 = por %p159, %p160
      %p162 = scmp.ne.s32.totalorder %s151, %s154
      %p163 = scmp.eq.s32.totalorder %s22, 3
      %p164 = por %p162, %p163
      %p165 = scmp.ne.s32.totalorder %s154, %s155
      %p166 = scmp.eq.s32.totalorder %s22, 0
      %p167 = por %p165, %p166
      %p168 = scmp.ne.s32.totalorder %s154, %s155
      %p169 = scmp.eq.s32.totalorder %s23, 3
      %p170 = por %p168, %p169
      %p172 = scmp.ne.s32.totalorder %s155, %s171
      %p173 = scmp.eq.s32.totalorder %s23, 0
      %p174 = por %p172, %p173
      %p175 = scmp.le.s32.totalorder 1, %s17
      %p176 = scmp.lt.s32.totalorder %s17, 5
      %p177 = pnand %p175, %p176
      %p178 = pneg %p177
      // Predicated region
      $region9: #{tpu_custom_call.1} parent=5 // pred_check
        _
      $region10: #{tpu_custom_call.1} parent=5 // pred_check_branch
        %180 = sbr.rel (%p177) target = $region12
      $region11: #{tpu_custom_call.1} parent=5 // pred_region
        %s181 = ssub.s32 %s17, 1
        // Predicated region
        $region13: #{tpu_custom_call.1} parent=11 // pred_check
          %p182 = pneg %p50
        $region14: #{tpu_custom_call.1} parent=11 // pred_check_branch
          %184 = sbr.rel (%p182) target = $region16
        $region15: #{tpu_custom_call.1} parent=11 // pred_region
          %s186 = ssub.s32 128, 128
          %187 = vsyncadd [#allocation6], %s186
          %s189 = sshll.u32 [#allocation5], 4
          %s190 = int_to_ptr.vmem [resolvable:$true] %s189
          %192 = dma.hbm_to_vmem [thread:$0]  %s0, 128, %s190, [#allocation6]
        $region16: #{tpu_custom_call.1} parent=11 // pred_fallthru
          _
        // Predicated region
        $region17: #{tpu_custom_call.1} parent=11 // pred_check
          %p193 = pneg %p71
        $region18: #{tpu_custom_call.1} parent=11 // pred_check_branch
          %195 = sbr.rel (%p193) target = $region20
        $region19: #{tpu_custom_call.1} parent=11 // pred_region
          %s197 = ssub.s32 512, 512
          %198 = vsyncadd [#allocation9], %s197
          %s199 = sshll.u32 [#allocation8], 4
          %s200 = int_to_ptr.vmem [resolvable:$true] %s199
          %205 = dma.hbm_to_vmem [thread:$0]  %s1, 512, %s200, [#allocation9], 64, 64, 4
        $region20: #{tpu_custom_call.1} parent=11 // pred_fallthru
          _
        // Predicated region
        $region21: #{tpu_custom_call.1} parent=11 // pred_check
          %p206 = pneg %p120
        $region22: #{tpu_custom_call.1} parent=11 // pred_check_branch
          %208 = sbr.rel (%p206) target = $region24
        $region23: #{tpu_custom_call.1} parent=11 // pred_region
          %s210 = ssub.s32 512, 512
          %211 = vsyncadd [#allocation9], %s210
          %s212 = sshll.u32 [#allocation11], 4
          %s213 = int_to_ptr.vmem [resolvable:$true] %s212
          %218 = dma.hbm_to_vmem [thread:$0]  %s3, 512, %s213, [#allocation9], 64, 64, 4
        $region24: #{tpu_custom_call.1} parent=11 // pred_fallthru
          _
        // Predicated region
        $region25: #{tpu_custom_call.1} parent=11 // pred_check
          %p219 = pneg %p141
        $region26: #{tpu_custom_call.1} parent=11 // pred_check_branch
          %221 = sbr.rel (%p219) target = $region28
        $region27: #{tpu_custom_call.1} parent=11 // pred_region
          %s223 = ssub.s32 512, 512
          %224 = vsyncadd [#allocation13], %s223
          %s225 = sshll.u32 [#allocation12], 4
          %s226 = int_to_ptr.vmem [resolvable:$true] %s225
          %231 = dma.hbm_to_vmem [thread:$0]  %s4, 512, %s226, [#allocation13], 64, 64, 4
        $region28: #{tpu_custom_call.1} parent=11 // pred_fallthru
          _
      $region12: #{tpu_custom_call.1} parent=5 // pred_fallthru
        _
      %p232 = scmp.lt.s32.totalorder %s17, 4
      // Predicated region
      $region29: #{tpu_custom_call.1} parent=5 // pred_check
        %p233 = pneg %p232
      $region30: #{tpu_custom_call.1} parent=5 // pred_check_branch
        %235 = sbr.rel (%p233) target = $region32
      $region31: #{tpu_custom_call.1} parent=5 // pred_region
        // Predicated region
        $region33: #{tpu_custom_call.1} parent=31 // pred_check
          %p236 = pneg %p93
        $region34: #{tpu_custom_call.1} parent=31 // pred_check_branch
          %238 = sbr.rel (%p236) target = $region36
        $region35: #{tpu_custom_call.1} parent=31 // pred_region
          %s239 = sand.u32 %s17, 1
          %s240 = scalar_lea.sflag [#allocation6], %s239
          %s241 = sand.u32 %s83, 1
          %s242 = smul.addr %s241, 32
          %s243 = scalar_lea.vmem [#allocation10], %s242
          %s245 = ssub.s32 512, 512
          %246 = vsyncadd %s240, %s245
          %s247 = smul.addr %s24, 16
          %s248 = sadd.s32 %s25, %s247
          %s249 = smul.addr %s248, 64
          %s250 = scalar_lea.hbm %s2, %s249
          %s251 = sshll.u32 %s243, 4
          %s252 = int_to_ptr.vmem [resolvable:$true] %s251
          %257 = dma.hbm_to_vmem [thread:$0]  %s250, 512, %s252, %s240, 128, 64, 4
        $region36: #{tpu_custom_call.1} parent=31 // pred_fallthru
          _
      $region32: #{tpu_custom_call.1} parent=5 // pred_fallthru
        _
      %p258 = scmp.le.s32.totalorder 1, %s17
      %p259 = scmp.lt.s32.totalorder %s17, 5
      %p260 = pnand %p258, %p259
      %p261 = pneg %p260
      // Predicated region
      $region37: #{tpu_custom_call.1} parent=5 // pred_check
        _
      $region38: #{tpu_custom_call.1} parent=5 // pred_check_branch
        %263 = sbr.rel (%p260) target = $region40
      $region39: #{tpu_custom_call.1} parent=5 // pred_region
        %s264 = ssub.s32 %s17, 1
        // Predicated region
        $region41: #{tpu_custom_call.1} parent=39 // pred_check
          %p265 = pneg %p50
        $region42: #{tpu_custom_call.1} parent=39 // pred_check_branch
          %267 = sbr.rel (%p265) target = $region44
        $region43: #{tpu_custom_call.1} parent=39 // pred_region
          %268 = dma.done [#allocation6], 128
        $region44: #{tpu_custom_call.1} parent=39 // pred_fallthru
          _
        // Predicated region
        $region45: #{tpu_custom_call.1} parent=39 // pred_check
          %p269 = pneg %p71
        $region46: #{tpu_custom_call.1} parent=39 // pred_check_branch
          %271 = sbr.rel (%p269) target = $region48
        $region47: #{tpu_custom_call.1} parent=39 // pred_region
          %272 = dma.done [#allocation9], 512
        $region48: #{tpu_custom_call.1} parent=39 // pred_fallthru
          _
        %s273 = sand.u32 %s22, 1
        %s274 = scalar_lea.sflag [#allocation6], %s273
        %s275 = sand.u32 %s86, 1
        %s276 = smul.addr %s275, 32
        %s277 = scalar_lea.vmem [#allocation10], %s276
        // Predicated region
        $region49: #{tpu_custom_call.1} parent=39 // pred_check
          %p278 = pneg %p99
        $region50: #{tpu_custom_call.1} parent=39 // pred_check_branch
          %280 = sbr.rel (%p278) target = $region52
        $region51: #{tpu_custom_call.1} parent=39 // pred_region
          %281 = dma.done %s274, 512
        $region52: #{tpu_custom_call.1} parent=39 // pred_fallthru
          _
        // Predicated region
        $region53: #{tpu_custom_call.1} parent=39 // pred_check
          %p282 = pneg %p120
        $region54: #{tpu_custom_call.1} parent=39 // pred_check_branch
          %284 = sbr.rel (%p282) target = $region56
        $region55: #{tpu_custom_call.1} parent=39 // pred_region
          %285 = dma.done [#allocation9], 512
        $region56: #{tpu_custom_call.1} parent=39 // pred_fallthru
          _
        // Predicated region
        $region57: #{tpu_custom_call.1} parent=39 // pred_check
          %p286 = pneg %p141
        $region58: #{tpu_custom_call.1} parent=39 // pred_check_branch
          %288 = sbr.rel (%p286) target = $region60
        $region59: #{tpu_custom_call.1} parent=39 // pred_region
          %289 = dma.done [#allocation13], 512
        $region60: #{tpu_custom_call.1} parent=39 // pred_fallthru
          _
        %p290 = pneg %p50
        %p291 = pneg %p47
        %p292 = pneg %p71
        %p293 = pneg %p68
        %s294 = sand.u32 %s22, 1
        %s295 = scalar_lea.sflag [#allocation6], %s294
        %s296 = sand.u32 %s86, 1
        %s297 = smul.addr %s296, 32
        %s298 = scalar_lea.vmem [#allocation10], %s297
        %p299 = pneg %p99
        %p300 = pneg %p96
        %p301 = pneg %p120
        %p302 = pneg %p117
        %p303 = pneg %p141
        %p304 = pneg %p138
        %p305 = pneg %p167
        %p306 = pneg %p164
        %s307 = sand.u32 %s154, 1
        %s308 = scalar_lea.sflag [#allocation7], %s307
        %s309 = sand.u32 %s154, 1
        %s310 = smul.addr %s309, 8
        %s311 = scalar_lea.vmem [#allocation14], %s310
        %p313 = scmp.eq.s32.totalorder %s27, 0
        // Predicated region
        $region61: #{tpu_custom_call.1} parent=39 // pred_check
          %p314 = pneg %p313
        $region62: #{tpu_custom_call.1} parent=39 // pred_check_branch
          %316 = sbr.rel (%p314) target = $region64
        $region63: #{tpu_custom_call.1} parent=39 // pred_region
          %vm317 = vcmask 7168
          %318 = vst.msk [vmem:[#allocation2] sm:$0xff] %vm317, -inf
          %319 = vst.msk [vmem:[#allocation2 + $0x8] sm:$0xff] %vm317, -inf
          %320 = vst.msk [vmem:[#allocation2 + $0x10] sm:$0xff] %vm317, -inf
          %321 = vst.msk [vmem:[#allocation2 + $0x18] sm:$0xff] %vm317, -inf
          %322 = vst.msk [vmem:[#allocation2 + $0x20] sm:$0xff] %vm317, -inf
          %323 = vst.msk [vmem:[#allocation2 + $0x28] sm:$0xff] %vm317, -inf
          %324 = vst.msk [vmem:[#allocation2 + $0x30] sm:$0xff] %vm317, -inf
          %325 = vst.msk [vmem:[#allocation2 + $0x38] sm:$0xff] %vm317, -inf
          %326 = vst.msk [vmem:[#allocation3] sm:$0xff] %vm317, 0.0
          %327 = vst.msk [vmem:[#allocation3 + $0x8] sm:$0xff] %vm317, 0.0
          %328 = vst.msk [vmem:[#allocation3 + $0x10] sm:$0xff] %vm317, 0.0
          %329 = vst.msk [vmem:[#allocation3 + $0x18] sm:$0xff] %vm317, 0.0
          %330 = vst.msk [vmem:[#allocation3 + $0x20] sm:$0xff] %vm317, 0.0
          %331 = vst.msk [vmem:[#allocation3 + $0x28] sm:$0xff] %vm317, 0.0
          %332 = vst.msk [vmem:[#allocation3 + $0x30] sm:$0xff] %vm317, 0.0
          %333 = vst.msk [vmem:[#allocation3 + $0x38] sm:$0xff] %vm317, 0.0
          %vm334 = vcmask 64512
          %335 = vst.msk [vmem:[#allocation4] sm:$0xff] %vm334, 0.0
          %336 = vst.msk [vmem:[#allocation4 + $0x8] sm:$0xff] %vm334, 0.0
          %337 = vst.msk [vmem:[#allocation4 + $0x10] sm:$0xff] %vm334, 0.0
          %338 = vst.msk [vmem:[#allocation4 + $0x18] sm:$0xff] %vm334, 0.0
          %339 = vst.msk [vmem:[#allocation4 + $0x20] sm:$0xff] %vm334, 0.0
          %340 = vst.msk [vmem:[#allocation4 + $0x28] sm:$0xff] %vm334, 0.0
          %341 = vst.msk [vmem:[#allocation4 + $0x30] sm:$0xff] %vm334, 0.0
          %342 = vst.msk [vmem:[#allocation4 + $0x38] sm:$0xff] %vm334, 0.0
        $region64: #{tpu_custom_call.1} parent=39 // pred_fallthru
          _
        %v343 = vld [vmem:[%s277] sm:$0xf]
        %v344 = vld [vmem:[%s277 + $0x4] sm:$0xf]
        %v345 = vld [vmem:[%s277 + $0x8] sm:$0xf]
        %v346 = vld [vmem:[%s277 + $0xc] sm:$0xf]
        %v347 = vld [vmem:[%s277 + $0x10] sm:$0xf]
        %v348 = vld [vmem:[%s277 + $0x14] sm:$0xf]
        %v349 = vld [vmem:[%s277 + $0x18] sm:$0xf]
        %v350 = vld [vmem:[%s277 + $0x1c] sm:$0xf]
        %v351 = vld [vmem:[#allocation11] sm:$0xf]
        %v352 = vld [vmem:[#allocation11 + $0x4] sm:$0xf]
        %v353 = vld [vmem:[#allocation11 + $0x8] sm:$0xf]
        %v354 = vld [vmem:[#allocation11 + $0xc] sm:$0xf]
        %v355 = vld [vmem:[#allocation11 + $0x10] sm:$0xf]
        %v356 = vld [vmem:[#allocation11 + $0x14] sm:$0xf]
        %v357 = vld [vmem:[#allocation11 + $0x18] sm:$0xf]
        %v358 = vld [vmem:[#allocation11 + $0x1c] sm:$0xf]
        %v367 = vunpack.c.l.b16 %v351
        %v368 = vunpack.c.l.b16 %v352
        %v369 = vunpack.c.l.b16 %v353
        %v370 = vunpack.c.l.b16 %v354
        %v371 = vunpack.c.l.b16 %v355
        %v372 = vunpack.c.l.b16 %v356
        %v373 = vunpack.c.l.b16 %v357
        %v374 = vunpack.c.l.b16 %v358
        %v375 = vpack.c.b16 %v368, %v367
        %v376 = vpack.c.b16 %v370, %v369
        %v377 = vpack.c.b16 %v372, %v371
        %v378 = vpack.c.b16 %v374, %v373
        %383 = vxpose.xlu0.c.b16.start [1/8] %v375, 128
        %384 = vxpose.xlu0.c.b16.cont [2/8] %v376, 128
        %385 = vxpose.xlu0.c.b16.cont [3/8] %v377, 128
        %386 = vxpose.xlu0.c.b16.cont [4/8] %v378, 128
        %387 = vxpose.xlu0.c.b16.cont [5/8] 0, 128
        %388 = vxpose.xlu0.c.b16.cont [6/8] 0, 128
        %389 = vxpose.xlu0.c.b16.cont [7/8] 0, 128
        %390 = vxpose.xlu0.c.b16.end [8/8] 0, 128
        %v391 = vpop.trf.xlu0
        %v392 = vpop.trf.xlu0
        %v393 = vpop.trf.xlu0
        %v394 = vpop.trf.xlu0
        %v395 = vpop.trf.xlu0
        %v396 = vpop.trf.xlu0
        %v397 = vpop.trf.xlu0
        %v398 = vpop.trf.xlu0
        %v407 = vunpack.c.l.b16 %v343
        %v408 = vunpack.c.l.b16 %v344
        %v409 = vunpack.c.l.b16 %v345
        %v410 = vunpack.c.l.b16 %v346
        %v411 = vunpack.c.l.b16 %v347
        %v412 = vunpack.c.l.b16 %v348
        %v413 = vunpack.c.l.b16 %v349
        %v414 = vunpack.c.l.b16 %v350
        %v415 = vpack.c.b16 %v408, %v407
        %v416 = vpack.c.b16 %v410, %v409
        %v417 = vpack.c.b16 %v412, %v411
        %v418 = vpack.c.b16 %v414, %v413
        %vm423 = vcmask 523264
        %v425 = vsel %vm423, %v391, 0
        %v428 = vsel %vm423, %v392, 0
        %v431 = vsel %vm423, %v393, 0
        %v434 = vsel %vm423, %v394, 0
        %v437 = vsel %vm423, %v395, 0
        %v440 = vsel %vm423, %v396, 0
        %v443 = vsel %vm423, %v397, 0
        %v446 = vsel %vm423, %v398, 0
        %448 = vmatprep.subr.bf16.mxu0 0
        %449 = vmatpush1.bf16.msra.mxu0 %v415
        %450 = vmatprep.subr.bf16.mxu0 0
        %451 = vmatpush1.bf16.msra.mxu0 %v416
        %452 = vmatprep.subr.bf16.mxu0 0
        %453 = vmatpush1.bf16.msra.mxu0 %v417
        %454 = vmatprep.subr.bf16.mxu0 0
        %455 = vmatpush1.bf16.msra.mxu0 %v418
        %456 = vmatprep.subr.bf16.mxu0 0
        %457 = vmatpush1.bf16.msra.mxu0 0
        %458 = vmatprep.subr.bf16.mxu0 0
        %459 = vmatpush1.bf16.msra.mxu0 0
        %460 = vmatprep.subr.bf16.mxu0 0
        %461 = vmatpush1.bf16.msra.mxu0 0
        %462 = vmatprep.subr.bf16.mxu0 0
        %463 = vmatpush1.bf16.msra.mxu0 0
        %464 = vmatprep.subr.bf16.mxu0 0
        %465 = vmatpush1.bf16.msra.mxu0 0
        %466 = vmatprep.subr.bf16.mxu0 0
        %467 = vmatpush1.bf16.msra.mxu0 0
        %468 = vmatprep.subr.bf16.mxu0 0
        %469 = vmatpush1.bf16.msra.mxu0 0
        %470 = vmatprep.subr.bf16.mxu0 0
        %471 = vmatpush1.bf16.msra.mxu0 0
        %472 = vmatprep.subr.bf16.mxu0 0
        %473 = vmatpush1.bf16.msra.mxu0 0
        %474 = vmatprep.subr.bf16.mxu0 0
        %475 = vmatpush1.bf16.msra.mxu0 0
        %476 = vmatprep.subr.bf16.mxu0 0
        %477 = vmatpush1.bf16.msra.mxu0 0
        %478 = vmatprep.subr.bf16.mxu0 0
        %479 = vmatpush1.bf16.msra.mxu0 0
        %480 = vmatprep.mubr.bf16.mxu0 0
        %481 = vmatmul.mubr.bf16.gmra.mrb[0].mxu0 %v425
        %v482 = vpop.f32.mrb[0].mxu0
        %v483 = vadd.f32 0.0, %v482
        %v484 = vpop.f32.mrb[0].mxu0
        %v485 = vpop.f32.mrb[0].mxu0
        %v486 = vadd.f32 0.0, %v485
        %v487 = vpop.f32.mrb[0].mxu0
        %488 = vmatprep.mubr.bf16.mxu0 0
        %489 = vmatmul.mubr.bf16.gmra.mrb[0].mxu0 %v428
        %v490 = vpop.f32.mrb[0].mxu0
        %v491 = vadd.f32 0.0, %v490
        %v492 = vpop.f32.mrb[0].mxu0
        %v493 = vpop.f32.mrb[0].mxu0
        %v494 = vadd.f32 0.0, %v493
        %v495 = vpop.f32.mrb[0].mxu0
        %496 = vmatprep.mubr.bf16.mxu0 0
        %497 = vmatmul.mubr.bf16.gmra.mrb[0].mxu0 %v431
        %v498 = vpop.f32.mrb[0].mxu0
        %v499 = vadd.f32 0.0, %v498
        %v500 = vpop.f32.mrb[0].mxu0
        %v501 = vpop.f32.mrb[0].mxu0
        %v502 = vadd.f32 0.0, %v501
        %v503 = vpop.f32.mrb[0].mxu0
        %504 = vmatprep.mubr.bf16.mxu0 0
        %505 = vmatmul.mubr.bf16.gmra.mrb[0].mxu0 %v434
        %v506 = vpop.f32.mrb[0].mxu0
        %v507 = vadd.f32 0.0, %v506
        %v508 = vpop.f32.mrb[0].mxu0
        %v509 = vpop.f32.mrb[0].mxu0
        %v510 = vadd.f32 0.0, %v509
        %v511 = vpop.f32.mrb[0].mxu0
        %512 = vmatprep.mubr.bf16.mxu0 0
        %513 = vmatmul.mubr.bf16.gmra.mrb[0].mxu0 %v437
        %v514 = vpop.f32.mrb[0].mxu0
        %v515 = vadd.f32 0.0, %v514
        %v516 = vpop.f32.mrb[0].mxu0
        %v517 = vpop.f32.mrb[0].mxu0
        %v518 = vadd.f32 0.0, %v517
        %v519 = vpop.f32.mrb[0].mxu0
        %520 = vmatprep.mubr.bf16.mxu0 0
        %521 = vmatmul.mubr.bf16.gmra.mrb[0].mxu0 %v440
        %v522 = vpop.f32.mrb[0].mxu0
        %v523 = vadd.f32 0.0, %v522
        %v524 = vpop.f32.mrb[0].mxu0
        %v525 = vpop.f32.mrb[0].mxu0
        %v526 = vadd.f32 0.0, %v525
        %v527 = vpop.f32.mrb[0].mxu0
        %528 = vmatprep.mubr.bf16.mxu0 0
        %529 = vmatmul.mubr.bf16.gmra.mrb[0].mxu0 %v443
        %v530 = vpop.f32.mrb[0].mxu0
        %v531 = vadd.f32 0.0, %v530
        %v532 = vpop.f32.mrb[0].mxu0
        %v533 = vpop.f32.mrb[0].mxu0
        %v534 = vadd.f32 0.0, %v533
        %v535 = vpop.f32.mrb[0].mxu0
        %536 = vmatprep.mubr.bf16.mxu0 0
        %537 = vmatmul.mubr.bf16.gmra.mrb[0].mxu0 %v446
        %v538 = vpop.f32.mrb[0].mxu0
        %v539 = vadd.f32 0.0, %v538
        %v540 = vpop.f32.mrb[0].mxu0
        %v541 = vpop.f32.mrb[0].mxu0
        %v542 = vadd.f32 0.0, %v541
        %v543 = vpop.f32.mrb[0].mxu0
        %544 = vdwg.mxu0
        %v545 = vpack.c.bf16 %v486, %v483
        %v546 = vpack.c.bf16 %v494, %v491
        %v547 = vpack.c.bf16 %v502, %v499
        %v548 = vpack.c.bf16 %v510, %v507
        %v549 = vpack.c.bf16 %v518, %v515
        %v550 = vpack.c.bf16 %v526, %v523
        %v551 = vpack.c.bf16 %v534, %v531
        %v552 = vpack.c.bf16 %v542, %v539
        %v553 = vld [vmem:[#allocation8] sm:$0xf]
        %vm554 = vcmask 64512
        %v556 = vsel %vm554, %v553, 0
        %vm558 = vcmask 1043456
        %v560 = vsel %vm558, %v545, 0
        %562 = vmatprep.subr.bf16.mxu0 0
        %563 = vmatpush1.bf16.msra.mxu0 %v560
        %564 = vmatprep.subr.bf16.mxu0 0
        %565 = vmatpush1.bf16.msra.mxu0 0
        %566 = vmatprep.subr.bf16.mxu0 0
        %567 = vmatpush1.bf16.msra.mxu0 0
        %568 = vmatprep.subr.bf16.mxu0 0
        %569 = vmatpush1.bf16.msra.mxu0 0
        %570 = vmatprep.subr.bf16.mxu0 0
        %571 = vmatpush1.bf16.msra.mxu0 0
        %572 = vmatprep.subr.bf16.mxu0 0
        %573 = vmatpush1.bf16.msra.mxu0 0
        %574 = vmatprep.subr.bf16.mxu0 0
        %575 = vmatpush1.bf16.msra.mxu0 0
        %576 = vmatprep.subr.bf16.mxu0 0
        %577 = vmatpush1.bf16.msra.mxu0 0
        %578 = vmatprep.subr.bf16.mxu0 0
        %579 = vmatpush1.bf16.msra.mxu0 0
        %580 = vmatprep.subr.bf16.mxu0 0
        %581 = vmatpush1.bf16.msra.mxu0 0
        %582 = vmatprep.subr.bf16.mxu0 0
        %583 = vmatpush1.bf16.msra.mxu0 0
        %584 = vmatprep.subr.bf16.mxu0 0
        %585 = vmatpush1.bf16.msra.mxu0 0
        %586 = vmatprep.subr.bf16.mxu0 0
        %587 = vmatpush1.bf16.msra.mxu0 0
        %588 = vmatprep.subr.bf16.mxu0 0
        %589 = vmatpush1.bf16.msra.mxu0 0
        %590 = vmatprep.subr.bf16.mxu0 0
        %591 = vmatpush1.bf16.msra.mxu0 0
        %592 = vmatprep.subr.bf16.mxu0 0
        %593 = vmatpush1.bf16.msra.mxu0 0
        %594 = vmatprep.mubr.bf16.mxu0 0
        %595 = vmatmul.mubr.bf16.gmra.mrb[0].mxu0 %v556
        %v596 = vpop.f32.mrb[0].mxu0
        %v597 = vadd.f32 0.0, %v596
        %v598 = vpop.f32.mrb[0].mxu0
        %v599 = vpop.f32.mrb[0].mxu0
        %v600 = vpop.f32.mrb[0].mxu0
        %601 = vdwg.mxu0
        %v602 = vmul.f32 %v597, 0.35355338
        %v603 = vld [vmem:[#allocation2] sm:$0xff]
        %604 = vmax.xlane.f32.xlu0 %v602
        %v605 = vpop.xlane.xlu0 %604
        %v606 = vmax.f32 %v603, %v605
        %v607 = vsub.f32 %v603, %v606
        %v608 = vmul.f32 %v607, 1.442695
        %v609 = vpow.pop %v608
        %611 = vset.pattern.permute.xlu0 0
        %612 = vperm.xlu0 %611, %v606
        %v613 = vpop.permute.xlu0 %612
        %v615 = vsub.f32 %v602, %v613
        %v616 = vmul.f32 %v615, 1.442695
        %v617 = vpow.pop %v616
        %v618 = vld [vmem:[#allocation3] sm:$0xff]
        %v619 = vmul.f32 %v609, %v618
        %620 = vadd.xlane.f32.xlu0 %v617
        %v621 = vpop.xlane.xlu0 %620
        %v622 = vadd.f32 %v619, %v621
        %vm623 = vcmask 7168
        %624 = vst.msk [vmem:[#allocation3] sm:$0xff] %vm623, %v622
        %v625 = vpack.c.bf16 %v617, %v617
        %626 = vmatprep.subr.bf16.mxu0 0
        %627 = vmatpush1.bf16.xpose.msra.mxu0 %v549
        %628 = vmatprep.subr.bf16.mxu0 0
        %629 = vmatpush1.bf16.xpose.msra.mxu0 0
        %630 = vmatprep.subr.bf16.mxu0 0
        %631 = vmatpush1.bf16.xpose.msra.mxu0 0
        %632 = vmatprep.subr.bf16.mxu0 0
        %633 = vmatpush1.bf16.xpose.msra.mxu0 0
        %634 = vmatprep.subr.bf16.mxu0 0
        %635 = vmatpush1.bf16.xpose.msra.mxu0 0
        %636 = vmatprep.subr.bf16.mxu0 0
        %637 = vmatpush1.bf16.xpose.msra.mxu0 0
        %638 = vmatprep.subr.bf16.mxu0 0
        %639 = vmatpush1.bf16.xpose.msra.mxu0 0
        %640 = vmatprep.subr.bf16.mxu0 0
        %641 = vmatpush1.bf16.xpose.msra.mxu0 0
        %642 = vmatprep.subr.bf16.mxu0 0
        %643 = vmatpush1.bf16.xpose.msra.mxu0 0
        %644 = vmatprep.subr.bf16.mxu0 0
        %645 = vmatpush1.bf16.xpose.msra.mxu0 0
        %646 = vmatprep.subr.bf16.mxu0 0
        %647 = vmatpush1.bf16.xpose.msra.mxu0 0
        %648 = vmatprep.subr.bf16.mxu0 0
        %649 = vmatpush1.bf16.xpose.msra.mxu0 0
        %650 = vmatprep.subr.bf16.mxu0 0
        %651 = vmatpush1.bf16.xpose.msra.mxu0 0
        %652 = vmatprep.subr.bf16.mxu0 0
        %653 = vmatpush1.bf16.xpose.msra.mxu0 0
        %654 = vmatprep.subr.bf16.mxu0 0
        %655 = vmatpush1.bf16.xpose.msra.mxu0 0
        %656 = vmatprep.subr.bf16.mxu0 0
        %657 = vmatpush1.bf16.xpose.msra.mxu0 0
        %658 = vmatprep.mubr.bf16.mxu0 0
        %659 = vmatmul.mubr.bf16.gmra.mrb[0].mxu0 %v625
        %v660 = vpop.f32.mrb[0].mxu0
        %v661 = vadd.f32 0.0, %v660
        %v662 = vpop.f32.mrb[0].mxu0
        %v663 = vpop.f32.mrb[0].mxu0
        %v664 = vpop.f32.mrb[0].mxu0
        %665 = vdwg.mxu0
        %v666 = vld [vmem:[#allocation4] sm:$0xff]
        %668 = vset.pattern.permute.xlu0 0
        %669 = vperm.xlu0 %668, %v609
        %v670 = vpop.permute.xlu0 %669
        %v672 = vmul.f32 %v670, %v666
        %v673 = vadd.f32 %v672, %v661
        %674 = vst.msk [vmem:[#allocation4] sm:$0xff] %vm554, %v673
        %675 = vst.msk [vmem:[#allocation2] sm:$0xff] %vm623, %v606
        %s676 = scalar_lea.vmem [#allocation8], 4
        %v677 = vld [vmem:[%s676] sm:$0xf]
        %v679 = vrot.slane %v545, 4
        %v681 = vsel %vm554, %v677, 0
        %v684 = vsel %vm558, %v679, 0
        %686 = vmatprep.subr.bf16.mxu0 0
        %687 = vmatpush1.bf16.msra.mxu0 %v684
        %688 = vmatprep.subr.bf16.mxu0 0
        %689 = vmatpush1.bf16.msra.mxu0 0
        %690 = vmatprep.subr.bf16.mxu0 0
        %691 = vmatpush1.bf16.msra.mxu0 0
        %692 = vmatprep.subr.bf16.mxu0 0
        %693 = vmatpush1.bf16.msra.mxu0 0
        %694 = vmatprep.subr.bf16.mxu0 0
        %695 = vmatpush1.bf16.msra.mxu0 0
        %696 = vmatprep.subr.bf16.mxu0 0
        %697 = vmatpush1.bf16.msra.mxu0 0
        %698 = vmatprep.subr.bf16.mxu0 0
        %699 = vmatpush1.bf16.msra.mxu0 0
        %700 = vmatprep.subr.bf16.mxu0 0
        %701 = vmatpush1.bf16.msra.mxu0 0
        %702 = vmatprep.subr.bf16.mxu0 0
        %703 = vmatpush1.bf16.msra.mxu0 0
        %704 = vmatprep.subr.bf16.mxu0 0
        %705 = vmatpush1.bf16.msra.mxu0 0
        %706 = vmatprep.subr.bf16.mxu0 0
        %707 = vmatpush1.bf16.msra.mxu0 0
        %708 = vmatprep.subr.bf16.mxu0 0
        %709 = vmatpush1.bf16.msra.mxu0 0
        %710 = vmatprep.subr.bf16.mxu0 0
        %711 = vmatpush1.bf16.msra.mxu0 0
        %712 = vmatprep.subr.bf16.mxu0 0
        %713 = vmatpush1.bf16.msra.mxu0 0
        %714 = vmatprep.subr.bf16.mxu0 0
        %715 = vmatpush1.bf16.msra.mxu0 0
        %716 = vmatprep.subr.bf16.mxu0 0
        %717 = vmatpush1.bf16.msra.mxu0 0
        %718 = vmatprep.mubr.bf16.mxu0 0
        %719 = vmatmul.mubr.bf16.gmra.mrb[0].mxu0 %v681
        %v720 = vpop.f32.mrb[0].mxu0
        %v721 = vadd.f32 0.0, %v720
        %v722 = vpop.f32.mrb[0].mxu0
        %v723 = vpop.f32.mrb[0].mxu0
        %v724 = vpop.f32.mrb[0].mxu0
        %725 = vdwg.mxu0
        %v726 = vmul.f32 %v721, 0.35355338
        %s727 = scalar_lea.vmem [#allocation2], 8
        %v728 = vld [vmem:[%s727] sm:$0xff]
        %729 = vmax.xlane.f32.xlu0 %v726
        %v730 = vpop.xlane.xlu0 %729
        %v731 = vmax.f32 %v728, %v730
        %v732 = vsub.f32 %v728, %v731
        %v733 = vmul.f32 %v732, 1.442695
        %v734 = vpow.pop %v733
        %736 = vset.pattern.permute.xlu0 0
        %737 = vperm.xlu0 %736, %v731
        %v738 = vpop.permute.xlu0 %737
        %v740 = vsub.f32 %v726, %v738
        %v741 = vmul.f32 %v740, 1.442695
        %v742 = vpow.pop %v741
        %s743 = scalar_lea.vmem [#allocation3], 8
        %v744 = vld [vmem:[%s743] sm:$0xff]
        %v745 = vmul.f32 %v734, %v744
        %746 = vadd.xlane.f32.xlu0 %v742
        %v747 = vpop.xlane.xlu0 %746
        %v748 = vadd.f32 %v745, %v747
        %749 = vst.msk [vmem:[%s743] sm:$0xff] %vm623, %v748
        %v750 = vpack.c.bf16 %v742, %v742
        %v752 = vrot.slane %v549, 4
        %754 = vmatprep.subr.bf16.mxu0 0
        %755 = vmatpush1.bf16.xpose.msra.mxu0 %v752
        %756 = vmatprep.subr.bf16.mxu0 0
        %757 = vmatpush1.bf16.xpose.msra.mxu0 0
        %758 = vmatprep.subr.bf16.mxu0 0
        %759 = vmatpush1.bf16.xpose.msra.mxu0 0
        %760 = vmatprep.subr.bf16.mxu0 0
        %761 = vmatpush1.bf16.xpose.msra.mxu0 0
        %762 = vmatprep.subr.bf16.mxu0 0
        %763 = vmatpush1.bf16.xpose.msra.mxu0 0
        %764 = vmatprep.subr.bf16.mxu0 0
        %765 = vmatpush1.bf16.xpose.msra.mxu0 0
        %766 = vmatprep.subr.bf16.mxu0 0
        %767 = vmatpush1.bf16.xpose.msra.mxu0 0
        %768 = vmatprep.subr.bf16.mxu0 0
        %769 = vmatpush1.bf16.xpose.msra.mxu0 0
        %770 = vmatprep.subr.bf16.mxu0 0
        %771 = vmatpush1.bf16.xpose.msra.mxu0 0
        %772 = vmatprep.subr.bf16.mxu0 0
        %773 = vmatpush1.bf16.xpose.msra.mxu0 0
        %774 = vmatprep.subr.bf16.mxu0 0
        %775 = vmatpush1.bf16.xpose.msra.mxu0 0
        %776 = vmatprep.subr.bf16.mxu0 0
        %777 = vmatpush1.bf16.xpose.msra.mxu0 0
        %778 = vmatprep.subr.bf16.mxu0 0
        %779 = vmatpush1.bf16.xpose.msra.mxu0 0
        %780 = vmatprep.subr.bf16.mxu0 0
        %781 = vmatpush1.bf16.xpose.msra.mxu0 0
        %782 = vmatprep.subr.bf16.mxu0 0
        %783 = vmatpush1.bf16.xpose.msra.mxu0 0
        %784 = vmatprep.subr.bf16.mxu0 0
        %785 = vmatpush1.bf16.xpose.msra.mxu0 0
        %786 = vmatprep.mubr.bf16.mxu0 0
        %787 = vmatmul.mubr.bf16.gmra.mrb[0].mxu0 %v750
        %v788 = vpop.f32.mrb[0].mxu0
        %v789 = vadd.f32 0.0, %v788
        %v790 = vpop.f32.mrb[0].mxu0
        %v791 = vpop.f32.mrb[0].mxu0
        %v792 = vpop.f32.mrb[0].mxu0
        %793 = vdwg.mxu0
        %s794 = scalar_lea.vmem [#allocation4], 8
        %v795 = vld [vmem:[%s794] sm:$0xff]
        %797 = vset.pattern.permute.xlu0 0
        %798 = vperm.xlu0 %797, %v734
        %v799 = vpop.permute.xlu0 %798
        %v801 = vmul.f32 %v799, %v795
        %v802 = vadd.f32 %v801, %v789
        %803 = vst.msk [vmem:[%s794] sm:$0xff] %vm554, %v802
        %804 = vst.msk [vmem:[%s727] sm:$0xff] %vm623, %v731
        %s805 = scalar_lea.vmem [#allocation8], 8
        %v806 = vld [vmem:[%s805] sm:$0xf]
        %v808 = vsel %vm554, %v806, 0
        %v811 = vsel %vm558, %v546, 0
        %813 = vmatprep.subr.bf16.mxu0 0
        %814 = vmatpush1.bf16.msra.mxu0 %v811
        %815 = vmatprep.subr.bf16.mxu0 0
        %816 = vmatpush1.bf16.msra.mxu0 0
        %817 = vmatprep.subr.bf16.mxu0 0
        %818 = vmatpush1.bf16.msra.mxu0 0
        %819 = vmatprep.subr.bf16.mxu0 0
        %820 = vmatpush1.bf16.msra.mxu0 0
        %821 = vmatprep.subr.bf16.mxu0 0
        %822 = vmatpush1.bf16.msra.mxu0 0
        %823 = vmatprep.subr.bf16.mxu0 0
        %824 = vmatpush1.bf16.msra.mxu0 0
        %825 = vmatprep.subr.bf16.mxu0 0
        %826 = vmatpush1.bf16.msra.mxu0 0
        %827 = vmatprep.subr.bf16.mxu0 0
        %828 = vmatpush1.bf16.msra.mxu0 0
        %829 = vmatprep.subr.bf16.mxu0 0
        %830 = vmatpush1.bf16.msra.mxu0 0
        %831 = vmatprep.subr.bf16.mxu0 0
        %832 = vmatpush1.bf16.msra.mxu0 0
        %833 = vmatprep.subr.bf16.mxu0 0
        %834 = vmatpush1.bf16.msra.mxu0 0
        %835 = vmatprep.subr.bf16.mxu0 0
        %836 = vmatpush1.bf16.msra.mxu0 0
        %837 = vmatprep.subr.bf16.mxu0 0
        %838 = vmatpush1.bf16.msra.mxu0 0
        %839 = vmatprep.subr.bf16.mxu0 0
        %840 = vmatpush1.bf16.msra.mxu0 0
        %841 = vmatprep.subr.bf16.mxu0 0
        %842 = vmatpush1.bf16.msra.mxu0 0
        %843 = vmatprep.subr.bf16.mxu0 0
        %844 = vmatpush1.bf16.msra.mxu0 0
        %845 = vmatprep.mubr.bf16.mxu0 0
        %846 = vmatmul.mubr.bf16.gmra.mrb[0].mxu0 %v808
        %v847 = vpop.f32.mrb[0].mxu0
        %v848 = vadd.f32 0.0, %v847
        %v849 = vpop.f32.mrb[0].mxu0
        %v850 = vpop.f32.mrb[0].mxu0
        %v851 = vpop.f32.mrb[0].mxu0
        %852 = vdwg.mxu0
        %v853 = vmul.f32 %v848, 0.35355338
        %s854 = scalar_lea.vmem [#allocation2], 16
        %v855 = vld [vmem:[%s854] sm:$0xff]
        %856 = vmax.xlane.f32.xlu0 %v853
        %v857 = vpop.xlane.xlu0 %856
        %v858 = vmax.f32 %v855, %v857
        %v859 = vsub.f32 %v855, %v858
        %v860 = vmul.f32 %v859, 1.442695
        %v861 = vpow.pop %v860
        %863 = vset.pattern.permute.xlu0 0
        %864 = vperm.xlu0 %863, %v858
        %v865 = vpop.permute.xlu0 %864
        %v867 = vsub.f32 %v853, %v865
        %v868 = vmul.f32 %v867, 1.442695
        %v869 = vpow.pop %v868
        %s870 = scalar_lea.vmem [#allocation3], 16
        %v871 = vld [vmem:[%s870] sm:$0xff]
        %v872 = vmul.f32 %v861, %v871
        %873 = vadd.xlane.f32.xlu0 %v869
        %v874 = vpop.xlane.xlu0 %873
        %v875 = vadd.f32 %v872, %v874
        %876 = vst.msk [vmem:[%s870] sm:$0xff] %vm623, %v875
        %v877 = vpack.c.bf16 %v869, %v869
        %878 = vmatprep.subr.bf16.mxu0 0
        %879 = vmatpush1.bf16.xpose.msra.mxu0 %v550
        %880 = vmatprep.subr.bf16.mxu0 0
        %881 = vmatpush1.bf16.xpose.msra.mxu0 0
        %882 = vmatprep.subr.bf16.mxu0 0
        %883 = vmatpush1.bf16.xpose.msra.mxu0 0
        %884 = vmatprep.subr.bf16.mxu0 0
        %885 = vmatpush1.bf16.xpose.msra.mxu0 0
        %886 = vmatprep.subr.bf16.mxu0 0
        %887 = vmatpush1.bf16.xpose.msra.mxu0 0
        %888 = vmatprep.subr.bf16.mxu0 0
        %889 = vmatpush1.bf16.xpose.msra.mxu0 0
        %890 = vmatprep.subr.bf16.mxu0 0
        %891 = vmatpush1.bf16.xpose.msra.mxu0 0
        %892 = vmatprep.subr.bf16.mxu0 0
        %893 = vmatpush1.bf16.xpose.msra.mxu0 0
        %894 = vmatprep.subr.bf16.mxu0 0
        %895 = vmatpush1.bf16.xpose.msra.mxu0 0
        %896 = vmatprep.subr.bf16.mxu0 0
        %897 = vmatpush1.bf16.xpose.msra.mxu0 0
        %898 = vmatprep.subr.bf16.mxu0 0
        %899 = vmatpush1.bf16.xpose.msra.mxu0 0
        %900 = vmatprep.subr.bf16.mxu0 0
        %901 = vmatpush1.bf16.xpose.msra.mxu0 0
        %902 = vmatprep.subr.bf16.mxu0 0
        %903 = vmatpush1.bf16.xpose.msra.mxu0 0
        %904 = vmatprep.subr.bf16.mxu0 0
        %905 = vmatpush1.bf16.xpose.msra.mxu0 0
        %906 = vmatprep.subr.bf16.mxu0 0
        %907 = vmatpush1.bf16.xpose.msra.mxu0 0
        %908 = vmatprep.subr.bf16.mxu0 0
        %909 = vmatpush1.bf16.xpose.msra.mxu0 0
        %910 = vmatprep.mubr.bf16.mxu0 0
        %911 = vmatmul.mubr.bf16.gmra.mrb[0].mxu0 %v877
        %v912 = vpop.f32.mrb[0].mxu0
        %v913 = vadd.f32 0.0, %v912
        %v914 = vpop.f32.mrb[0].mxu0
        %v915 = vpop.f32.mrb[0].mxu0
        %v916 = vpop.f32.mrb[0].mxu0
        %917 = vdwg.mxu0
        %s918 = scalar_lea.vmem [#allocation4], 16
        %v919 = vld [vmem:[%s918] sm:$0xff]
        %921 = vset.pattern.permute.xlu0 0
        %922 = vperm.xlu0 %921, %v861
        %v923 = vpop.permute.xlu0 %922
        %v925 = vmul.f32 %v923, %v919
        %v926 = vadd.f32 %v925, %v913
        %927 = vst.msk [vmem:[%s918] sm:$0xff] %vm554, %v926
        %928 = vst.msk [vmem:[%s854] sm:$0xff] %vm623, %v858
        %s929 = scalar_lea.vmem [#allocation8], 12
        %v930 = vld [vmem:[%s929] sm:$0xf]
        %v932 = vrot.slane %v546, 4
        %v934 = vsel %vm554, %v930, 0
        %v937 = vsel %vm558, %v932, 0
        %939 = vmatprep.subr.bf16.mxu0 0
        %940 = vmatpush1.bf16.msra.mxu0 %v937
        %941 = vmatprep.subr.bf16.mxu0 0
        %942 = vmatpush1.bf16.msra.mxu0 0
        %943 = vmatprep.subr.bf16.mxu0 0
        %944 = vmatpush1.bf16.msra.mxu0 0
        %945 = vmatprep.subr.bf16.mxu0 0
        %946 = vmatpush1.bf16.msra.mxu0 0
        %947 = vmatprep.subr.bf16.mxu0 0
        %948 = vmatpush1.bf16.msra.mxu0 0
        %949 = vmatprep.subr.bf16.mxu0 0
        %950 = vmatpush1.bf16.msra.mxu0 0
        %951 = vmatprep.subr.bf16.mxu0 0
        %952 = vmatpush1.bf16.msra.mxu0 0
        %953 = vmatprep.subr.bf16.mxu0 0
        %954 = vmatpush1.bf16.msra.mxu0 0
        %955 = vmatprep.subr.bf16.mxu0 0
        %956 = vmatpush1.bf16.msra.mxu0 0
        %957 = vmatprep.subr.bf16.mxu0 0
        %958 = vmatpush1.bf16.msra.mxu0 0
        %959 = vmatprep.subr.bf16.mxu0 0
        %960 = vmatpush1.bf16.msra.mxu0 0
        %961 = vmatprep.subr.bf16.mxu0 0
        %962 = vmatpush1.bf16.msra.mxu0 0
        %963 = vmatprep.subr.bf16.mxu0 0
        %964 = vmatpush1.bf16.msra.mxu0 0
        %965 = vmatprep.subr.bf16.mxu0 0
        %966 = vmatpush1.bf16.msra.mxu0 0
        %967 = vmatprep.subr.bf16.mxu0 0
        %968 = vmatpush1.bf16.msra.mxu0 0
        %969 = vmatprep.subr.bf16.mxu0 0
        %970 = vmatpush1.bf16.msra.mxu0 0
        %971 = vmatprep.mubr.bf16.mxu0 0
        %972 = vmatmul.mubr.bf16.gmra.mrb[0].mxu0 %v934
        %v973 = vpop.f32.mrb[0].mxu0
        %v974 = vadd.f32 0.0, %v973
        %v975 = vpop.f32.mrb[0].mxu0
        %v976 = vpop.f32.mrb[0].mxu0
        %v977 = vpop.f32.mrb[0].mxu0
        %978 = vdwg.mxu0
        %v979 = vmul.f32 %v974, 0.35355338
        %s980 = scalar_lea.vmem [#allocation2], 24
        %v981 = vld [vmem:[%s980] sm:$0xff]
        %982 = vmax.xlane.f32.xlu0 %v979
        %v983 = vpop.xlane.xlu0 %982
        %v984 = vmax.f32 %v981, %v983
        %v985 = vsub.f32 %v981, %v984
        %v986 = vmul.f32 %v985, 1.442695
        %v987 = vpow.pop %v986
        %989 = vset.pattern.permute.xlu0 0
        %990 = vperm.xlu0 %989, %v984
        %v991 = vpop.permute.xlu0 %990
        %v993 = vsub.f32 %v979, %v991
        %v994 = vmul.f32 %v993, 1.442695
        %v995 = vpow.pop %v994
        %s996 = scalar_lea.vmem [#allocation3], 24
        %v997 = vld [vmem:[%s996] sm:$0xff]
        %v998 = vmul.f32 %v987, %v997
        %999 = vadd.xlane.f32.xlu0 %v995
        %v1000 = vpop.xlane.xlu0 %999
        %v1001 = vadd.f32 %v998, %v1000
        %1002 = vst.msk [vmem:[%s996] sm:$0xff] %vm623, %v1001
        %v1003 = vpack.c.bf16 %v995, %v995
        %v1005 = vrot.slane %v550, 4
        %1007 = vmatprep.subr.bf16.mxu0 0
        %1008 = vmatpush1.bf16.xpose.msra.mxu0 %v1005
        %1009 = vmatprep.subr.bf16.mxu0 0
        %1010 = vmatpush1.bf16.xpose.msra.mxu0 0
        %1011 = vmatprep.subr.bf16.mxu0 0
        %1012 = vmatpush1.bf16.xpose.msra.mxu0 0
        %1013 = vmatprep.subr.bf16.mxu0 0
        %1014 = vmatpush1.bf16.xpose.msra.mxu0 0
        %1015 = vmatprep.subr.bf16.mxu0 0
        %1016 = vmatpush1.bf16.xpose.msra.mxu0 0
        %1017 = vmatprep.subr.bf16.mxu0 0
        %1018 = vmatpush1.bf16.xpose.msra.mxu0 0
        %1019 = vmatprep.subr.bf16.mxu0 0
        %1020 = vmatpush1.bf16.xpose.msra.mxu0 0
        %1021 = vmatprep.subr.bf16.mxu0 0
        %1022 = vmatpush1.bf16.xpose.msra.mxu0 0
        %1023 = vmatprep.subr.bf16.mxu0 0
        %1024 = vmatpush1.bf16.xpose.msra.mxu0 0
        %1025 = vmatprep.subr.bf16.mxu0 0
        %1026 = vmatpush1.bf16.xpose.msra.mxu0 0
        %1027 = vmatprep.subr.bf16.mxu0 0
        %1028 = vmatpush1.bf16.xpose.msra.mxu0 0
        %1029 = vmatprep.subr.bf16.mxu0 0
        %1030 = vmatpush1.bf16.xpose.msra.mxu0 0
        %1031 = vmatprep.subr.bf16.mxu0 0
        %1032 = vmatpush1.bf16.xpose.msra.mxu0 0
        %1033 = vmatprep.subr.bf16.mxu0 0
        %1034 = vmatpush1.bf16.xpose.msra.mxu0 0
        %1035 = vmatprep.subr.bf16.mxu0 0
        %1036 = vmatpush1.bf16.xpose.msra.mxu0 0
        %1037 = vmatprep.subr.bf16.mxu0 0
        %1038 = vmatpush1.bf16.xpose.msra.mxu0 0
        %1039 = vmatprep.mubr.bf16.mxu0 0
        %1040 = vmatmul.mubr.bf16.gmra.mrb[0].mxu0 %v1003
        %v1041 = vpop.f32.mrb[0].mxu0
        %v1042 = vadd.f32 0.0, %v1041
        %v1043 = vpop.f32.mrb[0].mxu0
        %v1044 = vpop.f32.mrb[0].mxu0
        %v1045 = vpop.f32.mrb[0].mxu0
        %1046 = vdwg.mxu0
        %s1047 = scalar_lea.vmem [#allocation4], 24
        %v1048 = vld [vmem:[%s1047] sm:$0xff]
        %1050 = vset.pattern.permute.xlu0 0
        %1051 = vperm.xlu0 %1050, %v987
        %v1052 = vpop.permute.xlu0 %1051
        %v1054 = vmul.f32 %v1052, %v1048
        %v1055 = vadd.f32 %v1054, %v1042
        %1056 = vst.msk [vmem:[%s1047] sm:$0xff] %vm554, %v1055
        %1057 = vst.msk [vmem:[%s980] sm:$0xff] %vm623, %v984
        %s1058 = scalar_lea.vmem [#allocation8], 16
        %v1059 = vld [vmem:[%s1058] sm:$0xf]
        %v1061 = vsel %vm554, %v1059, 0
        %v1064 = vsel %vm558, %v547, 0
        %1066 = vmatprep.subr.bf16.mxu0 0
        %1067 = vmatpush1.bf16.msra.mxu0 %v1064
        %1068 = vmatprep.subr.bf16.mxu0 0
        %1069 = vmatpush1.bf16.msra.mxu0 0
        %1070 = vmatprep.subr.bf16.mxu0 0
        %1071 = vmatpush1.bf16.msra.mxu0 0
        %1072 = vmatprep.subr.bf16.mxu0 0
        %1073 = vmatpush1.bf16.msra.mxu0 0
        %1074 = vmatprep.subr.bf16.mxu0 0
        %1075 = vmatpush1.bf16.msra.mxu0 0
        %1076 = vmatprep.subr.bf16.mxu0 0
        %1077 = vmatpush1.bf16.msra.mxu0 0
        %1078 = vmatprep.subr.bf16.mxu0 0
        %1079 = vmatpush1.bf16.msra.mxu0 0
        %1080 = vmatprep.subr.bf16.mxu0 0
        %1081 = vmatpush1.bf16.msra.mxu0 0
        %1082 = vmatprep.subr.bf16.mxu0 0
        %1083 = vmatpush1.bf16.msra.mxu0 0
        %1084 = vmatprep.subr.bf16.mxu0 0
        %1085 = vmatpush1.bf16.msra.mxu0 0
        %1086 = vmatprep.subr.bf16.mxu0 0
        %1087 = vmatpush1.bf16.msra.mxu0 0
        %1088 = vmatprep.subr.bf16.mxu0 0
        %1089 = vmatpush1.bf16.msra.mxu0 0
        %1090 = vmatprep.subr.bf16.mxu0 0
        %1091 = vmatpush1.bf16.msra.mxu0 0
        %1092 = vmatprep.subr.bf16.mxu0 0
        %1093 = vmatpush1.bf16.msra.mxu0 0
        %1094 = vmatprep.subr.bf16.mxu0 0
        %1095 = vmatpush1.bf16.msra.mxu0 0
        %1096 = vmatprep.subr.bf16.mxu0 0
        %1097 = vmatpush1.bf16.msra.mxu0 0
        %1098 = vmatprep.mubr.bf16.mxu0 0
        %1099 = vmatmul.mubr.bf16.gmra.mrb[0].mxu0 %v1061
        %v1100 = vpop.f32.mrb[0].mxu0
        %v1101 = vadd.f32 0.0, %v1100
        %v1102 = vpop.f32.mrb[0].mxu0
        %v1103 = vpop.f32.mrb[0].mxu0
        %v1104 = vpop.f32.mrb[0].mxu0
        %1105 = vdwg.mxu0
        %v1106 = vmul.f32 %v1101, 0.35355338
        %s1107 = scalar_lea.vmem [#allocation2], 32
        %v1108 = vld [vmem:[%s1107] sm:$0xff]
        %1109 = vmax.xlane.f32.xlu0 %v1106
        %v1110 = vpop.xlane.xlu0 %1109
        %v1111 = vmax.f32 %v1108, %v1110
        %v1112 = vsub.f32 %v1108, %v1111
        %v1113 = vmul.f32 %v1112, 1.442695
        %v1114 = vpow.pop %v1113
        %1116 = vset.pattern.permute.xlu0 0
        %1117 = vperm.xlu0 %1116, %v1111
        %v1118 = vpop.permute.xlu0 %1117
        %v1120 = vsub.f32 %v1106, %v1118
        %v1121 = vmul.f32 %v1120, 1.442695
        %v1122 = vpow.pop %v1121
        %s1123 = scalar_lea.vmem [#allocation3], 32
        %v1124 = vld [vmem:[%s1123] sm:$0xff]
        %v1125 = vmul.f32 %v1114, %v1124
        %1126 = vadd.xlane.f32.xlu0 %v1122
        %v1127 = vpop.xlane.xlu0 %1126
        %v1128 = vadd.f32 %v1125, %v1127
        %1129 = vst.msk [vmem:[%s1123] sm:$0xff] %vm623, %v1128
        %v1130 = vpack.c.bf16 %v1122, %v1122
        %1131 = vmatprep.subr.bf16.mxu0 0
        %1132 = vmatpush1.bf16.xpose.msra.mxu0 %v551
        %1133 = vmatprep.subr.bf16.mxu0 0
        %1134 = vmatpush1.bf16.xpose.msra.mxu0 0
        %1135 = vmatprep.subr.bf16.mxu0 0
        %1136 = vmatpush1.bf16.xpose.msra.mxu0 0
        %1137 = vmatprep.subr.bf16.mxu0 0
        %1138 = vmatpush1.bf16.xpose.msra.mxu0 0
        %1139 = vmatprep.subr.bf16.mxu0 0
        %1140 = vmatpush1.bf16.xpose.msra.mxu0 0
        %1141 = vmatprep.subr.bf16.mxu0 0
        %1142 = vmatpush1.bf16.xpose.msra.mxu0 0
        %1143 = vmatprep.subr.bf16.mxu0 0
        %1144 = vmatpush1.bf16.xpose.msra.mxu0 0
        %1145 = vmatprep.subr.bf16.mxu0 0
        %1146 = vmatpush1.bf16.xpose.msra.mxu0 0
        %1147 = vmatprep.subr.bf16.mxu0 0
        %1148 = vmatpush1.bf16.xpose.msra.mxu0 0
        %1149 = vmatprep.subr.bf16.mxu0 0
        %1150 = vmatpush1.bf16.xpose.msra.mxu0 0
        %1151 = vmatprep.subr.bf16.mxu0 0
        %1152 = vmatpush1.bf16.xpose.msra.mxu0 0
        %1153 = vmatprep.subr.bf16.mxu0 0
        %1154 = vmatpush1.bf16.xpose.msra.mxu0 0
        %1155 = vmatprep.subr.bf16.mxu0 0
        %1156 = vmatpush1.bf16.xpose.msra.mxu0 0
        %1157 = vmatprep.subr.bf16.mxu0 0
        %1158 = vmatpush1.bf16.xpose.msra.mxu0 0
        %1159 = vmatprep.subr.bf16.mxu0 0
        %1160 = vmatpush1.bf16.xpose.msra.mxu0 0
        %1161 = vmatprep.subr.bf16.mxu0 0
        %1162 = vmatpush1.bf16.xpose.msra.mxu0 0
        %1163 = vmatprep.mubr.bf16.mxu0 0
        %1164 = vmatmul.mubr.bf16.gmra.mrb[0].mxu0 %v1130
        %v1165 = vpop.f32.mrb[0].mxu0
        %v1166 = vadd.f32 0.0, %v1165
        %v1167 = vpop.f32.mrb[0].mxu0
        %v1168 = vpop.f32.mrb[0].mxu0
        %v1169 = vpop.f32.mrb[0].mxu0
        %1170 = vdwg.mxu0
        %s1171 = scalar_lea.vmem [#allocation4], 32
        %v1172 = vld [vmem:[%s1171] sm:$0xff]
        %1174 = vset.pattern.permute.xlu0 0
        %1175 = vperm.xlu0 %1174, %v1114
        %v1176 = vpop.permute.xlu0 %1175
        %v1178 = vmul.f32 %v1176, %v1172
        %v1179 = vadd.f32 %v1178, %v1166
        %1180 = vst.msk [vmem:[%s1171] sm:$0xff] %vm554, %v1179
        %1181 = vst.msk [vmem:[%s1107] sm:$0xff] %vm623, %v1111
        %s1182 = scalar_lea.vmem [#allocation8], 20
        %v1183 = vld [vmem:[%s1182] sm:$0xf]
        %v1185 = vrot.slane %v547, 4
        %v1187 = vsel %vm554, %v1183, 0
        %v1190 = vsel %vm558, %v1185, 0
        %1192 = vmatprep.subr.bf16.mxu0 0
        %1193 = vmatpush1.bf16.msra.mxu0 %v1190
        %1194 = vmatprep.subr.bf16.mxu0 0
        %1195 = vmatpush1.bf16.msra.mxu0 0
        %1196 = vmatprep.subr.bf16.mxu0 0
        %1197 = vmatpush1.bf16.msra.mxu0 0
        %1198 = vmatprep.subr.bf16.mxu0 0
        %1199 = vmatpush1.bf16.msra.mxu0 0
        %1200 = vmatprep.subr.bf16.mxu0 0
        %1201 = vmatpush1.bf16.msra.mxu0 0
        %1202 = vmatprep.subr.bf16.mxu0 0
        %1203 = vmatpush1.bf16.msra.mxu0 0
        %1204 = vmatprep.subr.bf16.mxu0 0
        %1205 = vmatpush1.bf16.msra.mxu0 0
        %1206 = vmatprep.subr.bf16.mxu0 0
        %1207 = vmatpush1.bf16.msra.mxu0 0
        %1208 = vmatprep.subr.bf16.mxu0 0
        %1209 = vmatpush1.bf16.msra.mxu0 0
        %1210 = vmatprep.subr.bf16.mxu0 0
        %1211 = vmatpush1.bf16.msra.mxu0 0
        %1212 = vmatprep.subr.bf16.mxu0 0
        %1213 = vmatpush1.bf16.msra.mxu0 0
        %1214 = vmatprep.subr.bf16.mxu0 0
        %1215 = vmatpush1.bf16.msra.mxu0 0
        %1216 = vmatprep.subr.bf16.mxu0 0
        %1217 = vmatpush1.bf16.msra.mxu0 0
        %1218 = vmatprep.subr.bf16.mxu0 0
        %1219 = vmatpush1.bf16.msra.mxu0 0
        %1220 = vmatprep.subr.bf16.mxu0 0
        %1221 = vmatpush1.bf16.msra.mxu0 0
        %1222 = vmatprep.subr.bf16.mxu0 0
        %1223 = vmatpush1.bf16.msra.mxu0 0
        %1224 = vmatprep.mubr.bf16.mxu0 0
        %1225 = vmatmul.mubr.bf16.gmra.mrb[0].mxu0 %v1187
        %v1226 = vpop.f32.mrb[0].mxu0
        %v1227 = vadd.f32 0.0, %v1226
        %v1228 = vpop.f32.mrb[0].mxu0
        %v1229 = vpop.f32.mrb[0].mxu0
        %v1230 = vpop.f32.mrb[0].mxu0
        %1231 = vdwg.mxu0
        %v1232 = vmul.f32 %v1227, 0.35355338
        %s1233 = scalar_lea.vmem [#allocation2], 40
        %v1234 = vld [vmem:[%s1233] sm:$0xff]
        %1235 = vmax.xlane.f32.xlu0 %v1232
        %v1236 = vpop.xlane.xlu0 %1235
        %v1237 = vmax.f32 %v1234, %v1236
        %v1238 = vsub.f32 %v1234, %v1237
        %v1239 = vmul.f32 %v1238, 1.442695
        %v1240 = vpow.pop %v1239
        %1242 = vset.pattern.permute.xlu0 0
        %1243 = vperm.xlu0 %1242, %v1237
        %v1244 = vpop.permute.xlu0 %1243
        %v1246 = vsub.f32 %v1232, %v1244
        %v1247 = vmul.f32 %v1246, 1.442695
        %v1248 = vpow.pop %v1247
        %s1249 = scalar_lea.vmem [#allocation3], 40
        %v1250 = vld [vmem:[%s1249] sm:$0xff]
        %v1251 = vmul.f32 %v1240, %v1250
        %1252 = vadd.xlane.f32.xlu0 %v1248
        %v1253 = vpop.xlane.xlu0 %1252
        %v1254 = vadd.f32 %v1251, %v1253
        %1255 = vst.msk [vmem:[%s1249] sm:$0xff] %vm623, %v1254
        %v1256 = vpack.c.bf16 %v1248, %v1248
        %v1258 = vrot.slane %v551, 4
        %1260 = vmatprep.subr.bf16.mxu0 0
        %1261 = vmatpush1.bf16.xpose.msra.mxu0 %v1258
        %1262 = vmatprep.subr.bf16.mxu0 0
        %1263 = vmatpush1.bf16.xpose.msra.mxu0 0
        %1264 = vmatprep.subr.bf16.mxu0 0
        %1265 = vmatpush1.bf16.xpose.msra.mxu0 0
        %1266 = vmatprep.subr.bf16.mxu0 0
        %1267 = vmatpush1.bf16.xpose.msra.mxu0 0
        %1268 = vmatprep.subr.bf16.mxu0 0
        %1269 = vmatpush1.bf16.xpose.msra.mxu0 0
        %1270 = vmatprep.subr.bf16.mxu0 0
        %1271 = vmatpush1.bf16.xpose.msra.mxu0 0
        %1272 = vmatprep.subr.bf16.mxu0 0
        %1273 = vmatpush1.bf16.xpose.msra.mxu0 0
        %1274 = vmatprep.subr.bf16.mxu0 0
        %1275 = vmatpush1.bf16.xpose.msra.mxu0 0
        %1276 = vmatprep.subr.bf16.mxu0 0
        %1277 = vmatpush1.bf16.xpose.msra.mxu0 0
        %1278 = vmatprep.subr.bf16.mxu0 0
        %1279 = vmatpush1.bf16.xpose.msra.mxu0 0
        %1280 = vmatprep.subr.bf16.mxu0 0
        %1281 = vmatpush1.bf16.xpose.msra.mxu0 0
        %1282 = vmatprep.subr.bf16.mxu0 0
        %1283 = vmatpush1.bf16.xpose.msra.mxu0 0
        %1284 = vmatprep.subr.bf16.mxu0 0
        %1285 = vmatpush1.bf16.xpose.msra.mxu0 0
        %1286 = vmatprep.subr.bf16.mxu0 0
        %1287 = vmatpush1.bf16.xpose.msra.mxu0 0
        %1288 = vmatprep.subr.bf16.mxu0 0
        %1289 = vmatpush1.bf16.xpose.msra.mxu0 0
        %1290 = vmatprep.subr.bf16.mxu0 0
        %1291 = vmatpush1.bf16.xpose.msra.mxu0 0
        %1292 = vmatprep.mubr.bf16.mxu0 0
        %1293 = vmatmul.mubr.bf16.gmra.mrb[0].mxu0 %v1256
        %v1294 = vpop.f32.mrb[0].mxu0
        %v1295 = vadd.f32 0.0, %v1294
        %v1296 = vpop.f32.mrb[0].mxu0
        %v1297 = vpop.f32.mrb[0].mxu0
        %v1298 = vpop.f32.mrb[0].mxu0
        %1299 = vdwg.mxu0
        %s1300 = scalar_lea.vmem [#allocation4], 40
        %v1301 = vld [vmem:[%s1300] sm:$0xff]
        %1303 = vset.pattern.permute.xlu0 0
        %1304 = vperm.xlu0 %1303, %v1240
        %v1305 = vpop.permute.xlu0 %1304
        %v1307 = vmul.f32 %v1305, %v1301
        %v1308 = vadd.f32 %v1307, %v1295
        %1309 = vst.msk [vmem:[%s1300] sm:$0xff] %vm554, %v1308
        %1310 = vst.msk [vmem:[%s1233] sm:$0xff] %vm623, %v1237
        %s1311 = scalar_lea.vmem [#allocation8], 24
        %v1312 = vld [vmem:[%s1311] sm:$0xf]
        %v1314 = vsel %vm554, %v1312, 0
        %v1317 = vsel %vm558, %v548, 0
        %1319 = vmatprep.subr.bf16.mxu0 0
        %1320 = vmatpush1.bf16.msra.mxu0 %v1317
        %1321 = vmatprep.subr.bf16.mxu0 0
        %1322 = vmatpush1.bf16.msra.mxu0 0
        %1323 = vmatprep.subr.bf16.mxu0 0
        %1324 = vmatpush1.bf16.msra.mxu0 0
        %1325 = vmatprep.subr.bf16.mxu0 0
        %1326 = vmatpush1.bf16.msra.mxu0 0
        %1327 = vmatprep.subr.bf16.mxu0 0
        %1328 = vmatpush1.bf16.msra.mxu0 0
        %1329 = vmatprep.subr.bf16.mxu0 0
        %1330 = vmatpush1.bf16.msra.mxu0 0
        %1331 = vmatprep.subr.bf16.mxu0 0
        %1332 = vmatpush1.bf16.msra.mxu0 0
        %1333 = vmatprep.subr.bf16.mxu0 0
        %1334 = vmatpush1.bf16.msra.mxu0 0
        %1335 = vmatprep.subr.bf16.mxu0 0
        %1336 = vmatpush1.bf16.msra.mxu0 0
        %1337 = vmatprep.subr.bf16.mxu0 0
        %1338 = vmatpush1.bf16.msra.mxu0 0
        %1339 = vmatprep.subr.bf16.mxu0 0
        %1340 = vmatpush1.bf16.msra.mxu0 0
        %1341 = vmatprep.subr.bf16.mxu0 0
        %1342 = vmatpush1.bf16.msra.mxu0 0
        %1343 = vmatprep.subr.bf16.mxu0 0
        %1344 = vmatpush1.bf16.msra.mxu0 0
        %1345 = vmatprep.subr.bf16.mxu0 0
        %1346 = vmatpush1.bf16.msra.mxu0 0
        %1347 = vmatprep.subr.bf16.mxu0 0
        %1348 = vmatpush1.bf16.msra.mxu0 0
        %1349 = vmatprep.subr.bf16.mxu0 0
        %1350 = vmatpush1.bf16.msra.mxu0 0
        %1351 = vmatprep.mubr.bf16.mxu0 0
        %1352 = vmatmul.mubr.bf16.gmra.mrb[0].mxu0 %v1314
        %v1353 = vpop.f32.mrb[0].mxu0
        %v1354 = vadd.f32 0.0, %v1353
        %v1355 = vpop.f32.mrb[0].mxu0
        %v1356 = vpop.f32.mrb[0].mxu0
        %v1357 = vpop.f32.mrb[0].mxu0
        %1358 = vdwg.mxu0
        %v1359 = vmul.f32 %v1354, 0.35355338
        %s1360 = scalar_lea.vmem [#allocation2], 48
        %v1361 = vld [vmem:[%s1360] sm:$0xff]
        %1362 = vmax.xlane.f32.xlu0 %v1359
        %v1363 = vpop.xlane.xlu0 %1362
        %v1364 = vmax.f32 %v1361, %v1363
        %v1365 = vsub.f32 %v1361, %v1364
        %v1366 = vmul.f32 %v1365, 1.442695
        %v1367 = vpow.pop %v1366
        %1369 = vset.pattern.permute.xlu0 0
        %1370 = vperm.xlu0 %1369, %v1364
        %v1371 = vpop.permute.xlu0 %1370
        %v1373 = vsub.f32 %v1359, %v1371
        %v1374 = vmul.f32 %v1373, 1.442695
        %v1375 = vpow.pop %v1374
        %s1376 = scalar_lea.vmem [#allocation3], 48
        %v1377 = vld [vmem:[%s1376] sm:$0xff]
        %v1378 = vmul.f32 %v1367, %v1377
        %1379 = vadd.xlane.f32.xlu0 %v1375
        %v1380 = vpop.xlane.xlu0 %1379
        %v1381 = vadd.f32 %v1378, %v1380
        %1382 = vst.msk [vmem:[%s1376] sm:$0xff] %vm623, %v1381
        %v1383 = vpack.c.bf16 %v1375, %v1375
        %1384 = vmatprep.subr.bf16.mxu0 0
        %1385 = vmatpush1.bf16.xpose.msra.mxu0 %v552
        %1386 = vmatprep.subr.bf16.mxu0 0
        %1387 = vmatpush1.bf16.xpose.msra.mxu0 0
        %1388 = vmatprep.subr.bf16.mxu0 0
        %1389 = vmatpush1.bf16.xpose.msra.mxu0 0
        %1390 = vmatprep.subr.bf16.mxu0 0
        %1391 = vmatpush1.bf16.xpose.msra.mxu0 0
        %1392 = vmatprep.subr.bf16.mxu0 0
        %1393 = vmatpush1.bf16.xpose.msra.mxu0 0
        %1394 = vmatprep.subr.bf16.mxu0 0
        %1395 = vmatpush1.bf16.xpose.msra.mxu0 0
        %1396 = vmatprep.subr.bf16.mxu0 0
        %1397 = vmatpush1.bf16.xpose.msra.mxu0 0
        %1398 = vmatprep.subr.bf16.mxu0 0
        %1399 = vmatpush1.bf16.xpose.msra.mxu0 0
        %1400 = vmatprep.subr.bf16.mxu0 0
        %1401 = vmatpush1.bf16.xpose.msra.mxu0 0
        %1402 = vmatprep.subr.bf16.mxu0 0
        %1403 = vmatpush1.bf16.xpose.msra.mxu0 0
        %1404 = vmatprep.subr.bf16.mxu0 0
        %1405 = vmatpush1.bf16.xpose.msra.mxu0 0
        %1406 = vmatprep.subr.bf16.mxu0 0
        %1407 = vmatpush1.bf16.xpose.msra.mxu0 0
        %1408 = vmatprep.subr.bf16.mxu0 0
        %1409 = vmatpush1.bf16.xpose.msra.mxu0 0
        %1410 = vmatprep.subr.bf16.mxu0 0
        %1411 = vmatpush1.bf16.xpose.msra.mxu0 0
        %1412 = vmatprep.subr.bf16.mxu0 0
        %1413 = vmatpush1.bf16.xpose.msra.mxu0 0
        %1414 = vmatprep.subr.bf16.mxu0 0
        %1415 = vmatpush1.bf16.xpose.msra.mxu0 0
        %1416 = vmatprep.mubr.bf16.mxu0 0
        %1417 = vmatmul.mubr.bf16.gmra.mrb[0].mxu0 %v1383
        %v1418 = vpop.f32.mrb[0].mxu0
        %v1419 = vadd.f32 0.0, %v1418
        %v1420 = vpop.f32.mrb[0].mxu0
        %v1421 = vpop.f32.mrb[0].mxu0
        %v1422 = vpop.f32.mrb[0].mxu0
        %1423 = vdwg.mxu0
        %s1424 = scalar_lea.vmem [#allocation4], 48
        %v1425 = vld [vmem:[%s1424] sm:$0xff]
        %1427 = vset.pattern.permute.xlu0 0
        %1428 = vperm.xlu0 %1427, %v1367
        %v1429 = vpop.permute.xlu0 %1428
        %v1431 = vmul.f32 %v1429, %v1425
        %v1432 = vadd.f32 %v1431, %v1419
        %1433 = vst.msk [vmem:[%s1424] sm:$0xff] %vm554, %v1432
        %1434 = vst.msk [vmem:[%s1360] sm:$0xff] %vm623, %v1364
        %s1435 = scalar_lea.vmem [#allocation8], 28
        %v1436 = vld [vmem:[%s1435] sm:$0xf]
        %v1438 = vrot.slane %v548, 4
        %v1440 = vsel %vm554, %v1436, 0
        %v1443 = vsel %vm558, %v1438, 0
        %1445 = vmatprep.subr.bf16.mxu0 0
        %1446 = vmatpush1.bf16.msra.mxu0 %v1443
        %1447 = vmatprep.subr.bf16.mxu0 0
        %1448 = vmatpush1.bf16.msra.mxu0 0
        %1449 = vmatprep.subr.bf16.mxu0 0
        %1450 = vmatpush1.bf16.msra.mxu0 0
        %1451 = vmatprep.subr.bf16.mxu0 0
        %1452 = vmatpush1.bf16.msra.mxu0 0
        %1453 = vmatprep.subr.bf16.mxu0 0
        %1454 = vmatpush1.bf16.msra.mxu0 0
        %1455 = vmatprep.subr.bf16.mxu0 0
        %1456 = vmatpush1.bf16.msra.mxu0 0
        %1457 = vmatprep.subr.bf16.mxu0 0
        %1458 = vmatpush1.bf16.msra.mxu0 0
        %1459 = vmatprep.subr.bf16.mxu0 0
        %1460 = vmatpush1.bf16.msra.mxu0 0
        %1461 = vmatprep.subr.bf16.mxu0 0
        %1462 = vmatpush1.bf16.msra.mxu0 0
        %1463 = vmatprep.subr.bf16.mxu0 0
        %1464 = vmatpush1.bf16.msra.mxu0 0
        %1465 = vmatprep.subr.bf16.mxu0 0
        %1466 = vmatpush1.bf16.msra.mxu0 0
        %1467 = vmatprep.subr.bf16.mxu0 0
        %1468 = vmatpush1.bf16.msra.mxu0 0
        %1469 = vmatprep.subr.bf16.mxu0 0
        %1470 = vmatpush1.bf16.msra.mxu0 0
        %1471 = vmatprep.subr.bf16.mxu0 0
        %1472 = vmatpush1.bf16.msra.mxu0 0
        %1473 = vmatprep.subr.bf16.mxu0 0
        %1474 = vmatpush1.bf16.msra.mxu0 0
        %1475 = vmatprep.subr.bf16.mxu0 0
        %1476 = vmatpush1.bf16.msra.mxu0 0
        %1477 = vmatprep.mubr.bf16.mxu0 0
        %1478 = vmatmul.mubr.bf16.gmra.mrb[0].mxu0 %v1440
        %v1479 = vpop.f32.mrb[0].mxu0
        %v1480 = vadd.f32 0.0, %v1479
        %v1481 = vpop.f32.mrb[0].mxu0
        %v1482 = vpop.f32.mrb[0].mxu0
        %v1483 = vpop.f32.mrb[0].mxu0
        %1484 = vdwg.mxu0
        %v1485 = vmul.f32 %v1480, 0.35355338
        %s1486 = scalar_lea.vmem [#allocation2], 56
        %v1487 = vld [vmem:[%s1486] sm:$0xff]
        %1488 = vmax.xlane.f32.xlu0 %v1485
        %v1489 = vpop.xlane.xlu0 %1488
        %v1490 = vmax.f32 %v1487, %v1489
        %v1491 = vsub.f32 %v1487, %v1490
        %v1492 = vmul.f32 %v1491, 1.442695
        %v1493 = vpow.pop %v1492
        %1495 = vset.pattern.permute.xlu0 0
        %1496 = vperm.xlu0 %1495, %v1490
        %v1497 = vpop.permute.xlu0 %1496
        %v1499 = vsub.f32 %v1485, %v1497
        %v1500 = vmul.f32 %v1499, 1.442695
        %v1501 = vpow.pop %v1500
        %s1502 = scalar_lea.vmem [#allocation3], 56
        %v1503 = vld [vmem:[%s1502] sm:$0xff]
        %v1504 = vmul.f32 %v1493, %v1503
        %1505 = vadd.xlane.f32.xlu0 %v1501
        %v1506 = vpop.xlane.xlu0 %1505
        %v1507 = vadd.f32 %v1504, %v1506
        %1508 = vst.msk [vmem:[%s1502] sm:$0xff] %vm623, %v1507
        %v1509 = vpack.c.bf16 %v1501, %v1501
        %v1511 = vrot.slane %v552, 4
        %1513 = vmatprep.subr.bf16.mxu0 0
        %1514 = vmatpush1.bf16.xpose.msra.mxu0 %v1511
        %1515 = vmatprep.subr.bf16.mxu0 0
        %1516 = vmatpush1.bf16.xpose.msra.mxu0 0
        %1517 = vmatprep.subr.bf16.mxu0 0
        %1518 = vmatpush1.bf16.xpose.msra.mxu0 0
        %1519 = vmatprep.subr.bf16.mxu0 0
        %1520 = vmatpush1.bf16.xpose.msra.mxu0 0
        %1521 = vmatprep.subr.bf16.mxu0 0
        %1522 = vmatpush1.bf16.xpose.msra.mxu0 0
        %1523 = vmatprep.subr.bf16.mxu0 0
        %1524 = vmatpush1.bf16.xpose.msra.mxu0 0
        %1525 = vmatprep.subr.bf16.mxu0 0
        %1526 = vmatpush1.bf16.xpose.msra.mxu0 0
        %1527 = vmatprep.subr.bf16.mxu0 0
        %1528 = vmatpush1.bf16.xpose.msra.mxu0 0
        %1529 = vmatprep.subr.bf16.mxu0 0
        %1530 = vmatpush1.bf16.xpose.msra.mxu0 0
        %1531 = vmatprep.subr.bf16.mxu0 0
        %1532 = vmatpush1.bf16.xpose.msra.mxu0 0
        %1533 = vmatprep.subr.bf16.mxu0 0
        %1534 = vmatpush1.bf16.xpose.msra.mxu0 0
        %1535 = vmatprep.subr.bf16.mxu0 0
        %1536 = vmatpush1.bf16.xpose.msra.mxu0 0
        %1537 = vmatprep.subr.bf16.mxu0 0
        %1538 = vmatpush1.bf16.xpose.msra.mxu0 0
        %1539 = vmatprep.subr.bf16.mxu0 0
        %1540 = vmatpush1.bf16.xpose.msra.mxu0 0
        %1541 = vmatprep.subr.bf16.mxu0 0
        %1542 = vmatpush1.bf16.xpose.msra.mxu0 0
        %1543 = vmatprep.subr.bf16.mxu0 0
        %1544 = vmatpush1.bf16.xpose.msra.mxu0 0
        %1545 = vmatprep.mubr.bf16.mxu0 0
        %1546 = vmatmul.mubr.bf16.gmra.mrb[0].mxu0 %v1509
        %v1547 = vpop.f32.mrb[0].mxu0
        %v1548 = vadd.f32 0.0, %v1547
        %v1549 = vpop.f32.mrb[0].mxu0
        %v1550 = vpop.f32.mrb[0].mxu0
        %v1551 = vpop.f32.mrb[0].mxu0
        %1552 = vdwg.mxu0
        %s1553 = scalar_lea.vmem [#allocation4], 56
        %v1554 = vld [vmem:[%s1553] sm:$0xff]
        %1556 = vset.pattern.permute.xlu0 0
        %1557 = vperm.xlu0 %1556, %v1493
        %v1558 = vpop.permute.xlu0 %1557
        %v1560 = vmul.f32 %v1558, %v1554
        %v1561 = vadd.f32 %v1560, %v1548
        %1562 = vst.msk [vmem:[%s1553] sm:$0xff] %vm554, %v1561
        %1563 = vst.msk [vmem:[%s1486] sm:$0xff] %vm623, %v1490
        %p1564 = scmp.eq.s32.totalorder %s27, 1
        // Predicated region
        $region65: #{tpu_custom_call.1} parent=39 // pred_check
          %p1565 = pneg %p1564
        $region66: #{tpu_custom_call.1} parent=39 // pred_check_branch
          %1567 = sbr.rel (%p1565) target = $region68
        $region67: #{tpu_custom_call.1} parent=39 // pred_region
          %v1568 = vld [vmem:[#allocation3] sm:$0xff]
          %v1569 = vrcp.pop %v1568
          %v1570 = vld [vmem:[#allocation4] sm:$0xff]
          %1572 = vset.pattern.permute.xlu0 0
          %1573 = vperm.xlu0 %1572, %v1569
          %v1574 = vpop.permute.xlu0 %1573
          %v1576 = vmul.f32 %v1570, %v1574
          %v1577 = vpack.c.bf16 %v1576, %v1576
          %v1578 = vld [vmem:[#allocation12] sm:$0xf]
          %v1579 = vld [vmem:[%s743] sm:$0xff]
          %v1580 = vrcp.pop %v1579
          %v1581 = vld [vmem:[%s794] sm:$0xff]
          %1583 = vset.pattern.permute.xlu0 0
          %1584 = vperm.xlu0 %1583, %v1580
          %v1585 = vpop.permute.xlu0 %1584
          %v1587 = vmul.f32 %v1581, %v1585
          %v1588 = vpack.c.bf16 %v1587, %v1587
          %s1589 = scalar_lea.vmem [#allocation12], 4
          %v1590 = vld [vmem:[%s1589] sm:$0xf]
          %v1592 = vsel %vm554, %v1588, 0
          %v1595 = vsel %vm558, %v1590, 0
          %1597 = vmatprep.subr.bf16.mxu0 0
          %1598 = vmatpush1.bf16.msra.mxu0 %v1595
          %1599 = vmatprep.subr.bf16.mxu0 0
          %1600 = vmatpush1.bf16.msra.mxu0 0
          %1601 = vmatprep.subr.bf16.mxu0 0
          %1602 = vmatpush1.bf16.msra.mxu0 0
          %1603 = vmatprep.subr.bf16.mxu0 0
          %1604 = vmatpush1.bf16.msra.mxu0 0
          %1605 = vmatprep.subr.bf16.mxu0 0
          %1606 = vmatpush1.bf16.msra.mxu0 0
          %1607 = vmatprep.subr.bf16.mxu0 0
          %1608 = vmatpush1.bf16.msra.mxu0 0
          %1609 = vmatprep.subr.bf16.mxu0 0
          %1610 = vmatpush1.bf16.msra.mxu0 0
          %1611 = vmatprep.subr.bf16.mxu0 0
          %1612 = vmatpush1.bf16.msra.mxu0 0
          %1613 = vmatprep.subr.bf16.mxu0 0
          %1614 = vmatpush1.bf16.msra.mxu0 0
          %1615 = vmatprep.subr.bf16.mxu0 0
          %1616 = vmatpush1.bf16.msra.mxu0 0
          %1617 = vmatprep.subr.bf16.mxu0 0
          %1618 = vmatpush1.bf16.msra.mxu0 0
          %1619 = vmatprep.subr.bf16.mxu0 0
          %1620 = vmatpush1.bf16.msra.mxu0 0
          %1621 = vmatprep.subr.bf16.mxu0 0
          %1622 = vmatpush1.bf16.msra.mxu0 0
          %1623 = vmatprep.subr.bf16.mxu0 0
          %1624 = vmatpush1.bf16.msra.mxu0 0
          %1625 = vmatprep.subr.bf16.mxu0 0
          %1626 = vmatpush1.bf16.msra.mxu0 0
          %1627 = vmatprep.subr.bf16.mxu0 0
          %1628 = vmatpush1.bf16.msra.mxu0 0
          %1629 = vmatprep.mubr.bf16.mxu0 0
          %1630 = vmatmul.mubr.bf16.gmra.mrb[0].mxu0 %v1592
          %v1631 = vpop.f32.mrb[0].mxu0
          %v1632 = vadd.f32 0.0, %v1631
          %v1633 = vpop.f32.mrb[0].mxu0
          %v1634 = vpop.f32.mrb[0].mxu0
          %v1635 = vpop.f32.mrb[0].mxu0
          %1636 = vdwg.mxu0
          %v1638 = vsel %vm554, %v1577, 0
          %v1641 = vsel %vm558, %v1578, 0
          %1643 = vmatprep.subr.bf16.mxu0 0
          %1644 = vmatpush1.bf16.msra.mxu0 %v1641
          %1645 = vmatprep.subr.bf16.mxu0 0
          %1646 = vmatpush1.bf16.msra.mxu0 0
          %1647 = vmatprep.subr.bf16.mxu0 0
          %1648 = vmatpush1.bf16.msra.mxu0 0
          %1649 = vmatprep.subr.bf16.mxu0 0
          %1650 = vmatpush1.bf16.msra.mxu0 0
          %1651 = vmatprep.subr.bf16.mxu0 0
          %1652 = vmatpush1.bf16.msra.mxu0 0
          %1653 = vmatprep.subr.bf16.mxu0 0
          %1654 = vmatpush1.bf16.msra.mxu0 0
          %1655 = vmatprep.subr.bf16.mxu0 0
          %1656 = vmatpush1.bf16.msra.mxu0 0
          %1657 = vmatprep.subr.bf16.mxu0 0
          %1658 = vmatpush1.bf16.msra.mxu0 0
          %1659 = vmatprep.subr.bf16.mxu0 0
          %1660 = vmatpush1.bf16.msra.mxu0 0
          %1661 = vmatprep.subr.bf16.mxu0 0
          %1662 = vmatpush1.bf16.msra.mxu0 0
          %1663 = vmatprep.subr.bf16.mxu0 0
          %1664 = vmatpush1.bf16.msra.mxu0 0
          %1665 = vmatprep.subr.bf16.mxu0 0
          %1666 = vmatpush1.bf16.msra.mxu0 0
          %1667 = vmatprep.subr.bf16.mxu0 0
          %1668 = vmatpush1.bf16.msra.mxu0 0
          %1669 = vmatprep.subr.bf16.mxu0 0
          %1670 = vmatpush1.bf16.msra.mxu0 0
          %1671 = vmatprep.subr.bf16.mxu0 0
          %1672 = vmatpush1.bf16.msra.mxu0 0
          %1673 = vmatprep.subr.bf16.mxu0 0
          %1674 = vmatpush1.bf16.msra.mxu0 0
          %1675 = vmatprep.mubr.bf16.mxu0 0
          %1676 = vmatmul.mubr.bf16.gmra.mrb[0].mxu0 %v1638
          %v1677 = vpop.f32.mrb[0].mxu0
          %v1678 = vadd.f32 %v1632, %v1677
          %v1679 = vpop.f32.mrb[0].mxu0
          %v1680 = vpop.f32.mrb[0].mxu0
          %v1681 = vpop.f32.mrb[0].mxu0
          %1682 = vdwg.mxu0
          %v1683 = vld [vmem:[%s870] sm:$0xff]
          %v1684 = vrcp.pop %v1683
          %v1685 = vld [vmem:[%s918] sm:$0xff]
          %1687 = vset.pattern.permute.xlu0 0
          %1688 = vperm.xlu0 %1687, %v1684
          %v1689 = vpop.permute.xlu0 %1688
          %v1691 = vmul.f32 %v1685, %v1689
          %v1692 = vpack.c.bf16 %v1691, %v1691
          %s1693 = scalar_lea.vmem [#allocation12], 8
          %v1694 = vld [vmem:[%s1693] sm:$0xf]
          %v1696 = vsel %vm554, %v1692, 0
          %v1699 = vsel %vm558, %v1694, 0
          %1701 = vmatprep.subr.bf16.mxu0 0
          %1702 = vmatpush1.bf16.msra.mxu0 %v1699
          %1703 = vmatprep.subr.bf16.mxu0 0
          %1704 = vmatpush1.bf16.msra.mxu0 0
          %1705 = vmatprep.subr.bf16.mxu0 0
          %1706 = vmatpush1.bf16.msra.mxu0 0
          %1707 = vmatprep.subr.bf16.mxu0 0
          %1708 = vmatpush1.bf16.msra.mxu0 0
          %1709 = vmatprep.subr.bf16.mxu0 0
          %1710 = vmatpush1.bf16.msra.mxu0 0
          %1711 = vmatprep.subr.bf16.mxu0 0
          %1712 = vmatpush1.bf16.msra.mxu0 0
          %1713 = vmatprep.subr.bf16.mxu0 0
          %1714 = vmatpush1.bf16.msra.mxu0 0
          %1715 = vmatprep.subr.bf16.mxu0 0
          %1716 = vmatpush1.bf16.msra.mxu0 0
          %1717 = vmatprep.subr.bf16.mxu0 0
          %1718 = vmatpush1.bf16.msra.mxu0 0
          %1719 = vmatprep.subr.bf16.mxu0 0
          %1720 = vmatpush1.bf16.msra.mxu0 0
          %1721 = vmatprep.subr.bf16.mxu0 0
          %1722 = vmatpush1.bf16.msra.mxu0 0
          %1723 = vmatprep.subr.bf16.mxu0 0
          %1724 = vmatpush1.bf16.msra.mxu0 0
          %1725 = vmatprep.subr.bf16.mxu0 0
          %1726 = vmatpush1.bf16.msra.mxu0 0
          %1727 = vmatprep.subr.bf16.mxu0 0
          %1728 = vmatpush1.bf16.msra.mxu0 0
          %1729 = vmatprep.subr.bf16.mxu0 0
          %1730 = vmatpush1.bf16.msra.mxu0 0
          %1731 = vmatprep.subr.bf16.mxu0 0
          %1732 = vmatpush1.bf16.msra.mxu0 0
          %1733 = vmatprep.mubr.bf16.mxu0 0
          %1734 = vmatmul.mubr.bf16.gmra.mrb[0].mxu0 %v1696
          %v1735 = vpop.f32.mrb[0].mxu0
          %v1736 = vadd.f32 0.0, %v1735
          %v1737 = vpop.f32.mrb[0].mxu0
          %v1738 = vpop.f32.mrb[0].mxu0
          %v1739 = vpop.f32.mrb[0].mxu0
          %1740 = vdwg.mxu0
          %v1741 = vadd.f32 %v1678, %v1736
          %v1742 = vld [vmem:[%s996] sm:$0xff]
          %v1743 = vrcp.pop %v1742
          %v1744 = vld [vmem:[%s1047] sm:$0xff]
          %1746 = vset.pattern.permute.xlu0 0
          %1747 = vperm.xlu0 %1746, %v1743
          %v1748 = vpop.permute.xlu0 %1747
          %v1750 = vmul.f32 %v1744, %v1748
          %v1751 = vpack.c.bf16 %v1750, %v1750
          %s1752 = scalar_lea.vmem [#allocation12], 12
          %v1753 = vld [vmem:[%s1752] sm:$0xf]
          %v1755 = vsel %vm554, %v1751, 0
          %v1758 = vsel %vm558, %v1753, 0
          %1760 = vmatprep.subr.bf16.mxu0 0
          %1761 = vmatpush1.bf16.msra.mxu0 %v1758
          %1762 = vmatprep.subr.bf16.mxu0 0
          %1763 = vmatpush1.bf16.msra.mxu0 0
          %1764 = vmatprep.subr.bf16.mxu0 0
          %1765 = vmatpush1.bf16.msra.mxu0 0
          %1766 = vmatprep.subr.bf16.mxu0 0
          %1767 = vmatpush1.bf16.msra.mxu0 0
          %1768 = vmatprep.subr.bf16.mxu0 0
          %1769 = vmatpush1.bf16.msra.mxu0 0
          %1770 = vmatprep.subr.bf16.mxu0 0
          %1771 = vmatpush1.bf16.msra.mxu0 0
          %1772 = vmatprep.subr.bf16.mxu0 0
          %1773 = vmatpush1.bf16.msra.mxu0 0
          %1774 = vmatprep.subr.bf16.mxu0 0
          %1775 = vmatpush1.bf16.msra.mxu0 0
          %1776 = vmatprep.subr.bf16.mxu0 0
          %1777 = vmatpush1.bf16.msra.mxu0 0
          %1778 = vmatprep.subr.bf16.mxu0 0
          %1779 = vmatpush1.bf16.msra.mxu0 0
          %1780 = vmatprep.subr.bf16.mxu0 0
          %1781 = vmatpush1.bf16.msra.mxu0 0
          %1782 = vmatprep.subr.bf16.mxu0 0
          %1783 = vmatpush1.bf16.msra.mxu0 0
          %1784 = vmatprep.subr.bf16.mxu0 0
          %1785 = vmatpush1.bf16.msra.mxu0 0
          %1786 = vmatprep.subr.bf16.mxu0 0
          %1787 = vmatpush1.bf16.msra.mxu0 0
          %1788 = vmatprep.subr.bf16.mxu0 0
          %1789 = vmatpush1.bf16.msra.mxu0 0
          %1790 = vmatprep.subr.bf16.mxu0 0
          %1791 = vmatpush1.bf16.msra.mxu0 0
          %1792 = vmatprep.mubr.bf16.mxu0 0
          %1793 = vmatmul.mubr.bf16.gmra.mrb[0].mxu0 %v1755
          %v1794 = vpop.f32.mrb[0].mxu0
          %v1795 = vadd.f32 0.0, %v1794
          %v1796 = vpop.f32.mrb[0].mxu0
          %v1797 = vpop.f32.mrb[0].mxu0
          %v1798 = vpop.f32.mrb[0].mxu0
          %1799 = vdwg.mxu0
          %v1800 = vadd.f32 %v1741, %v1795
          %v1801 = vld [vmem:[%s1123] sm:$0xff]
          %v1802 = vrcp.pop %v1801
          %v1803 = vld [vmem:[%s1171] sm:$0xff]
          %1805 = vset.pattern.permute.xlu0 0
          %1806 = vperm.xlu0 %1805, %v1802
          %v1807 = vpop.permute.xlu0 %1806
          %v1809 = vmul.f32 %v1803, %v1807
          %v1810 = vpack.c.bf16 %v1809, %v1809
          %s1811 = scalar_lea.vmem [#allocation12], 16
          %v1812 = vld [vmem:[%s1811] sm:$0xf]
          %v1814 = vsel %vm554, %v1810, 0
          %v1817 = vsel %vm558, %v1812, 0
          %1819 = vmatprep.subr.bf16.mxu0 0
          %1820 = vmatpush1.bf16.msra.mxu0 %v1817
          %1821 = vmatprep.subr.bf16.mxu0 0
          %1822 = vmatpush1.bf16.msra.mxu0 0
          %1823 = vmatprep.subr.bf16.mxu0 0
          %1824 = vmatpush1.bf16.msra.mxu0 0
          %1825 = vmatprep.subr.bf16.mxu0 0
          %1826 = vmatpush1.bf16.msra.mxu0 0
          %1827 = vmatprep.subr.bf16.mxu0 0
          %1828 = vmatpush1.bf16.msra.mxu0 0
          %1829 = vmatprep.subr.bf16.mxu0 0
          %1830 = vmatpush1.bf16.msra.mxu0 0
          %1831 = vmatprep.subr.bf16.mxu0 0
          %1832 = vmatpush1.bf16.msra.mxu0 0
          %1833 = vmatprep.subr.bf16.mxu0 0
          %1834 = vmatpush1.bf16.msra.mxu0 0
          %1835 = vmatprep.subr.bf16.mxu0 0
          %1836 = vmatpush1.bf16.msra.mxu0 0
          %1837 = vmatprep.subr.bf16.mxu0 0
          %1838 = vmatpush1.bf16.msra.mxu0 0
          %1839 = vmatprep.subr.bf16.mxu0 0
          %1840 = vmatpush1.bf16.msra.mxu0 0
          %1841 = vmatprep.subr.bf16.mxu0 0
          %1842 = vmatpush1.bf16.msra.mxu0 0
          %1843 = vmatprep.subr.bf16.mxu0 0
          %1844 = vmatpush1.bf16.msra.mxu0 0
          %1845 = vmatprep.subr.bf16.mxu0 0
          %1846 = vmatpush1.bf16.msra.mxu0 0
          %1847 = vmatprep.subr.bf16.mxu0 0
          %1848 = vmatpush1.bf16.msra.mxu0 0
          %1849 = vmatprep.subr.bf16.mxu0 0
          %1850 = vmatpush1.bf16.msra.mxu0 0
          %1851 = vmatprep.mubr.bf16.mxu0 0
          %1852 = vmatmul.mubr.bf16.gmra.mrb[0].mxu0 %v1814
          %v1853 = vpop.f32.mrb[0].mxu0
          %v1854 = vadd.f32 0.0, %v1853
          %v1855 = vpop.f32.mrb[0].mxu0
          %v1856 = vpop.f32.mrb[0].mxu0
          %v1857 = vpop.f32.mrb[0].mxu0
          %1858 = vdwg.mxu0
          %v1859 = vadd.f32 %v1800, %v1854
          %v1860 = vld [vmem:[%s1249] sm:$0xff]
          %v1861 = vrcp.pop %v1860
          %v1862 = vld [vmem:[%s1300] sm:$0xff]
          %1864 = vset.pattern.permute.xlu0 0
          %1865 = vperm.xlu0 %1864, %v1861
          %v1866 = vpop.permute.xlu0 %1865
          %v1868 = vmul.f32 %v1862, %v1866
          %v1869 = vpack.c.bf16 %v1868, %v1868
          %s1870 = scalar_lea.vmem [#allocation12], 20
          %v1871 = vld [vmem:[%s1870] sm:$0xf]
          %v1873 = vsel %vm554, %v1869, 0
          %v1876 = vsel %vm558, %v1871, 0
          %1878 = vmatprep.subr.bf16.mxu0 0
          %1879 = vmatpush1.bf16.msra.mxu0 %v1876
          %1880 = vmatprep.subr.bf16.mxu0 0
          %1881 = vmatpush1.bf16.msra.mxu0 0
          %1882 = vmatprep.subr.bf16.mxu0 0
          %1883 = vmatpush1.bf16.msra.mxu0 0
          %1884 = vmatprep.subr.bf16.mxu0 0
          %1885 = vmatpush1.bf16.msra.mxu0 0
          %1886 = vmatprep.subr.bf16.mxu0 0
          %1887 = vmatpush1.bf16.msra.mxu0 0
          %1888 = vmatprep.subr.bf16.mxu0 0
          %1889 = vmatpush1.bf16.msra.mxu0 0
          %1890 = vmatprep.subr.bf16.mxu0 0
          %1891 = vmatpush1.bf16.msra.mxu0 0
          %1892 = vmatprep.subr.bf16.mxu0 0
          %1893 = vmatpush1.bf16.msra.mxu0 0
          %1894 = vmatprep.subr.bf16.mxu0 0
          %1895 = vmatpush1.bf16.msra.mxu0 0
          %1896 = vmatprep.subr.bf16.mxu0 0
          %1897 = vmatpush1.bf16.msra.mxu0 0
          %1898 = vmatprep.subr.bf16.mxu0 0
          %1899 = vmatpush1.bf16.msra.mxu0 0
          %1900 = vmatprep.subr.bf16.mxu0 0
          %1901 = vmatpush1.bf16.msra.mxu0 0
          %1902 = vmatprep.subr.bf16.mxu0 0
          %1903 = vmatpush1.bf16.msra.mxu0 0
          %1904 = vmatprep.subr.bf16.mxu0 0
          %1905 = vmatpush1.bf16.msra.mxu0 0
          %1906 = vmatprep.subr.bf16.mxu0 0
          %1907 = vmatpush1.bf16.msra.mxu0 0
          %1908 = vmatprep.subr.bf16.mxu0 0
          %1909 = vmatpush1.bf16.msra.mxu0 0
          %1910 = vmatprep.mubr.bf16.mxu0 0
          %1911 = vmatmul.mubr.bf16.gmra.mrb[0].mxu0 %v1873
          %v1912 = vpop.f32.mrb[0].mxu0
          %v1913 = vadd.f32 0.0, %v1912
          %v1914 = vpop.f32.mrb[0].mxu0
          %v1915 = vpop.f32.mrb[0].mxu0
          %v1916 = vpop.f32.mrb[0].mxu0
          %1917 = vdwg.mxu0
          %v1918 = vadd.f32 %v1859, %v1913
          %v1919 = vld [vmem:[%s1376] sm:$0xff]
          %v1920 = vrcp.pop %v1919
          %v1921 = vld [vmem:[%s1424] sm:$0xff]
          %1923 = vset.pattern.permute.xlu0 0
          %1924 = vperm.xlu0 %1923, %v1920
          %v1925 = vpop.permute.xlu0 %1924
          %v1927 = vmul.f32 %v1921, %v1925
          %v1928 = vpack.c.bf16 %v1927, %v1927
          %s1929 = scalar_lea.vmem [#allocation12], 24
          %v1930 = vld [vmem:[%s1929] sm:$0xf]
          %v1932 = vsel %vm554, %v1928, 0
          %v1935 = vsel %vm558, %v1930, 0
          %1937 = vmatprep.subr.bf16.mxu0 0
          %1938 = vmatpush1.bf16.msra.mxu0 %v1935
          %1939 = vmatprep.subr.bf16.mxu0 0
          %1940 = vmatpush1.bf16.msra.mxu0 0
          %1941 = vmatprep.subr.bf16.mxu0 0
          %1942 = vmatpush1.bf16.msra.mxu0 0
          %1943 = vmatprep.subr.bf16.mxu0 0
          %1944 = vmatpush1.bf16.msra.mxu0 0
          %1945 = vmatprep.subr.bf16.mxu0 0
          %1946 = vmatpush1.bf16.msra.mxu0 0
          %1947 = vmatprep.subr.bf16.mxu0 0
          %1948 = vmatpush1.bf16.msra.mxu0 0
          %1949 = vmatprep.subr.bf16.mxu0 0
          %1950 = vmatpush1.bf16.msra.mxu0 0
          %1951 = vmatprep.subr.bf16.mxu0 0
          %1952 = vmatpush1.bf16.msra.mxu0 0
          %1953 = vmatprep.subr.bf16.mxu0 0
          %1954 = vmatpush1.bf16.msra.mxu0 0
          %1955 = vmatprep.subr.bf16.mxu0 0
          %1956 = vmatpush1.bf16.msra.mxu0 0
          %1957 = vmatprep.subr.bf16.mxu0 0
          %1958 = vmatpush1.bf16.msra.mxu0 0
          %1959 = vmatprep.subr.bf16.mxu0 0
          %1960 = vmatpush1.bf16.msra.mxu0 0
          %1961 = vmatprep.subr.bf16.mxu0 0
          %1962 = vmatpush1.bf16.msra.mxu0 0
          %1963 = vmatprep.subr.bf16.mxu0 0
          %1964 = vmatpush1.bf16.msra.mxu0 0
          %1965 = vmatprep.subr.bf16.mxu0 0
          %1966 = vmatpush1.bf16.msra.mxu0 0
          %1967 = vmatprep.subr.bf16.mxu0 0
          %1968 = vmatpush1.bf16.msra.mxu0 0
          %1969 = vmatprep.mubr.bf16.mxu0 0
          %1970 = vmatmul.mubr.bf16.gmra.mrb[0].mxu0 %v1932
          %v1971 = vpop.f32.mrb[0].mxu0
          %v1972 = vadd.f32 0.0, %v1971
          %v1973 = vpop.f32.mrb[0].mxu0
          %v1974 = vpop.f32.mrb[0].mxu0
          %v1975 = vpop.f32.mrb[0].mxu0
          %1976 = vdwg.mxu0
          %v1977 = vadd.f32 %v1918, %v1972
          %v1978 = vld [vmem:[%s1502] sm:$0xff]
          %v1979 = vrcp.pop %v1978
          %v1980 = vld [vmem:[%s1553] sm:$0xff]
          %1982 = vset.pattern.permute.xlu0 0
          %1983 = vperm.xlu0 %1982, %v1979
          %v1984 = vpop.permute.xlu0 %1983
          %v1986 = vmul.f32 %v1980, %v1984
          %v1987 = vpack.c.bf16 %v1986, %v1986
          %s1988 = scalar_lea.vmem [#allocation12], 28
          %v1989 = vld [vmem:[%s1988] sm:$0xf]
          %v1991 = vsel %vm554, %v1987, 0
          %v1994 = vsel %vm558, %v1989, 0
          %1996 = vmatprep.subr.bf16.mxu0 0
          %1997 = vmatpush1.bf16.msra.mxu0 %v1994
          %1998 = vmatprep.subr.bf16.mxu0 0
          %1999 = vmatpush1.bf16.msra.mxu0 0
          %2000 = vmatprep.subr.bf16.mxu0 0
          %2001 = vmatpush1.bf16.msra.mxu0 0
          %2002 = vmatprep.subr.bf16.mxu0 0
          %2003 = vmatpush1.bf16.msra.mxu0 0
          %2004 = vmatprep.subr.bf16.mxu0 0
          %2005 = vmatpush1.bf16.msra.mxu0 0
          %2006 = vmatprep.subr.bf16.mxu0 0
          %2007 = vmatpush1.bf16.msra.mxu0 0
          %2008 = vmatprep.subr.bf16.mxu0 0
          %2009 = vmatpush1.bf16.msra.mxu0 0
          %2010 = vmatprep.subr.bf16.mxu0 0
          %2011 = vmatpush1.bf16.msra.mxu0 0
          %2012 = vmatprep.subr.bf16.mxu0 0
          %2013 = vmatpush1.bf16.msra.mxu0 0
          %2014 = vmatprep.subr.bf16.mxu0 0
          %2015 = vmatpush1.bf16.msra.mxu0 0
          %2016 = vmatprep.subr.bf16.mxu0 0
          %2017 = vmatpush1.bf16.msra.mxu0 0
          %2018 = vmatprep.subr.bf16.mxu0 0
          %2019 = vmatpush1.bf16.msra.mxu0 0
          %2020 = vmatprep.subr.bf16.mxu0 0
          %2021 = vmatpush1.bf16.msra.mxu0 0
          %2022 = vmatprep.subr.bf16.mxu0 0
          %2023 = vmatpush1.bf16.msra.mxu0 0
          %2024 = vmatprep.subr.bf16.mxu0 0
          %2025 = vmatpush1.bf16.msra.mxu0 0
          %2026 = vmatprep.subr.bf16.mxu0 0
          %2027 = vmatpush1.bf16.msra.mxu0 0
          %2028 = vmatprep.mubr.bf16.mxu0 0
          %2029 = vmatmul.mubr.bf16.gmra.mrb[0].mxu0 %v1991
          %v2030 = vpop.f32.mrb[0].mxu0
          %v2031 = vadd.f32 0.0, %v2030
          %v2032 = vpop.f32.mrb[0].mxu0
          %v2033 = vpop.f32.mrb[0].mxu0
          %v2034 = vpop.f32.mrb[0].mxu0
          %2035 = vdwg.mxu0
          %v2036 = vadd.f32 %v1977, %v2031
          %v2037 = vld [vmem:[#allocation5] sm:$0xff]
          %v2038 = vadd.f32 %v2036, %v2037
          %2039 = vst.msk [vmem:[%s311] sm:$0xff] %vm423, %v2038
        $region68: #{tpu_custom_call.1} parent=39 // pred_fallthru
          _
        %s2040 = sand.u32 %s154, 1
        %s2041 = scalar_lea.sflag [#allocation7], %s2040
        %s2042 = sand.u32 %s154, 1
        %s2043 = smul.addr %s2042, 8
        %s2044 = scalar_lea.vmem [#allocation14], %s2043
        // Predicated region
        $region69: #{tpu_custom_call.1} parent=39 // pred_check
          %p2045 = pneg %p164
        $region70: #{tpu_custom_call.1} parent=39 // pred_check_branch
          %2047 = sbr.rel (%p2045) target = $region72
        $region71: #{tpu_custom_call.1} parent=39 // pred_region
          %s2049 = ssub.s32 128, 128
          %2050 = vsyncadd %s2041, %s2049
          %s2051 = smul.addr %s26, 128
          %s2052 = scalar_lea.hbm %s5, %s2051
          %s2054 = sshll.u32 %s2044, 4
          %s2055 = int_to_ptr.vmem [resolvable:$true] %s2054
          %2057 = dma.vmem_to_hbm [thread:$0]  %s2055, 128, %s2052, %s2041
        $region72: #{tpu_custom_call.1} parent=39 // pred_fallthru
          _
      $region40: #{tpu_custom_call.1} parent=5 // pred_fallthru
        _
      %p2058 = scmp.le.s32.totalorder 2, %s17
      // Predicated region
      $region73: #{tpu_custom_call.1} parent=5 // pred_check
        %p2059 = pneg %p2058
      $region74: #{tpu_custom_call.1} parent=5 // pred_check_branch
        %2061 = sbr.rel (%p2059) target = $region76
      $region75: #{tpu_custom_call.1} parent=5 // pred_region
        %s2062 = ssub.s32 %s17, 2
        // Predicated region
        $region77: #{tpu_custom_call.1} parent=75 // pred_check
          %p2063 = pneg %p170
        $region78: #{tpu_custom_call.1} parent=75 // pred_check_branch
          %2065 = sbr.rel (%p2063) target = $region80
        $region79: #{tpu_custom_call.1} parent=75 // pred_region
          %s2066 = sand.u32 %s155, 1
          %s2067 = scalar_lea.sflag [#allocation7], %s2066
          %s2068 = sand.u32 %s155, 1
          %s2069 = smul.addr %s2068, 8
          %s2070 = scalar_lea.vmem [#allocation14], %s2069
          %2071 = dma.done %s2067, 128
        $region80: #{tpu_custom_call.1} parent=75 // pred_fallthru
          _
      $region76: #{tpu_custom_call.1} parent=5 // pred_fallthru
        _
    $region6: #{tpu_custom_call.1} parent=1 // loop_footer
      %s21 = sadd.s32 1, %s17
    $region7: #{tpu_custom_call.1} parent=1 // loop_footer_branch
      %16 = sbr.rel target = $region3
    $region8: #{tpu_custom_call.1} parent=1 // loop_exit
      _
    %2072 = vsyncpa [#allocation6], 1
    %s2073 = scalar_lea.sflag [#allocation6], 1
    %2074 = vsyncpa %s2073, 1
    %2075 = vsyncpa [#allocation9], 1
    %2076 = vsyncpa [#allocation13], 1
    %2077 = vsyncpa [#allocation7], 1
    %s2078 = scalar_lea.sflag [#allocation7], 1
    %2079 = vsyncpa %s2078, 1

</llo_original>
